<compile_context>
chip_gen: v6e
topology: v6e:2x2x1
jax: 0.10.0
libtpu: 0.0.40
codegen_flags: <defaults>
</compile_context>

<pallas_src>
import math

import jax
import jax.numpy as jnp
from jax.experimental import pallas as pl
from jax.experimental.pallas import tpu as pltpu

# ----- small synthetic BERT config ------------------------------------------
VOCAB = 100
TYPE_VOCAB = 2
MAX_POS = 32
BATCH, SEQ, HID = 2, 8, 32    # batch, sequence, hidden
NH, DH = 4, 8                 # heads, head dim
INTER = 64                    # intermediate (FFN) size
LAYERS = 2
EPS = 1e-12                   # BERT LayerNorm eps

# rows of the packed per-layer vector table
_BO, _LN1G, _LN1B, _BF, _LN2G, _LN2B = range(6)


# ----- in-kernel helpers (all f32 elementwise; bf16 only at MXU inputs) ------
def _bf16(x):
    return x.astype(jnp.bfloat16)


def _layer_norm(x, g, b):
    mu = jnp.mean(x, axis=-1, keepdims=True)
    var = jnp.mean((x - mu) ** 2, axis=-1, keepdims=True)
    return (x - mu) * jax.lax.rsqrt(var + EPS) * g + b


def _gelu(x):
    # TODO(synk): HF BERT default is exact erf-GELU; tanh approximation used here.
    c = math.sqrt(2.0 / math.pi)
    return 0.5 * x * (1.0 + jnp.tanh(c * (x + 0.044715 * x * x * x)))


# ----- fused encoder + pooler kernel (one batch element per grid step) -------
def _encoder_kernel(
    emb_ref, mask_ref, emb_ln_ref,
    wqkv_ref, wo_ref, wi_ref, wf_ref,
    bqkv_ref, bi_ref, vec_ref,
    pool_w_ref, pool_b_ref,
    out_ref,
):
    scale = 1.0 / math.sqrt(DH)
    mask = mask_ref[...]                                   # (1, 1, SEQ) additive bias

    # embedding LayerNorm
    emb_ln = emb_ln_ref[...]                               # (2, HID): [gamma; beta]
    x = _layer_norm(emb_ref[0], emb_ln[0:1, :], emb_ln[1:2, :])    # (SEQ, HID) f32

    # static layer loop; all weights are VMEM-resident across it
    for l in range(LAYERS):
        vecs = vec_ref[l]                                  # (6, HID) f32

        # merged QKV projection: one bf16 MXU matmul, f32 accumulate
        qkv = jnp.dot(_bf16(x), wqkv_ref[l],
                      preferred_element_type=jnp.float32) + bqkv_ref[l]   # (SEQ, 3*HID)

        # one up-front head split (no per-head 8-lane slices in a loop)
        q = qkv[:, :HID].reshape(SEQ, NH, DH).transpose(1, 0, 2)          # (NH, S, DH)
        k = qkv[:, HID:2 * HID].reshape(SEQ, NH, DH).transpose(1, 0, 2)
        v = qkv[:, 2 * HID:].reshape(SEQ, NH, DH).transpose(1, 0, 2)

        # attention, batched over heads; f32 softmax statistics
        s = jnp.einsum('hqd,hkd->hqk', _bf16(q), _bf16(k),
                       preferred_element_type=jnp.float32) * scale + mask  # (NH, S, S)
        s = s - jnp.max(s, axis=-1, keepdims=True)
        p = jnp.exp(s)
        p = p * pl.reciprocal(jnp.sum(p, axis=-1, keepdims=True), approx=True)

        ctx = jnp.einsum('hqk,hkd->hqd', _bf16(p), _bf16(v),
                         preferred_element_type=jnp.float32)               # (NH, S, DH)
        ctx = ctx.transpose(1, 0, 2).reshape(SEQ, HID)                     # (S, HID)

        # single merged output projection over all heads
        attn = jnp.dot(_bf16(ctx), wo_ref[l],
                       preferred_element_type=jnp.float32) + vecs[_BO:_BO + 1, :]
        h1 = _layer_norm(attn + x, vecs[_LN1G:_LN1G + 1, :], vecs[_LN1B:_LN1B + 1, :])

        # FFN (bf16 MXU operands, f32 GELU)
        inter = jnp.dot(_bf16(h1), wi_ref[l],
                        preferred_element_type=jnp.float32) + bi_ref[l]
        inter = _gelu(inter)
        ffn = jnp.dot(_bf16(inter), wf_ref[l],
                      preferred_element_type=jnp.float32) + vecs[_BF:_BF + 1, :]
        x = _layer_norm(ffn + h1, vecs[_LN2G:_LN2G + 1, :], vecs[_LN2B:_LN2B + 1, :])

    # pooler: tanh(W_pool @ hidden[CLS] + b_pool)
    cls = x[0:1, :]                                        # (1, HID), CLS token
    pooled = jnp.dot(_bf16(cls), pool_w_ref[...],
                     preferred_element_type=jnp.float32) + pool_b_ref[...]
    out_ref[...] = jnp.tanh(pooled).reshape(1, 1, HID)


# ----- BlockSpec helper -------------------------------------------------------
def _resident(shape):
    """Whole array, same block every grid step (stays VMEM-resident)."""
    zeros = (0,) * len(shape)
    return pl.BlockSpec(shape, lambda b: zeros)


# ----- parameter init (deterministic, BERT-style, stacked per layer) ---------
def init_params(key):
    def normal(k, shape):
        return 0.02 * jax.random.normal(k, shape, dtype=jnp.float32)

    keys = iter(jax.random.split(key, 4 + 4 * LAYERS))
    wqkv = jnp.stack([normal(next(keys), (HID, 3 * HID)) for _ in range(LAYERS)])
    wo = jnp.stack([normal(next(keys), (HID, HID)) for _ in range(LAYERS)])
    wi = jnp.stack([normal(next(keys), (HID, INTER)) for _ in range(LAYERS)])
    wf = jnp.stack([normal(next(keys), (INTER, HID)) for _ in range(LAYERS)])

    # packed per-layer HID-sized vectors: rows = [bo, ln1_g, ln1_b, bf, ln2_g, ln2_b]
    one_layer = jnp.stack([jnp.zeros(HID), jnp.ones(HID), jnp.zeros(HID),
                           jnp.zeros(HID), jnp.ones(HID), jnp.zeros(HID)])
    vecs = jnp.broadcast_to(one_layer, (LAYERS,) + one_layer.shape).astype(jnp.float32)

    return {
        "word_emb": normal(next(keys), (VOCAB, HID)),
        "pos_emb": normal(next(keys), (MAX_POS, HID)),
        "type_emb": normal(next(keys), (TYPE_VOCAB, HID)),
        "emb_ln": jnp.stack([jnp.ones(HID), jnp.zeros(HID)]).astype(jnp.float32),
        # matmul weights pre-cast to bf16 (MXU operands); biases / LN stay f32
        "wqkv": wqkv.astype(jnp.bfloat16),
        "wo": wo.astype(jnp.bfloat16),
        "wi": wi.astype(jnp.bfloat16),
        "wf": wf.astype(jnp.bfloat16),
        "bqkv": jnp.zeros((LAYERS, 1, 3 * HID), jnp.float32),
        "bi": jnp.zeros((LAYERS, 1, INTER), jnp.float32),
        "vecs": vecs,
        "pool_w": normal(next(keys), (HID, HID)).astype(jnp.bfloat16),
        "pool_b": jnp.zeros((1, HID), jnp.float32),
    }


# ----- forward pass (BertModel + pooler; dropout omitted = eval mode) --------
def text_feature_extractor(params, input_ids, attention_mask):
    bsz, seq = input_ids.shape

    # Embedding gather + adds are JAX glue; LayerNorm happens inside the kernel.
    word = jnp.take(params["word_emb"], input_ids, axis=0)          # (B, S, H)
    pos = params["pos_emb"][:seq][None, :, :]                       # (1, S, H)
    typ = params["type_emb"][0][None, None, :]                      # token_type_ids == 0
    emb = (word + pos + typ).astype(jnp.float32)                    # (B, S, H)

    mask_bias = (1.0 - attention_mask.astype(jnp.float32))[:, None, :] * -10000.0  # (B,1,S)

    in_specs = [
        pl.BlockSpec((1, SEQ, HID), lambda b: (b, 0, 0)),           # emb (per batch)
        pl.BlockSpec((1, 1, SEQ), lambda b: (b, 0, 0)),             # mask bias (per batch)
        _resident((2, HID)),                                        # emb LN gamma/beta
        _resident((LAYERS, HID, 3 * HID)),                          # wqkv (bf16)
        _resident((LAYERS, HID, HID)),                              # wo (bf16)
        _resident((LAYERS, HID, INTER)),                            # wi (bf16)
        _resident((LAYERS, INTER, HID)),                            # wf (bf16)
        _resident((LAYERS, 1, 3 * HID)),                            # bqkv
        _resident((LAYERS, 1, INTER)),                              # bi
        _resident((LAYERS, 6, HID)),                                # packed per-layer vectors
        _resident((HID, HID)),                                      # pool_w (bf16)
        _resident((1, HID)),                                        # pool_b
    ]

    pooled = pl.pallas_call(
        _encoder_kernel,
        out_shape=jax.ShapeDtypeStruct((bsz, 1, HID), jnp.float32),
        grid=(bsz,),
        in_specs=in_specs,
        out_specs=pl.BlockSpec((1, 1, HID), lambda b: (b, 0, 0)),
        compiler_params=pltpu.CompilerParams(
            dimension_semantics=("parallel",)),   # independent batch rows -> both v7x TCs
    )(
        emb, mask_bias, params["emb_ln"],
        params["wqkv"], params["wo"], params["wi"], params["wf"],
        params["bqkv"], params["bi"], params["vecs"],
        params["pool_w"], params["pool_b"],
    )
    return pooled.reshape(bsz, HID)


if __name__ == "__main__":
    key = jax.random.PRNGKey(0)
    k_ids, k_params = jax.random.split(key)

    input_ids = jax.random.randint(k_ids, (BATCH, SEQ), 0, VOCAB, dtype=jnp.int32)
    attention_mask = jnp.array(
        [[1] * SEQ, [1] * (SEQ - 2) + [0, 0]], dtype=jnp.int32)        # (B, S)

    params = init_params(k_params)

    pooled = jax.jit(text_feature_extractor)(params, input_ids, attention_mask)
    pooled = jax.block_until_ready(pooled)

    assert pooled.shape == (BATCH, HID) and pooled.dtype == jnp.float32
    assert bool(jnp.all(jnp.isfinite(pooled)))
    print("KERNEL_OK")
</pallas_src>

<mosaic_0001>
module attributes {stable_mosaic.version = 11 : i64} {
  func.func @_encoder_kernel(%arg0: i32, %arg1: memref<1x8x32xf32, #tpu.memory_space<vmem>>, %arg2: memref<1x1x8xf32, #tpu.memory_space<vmem>>, %arg3: memref<2x32xf32, #tpu.memory_space<vmem>>, %arg4: memref<2x32x96xbf16, #tpu.memory_space<vmem>>, %arg5: memref<2x32x32xbf16, #tpu.memory_space<vmem>>, %arg6: memref<2x32x64xbf16, #tpu.memory_space<vmem>>, %arg7: memref<2x64x32xbf16, #tpu.memory_space<vmem>>, %arg8: memref<2x1x96xf32, #tpu.memory_space<vmem>>, %arg9: memref<2x1x64xf32, #tpu.memory_space<vmem>>, %arg10: memref<2x6x32xf32, #tpu.memory_space<vmem>>, %arg11: memref<32x32xbf16, #tpu.memory_space<vmem>>, %arg12: memref<1x32xf32, #tpu.memory_space<vmem>>, %arg13: memref<1x1x32xf32, #tpu.memory_space<vmem>>) attributes {dimension_semantics = [#tpu.dimension_semantics<parallel>], iteration_bounds = array<i64: 2>, scalar_prefetch = 0 : i64, scratch_operands = 0 : i64, tpu.core_type = #tpu.core_type<tc>, window_params = [{transform_indices = @transform_0, window_bounds = array<i64: 1, 8, 32>}, {transform_indices = @transform_1, window_bounds = array<i64: 1, 1, 8>}, {pipeline_mode = #tpu.pipeline_mode<synchronous>, transform_indices = @transform_2, window_bounds = array<i64: 2, 32>}, {pipeline_mode = #tpu.pipeline_mode<synchronous>, transform_indices = @transform_3, window_bounds = array<i64: 2, 32, 96>}, {pipeline_mode = #tpu.pipeline_mode<synchronous>, transform_indices = @transform_4, window_bounds = array<i64: 2, 32, 32>}, {pipeline_mode = #tpu.pipeline_mode<synchronous>, transform_indices = @transform_5, window_bounds = array<i64: 2, 32, 64>}, {pipeline_mode = #tpu.pipeline_mode<synchronous>, transform_indices = @transform_6, window_bounds = array<i64: 2, 64, 32>}, {pipeline_mode = #tpu.pipeline_mode<synchronous>, transform_indices = @transform_7, window_bounds = array<i64: 2, 1, 96>}, {pipeline_mode = #tpu.pipeline_mode<synchronous>, transform_indices = @transform_8, window_bounds = array<i64: 2, 1, 64>}, {pipeline_mode = #tpu.pipeline_mode<synchronous>, transform_indices = @transform_9, window_bounds = array<i64: 2, 6, 32>}, {pipeline_mode = #tpu.pipeline_mode<synchronous>, transform_indices = @transform_10, window_bounds = array<i64: 32, 32>}, {pipeline_mode = #tpu.pipeline_mode<synchronous>, transform_indices = @transform_11, window_bounds = array<i64: 1, 32>}, {transform_indices = @transform_12, window_bounds = array<i64: 1, 1, 32>}]} {
    %c0 = arith.constant 0 : index
    %c0_0 = arith.constant 0 : index
    %c0_1 = arith.constant 0 : index
    %0 = vector.load %arg2[%c0, %c0_0, %c0_1] : memref<1x1x8xf32, #tpu.memory_space<vmem>>, vector<1x1x8xf32>
    %c0_2 = arith.constant 0 : index
    %c0_3 = arith.constant 0 : index
    %1 = vector.load %arg3[%c0_2, %c0_3] : memref<2x32xf32, #tpu.memory_space<vmem>>, vector<2x32xf32>
    %c0_4 = arith.constant 0 : index
    %c0_5 = arith.constant 0 : index
    %c0_6 = arith.constant 0 : index
    %2 = vector.load %arg1[%c0_4, %c0_5, %c0_6] : memref<1x8x32xf32, #tpu.memory_space<vmem>>, vector<1x8x32xf32>
    %3 = vector.shape_cast %2 : vector<1x8x32xf32> to vector<8x32xf32>
    %4 = vector.extract_strided_slice %1 {offsets = [0, 0], sizes = [1, 32], strides = [1, 1]} : vector<2x32xf32> to vector<1x32xf32>
    %5 = vector.extract_strided_slice %1 {offsets = [1, 0], sizes = [1, 32], strides = [1, 1]} : vector<2x32xf32> to vector<1x32xf32>
    %cst = arith.constant dense<0.000000e+00> : vector<8xf32>
    %6 = vector.multi_reduction <add>, %3, %cst [1] : vector<8x32xf32> to vector<8xf32>
    %7 = vector.shape_cast %6 : vector<8xf32> to vector<8x1xf32>
    %cst_7 = arith.constant 3.200000e+01 : f32
    %8 = vector.broadcast %cst_7 : f32 to vector<8x1xf32>
    %9 = arith.divf %7, %8 : vector<8x1xf32>
    %10 = vector.broadcast %9 : vector<8x1xf32> to vector<8x32xf32>
    %11 = arith.subf %3, %10 : vector<8x32xf32>
    %12 = arith.mulf %11, %11 : vector<8x32xf32>
    %cst_8 = arith.constant dense<0.000000e+00> : vector<8xf32>
    %13 = vector.multi_reduction <add>, %12, %cst_8 [1] : vector<8x32xf32> to vector<8xf32>
    %14 = vector.shape_cast %13 : vector<8xf32> to vector<8x1xf32>
    %cst_9 = arith.constant 3.200000e+01 : f32
    %15 = vector.broadcast %cst_9 : f32 to vector<8x1xf32>
    %16 = arith.divf %14, %15 : vector<8x1xf32>
    %17 = vector.broadcast %9 : vector<8x1xf32> to vector<8x32xf32>
    %18 = arith.subf %3, %17 : vector<8x32xf32>
    %cst_10 = arith.constant 9.99999996E-13 : f32
    %19 = vector.broadcast %cst_10 : f32 to vector<8x1xf32>
    %20 = arith.addf %16, %19 : vector<8x1xf32>
    %21 = math.rsqrt %20 : vector<8x1xf32>
    %22 = vector.broadcast %21 : vector<8x1xf32> to vector<8x32xf32>
    %23 = arith.mulf %18, %22 : vector<8x32xf32>
    %24 = vector.broadcast %4 : vector<1x32xf32> to vector<8x32xf32>
    %25 = arith.mulf %23, %24 : vector<8x32xf32>
    %26 = vector.broadcast %5 : vector<1x32xf32> to vector<8x32xf32>
    %27 = arith.addf %25, %26 : vector<8x32xf32>
    %c0_11 = arith.constant 0 : index
    %c0_12 = arith.constant 0 : index
    %c0_13 = arith.constant 0 : index
    %28 = vector.load %arg10[%c0_11, %c0_12, %c0_13] : memref<2x6x32xf32, #tpu.memory_space<vmem>>, vector<1x6x32xf32>
    %29 = vector.shape_cast %28 : vector<1x6x32xf32> to vector<6x32xf32>
    %30 = arith.truncf %27 : vector<8x32xf32> to vector<8x32xbf16>
    %c0_14 = arith.constant 0 : index
    %c0_15 = arith.constant 0 : index
    %c0_16 = arith.constant 0 : index
    %31 = vector.load %arg4[%c0_14, %c0_15, %c0_16] : memref<2x32x96xbf16, #tpu.memory_space<vmem>>, vector<1x32x96xbf16>
    %32 = vector.shape_cast %31 : vector<1x32x96xbf16> to vector<32x96xbf16>
    %cst_17 = arith.constant dense<0.000000e+00> : vector<8x96xf32>
    %33 = tpu.matmul %30, %32, %cst_17 {dimension_numbers = #tpu.dot_dimension_numbers<[1], [0], [0], [1], [0, 0, 1, 1], [], []>} : vector<8x32xbf16>, vector<32x96xbf16>, vector<8x96xf32> -> vector<8x96xf32>
    %c0_18 = arith.constant 0 : index
    %c0_19 = arith.constant 0 : index
    %c0_20 = arith.constant 0 : index
    %34 = vector.load %arg8[%c0_18, %c0_19, %c0_20] : memref<2x1x96xf32, #tpu.memory_space<vmem>>, vector<1x1x96xf32>
    %35 = vector.shape_cast %34 : vector<1x1x96xf32> to vector<1x96xf32>
    %36 = vector.broadcast %35 : vector<1x96xf32> to vector<8x96xf32>
    %37 = arith.addf %33, %36 : vector<8x96xf32>
    %38 = vector.extract_strided_slice %37 {offsets = [0, 0], sizes = [8, 32], strides = [1, 1]} : vector<8x96xf32> to vector<8x32xf32>
    %39 = vector.shape_cast %38 : vector<8x32xf32> to vector<8x4x8xf32>
    %40 = tpu.transpose %39, [1, 0, 2] : vector<8x4x8xf32> -> vector<4x8x8xf32>
    %41 = vector.extract_strided_slice %37 {offsets = [0, 32], sizes = [8, 32], strides = [1, 1]} : vector<8x96xf32> to vector<8x32xf32>
    %42 = vector.shape_cast %41 : vector<8x32xf32> to vector<8x4x8xf32>
    %43 = tpu.transpose %42, [1, 0, 2] : vector<8x4x8xf32> -> vector<4x8x8xf32>
    %44 = vector.extract_strided_slice %37 {offsets = [0, 64], sizes = [8, 32], strides = [1, 1]} : vector<8x96xf32> to vector<8x32xf32>
    %45 = vector.shape_cast %44 : vector<8x32xf32> to vector<8x4x8xf32>
    %46 = tpu.transpose %45, [1, 0, 2] : vector<8x4x8xf32> -> vector<4x8x8xf32>
    %47 = arith.truncf %40 : vector<4x8x8xf32> to vector<4x8x8xbf16>
    %48 = arith.truncf %43 : vector<4x8x8xf32> to vector<4x8x8xbf16>
    "tpu.trace_start"() <{level = 10 : i32, message = "hqd,hkd->hqk"}> : () -> ()
    %cst_21 = arith.constant dense<0.000000e+00> : vector<4x8x8xf32>
    %49 = tpu.matmul %47, %48, %cst_21 {dimension_numbers = #tpu.dot_dimension_numbers<[2], [2], [1], [1], [0, 0, 0, 1, 1, 1], [0], [0]>} : vector<4x8x8xbf16>, vector<4x8x8xbf16>, vector<4x8x8xf32> -> vector<4x8x8xf32>
    "tpu.trace_stop"() : () -> ()
    %cst_22 = arith.constant 0.353553385 : f32
    %50 = vector.broadcast %cst_22 : f32 to vector<4x8x8xf32>
    %51 = arith.mulf %49, %50 : vector<4x8x8xf32>
    %52 = vector.broadcast %0 : vector<1x1x8xf32> to vector<4x8x8xf32>
    %53 = arith.addf %51, %52 : vector<4x8x8xf32>
    %cst_23 = arith.constant dense<0xFF800000> : vector<4x8xf32>
    %54 = vector.multi_reduction <maximumf>, %53, %cst_23 [2] : vector<4x8x8xf32> to vector<4x8xf32>
    %55 = vector.shape_cast %54 : vector<4x8xf32> to vector<4x8x1xf32>
    %56 = vector.broadcast %55 : vector<4x8x1xf32> to vector<4x8x8xf32>
    %57 = arith.subf %53, %56 : vector<4x8x8xf32>
    %58 = math.exp %57 : vector<4x8x8xf32>
    %cst_24 = arith.constant dense<0.000000e+00> : vector<4x8xf32>
    %59 = vector.multi_reduction <add>, %58, %cst_24 [2] : vector<4x8x8xf32> to vector<4x8xf32>
    %60 = vector.shape_cast %59 : vector<4x8xf32> to vector<4x8x1xf32>
    %61 = tpu.reciprocal %60 {approx = true} : vector<4x8x1xf32> -> vector<4x8x1xf32>
    %62 = vector.broadcast %61 : vector<4x8x1xf32> to vector<4x8x8xf32>
    %63 = arith.mulf %58, %62 : vector<4x8x8xf32>
    %64 = arith.truncf %63 : vector<4x8x8xf32> to vector<4x8x8xbf16>
    %65 = arith.truncf %46 : vector<4x8x8xf32> to vector<4x8x8xbf16>
    "tpu.trace_start"() <{level = 10 : i32, message = "hqk,hkd->hqd"}> : () -> ()
    %cst_25 = arith.constant dense<0.000000e+00> : vector<4x8x8xf32>
    %66 = tpu.matmul %64, %65, %cst_25 {dimension_numbers = #tpu.dot_dimension_numbers<[2], [1], [1], [2], [0, 0, 0, 1, 1, 2], [0], [0]>} : vector<4x8x8xbf16>, vector<4x8x8xbf16>, vector<4x8x8xf32> -> vector<4x8x8xf32>
    "tpu.trace_stop"() : () -> ()
    %67 = tpu.transpose %66, [1, 0, 2] : vector<4x8x8xf32> -> vector<8x4x8xf32>
    %68 = vector.shape_cast %67 : vector<8x4x8xf32> to vector<8x32xf32>
    %69 = arith.truncf %68 : vector<8x32xf32> to vector<8x32xbf16>
    %c0_26 = arith.constant 0 : index
    %c0_27 = arith.constant 0 : index
    %c0_28 = arith.constant 0 : index
    %70 = vector.load %arg5[%c0_26, %c0_27, %c0_28] : memref<2x32x32xbf16, #tpu.memory_space<vmem>>, vector<1x32x32xbf16>
    %71 = vector.shape_cast %70 : vector<1x32x32xbf16> to vector<32x32xbf16>
    %cst_29 = arith.constant dense<0.000000e+00> : vector<8x32xf32>
    %72 = tpu.matmul %69, %71, %cst_29 {dimension_numbers = #tpu.dot_dimension_numbers<[1], [0], [0], [1], [0, 0, 1, 1], [], []>} : vector<8x32xbf16>, vector<32x32xbf16>, vector<8x32xf32> -> vector<8x32xf32>
    %73 = vector.extract_strided_slice %29 {offsets = [0, 0], sizes = [1, 32], strides = [1, 1]} : vector<6x32xf32> to vector<1x32xf32>
    %74 = vector.broadcast %73 : vector<1x32xf32> to vector<8x32xf32>
    %75 = arith.addf %72, %74 : vector<8x32xf32>
    %76 = arith.addf %75, %27 : vector<8x32xf32>
    %77 = vector.extract_strided_slice %29 {offsets = [1, 0], sizes = [1, 32], strides = [1, 1]} : vector<6x32xf32> to vector<1x32xf32>
    %78 = vector.extract_strided_slice %29 {offsets = [2, 0], sizes = [1, 32], strides = [1, 1]} : vector<6x32xf32> to vector<1x32xf32>
    %cst_30 = arith.constant dense<0.000000e+00> : vector<8xf32>
    %79 = vector.multi_reduction <add>, %76, %cst_30 [1] : vector<8x32xf32> to vector<8xf32>
    %80 = vector.shape_cast %79 : vector<8xf32> to vector<8x1xf32>
    %cst_31 = arith.constant 3.200000e+01 : f32
    %81 = vector.broadcast %cst_31 : f32 to vector<8x1xf32>
    %82 = arith.divf %80, %81 : vector<8x1xf32>
    %83 = vector.broadcast %82 : vector<8x1xf32> to vector<8x32xf32>
    %84 = arith.subf %76, %83 : vector<8x32xf32>
    %85 = arith.mulf %84, %84 : vector<8x32xf32>
    %cst_32 = arith.constant dense<0.000000e+00> : vector<8xf32>
    %86 = vector.multi_reduction <add>, %85, %cst_32 [1] : vector<8x32xf32> to vector<8xf32>
    %87 = vector.shape_cast %86 : vector<8xf32> to vector<8x1xf32>
    %cst_33 = arith.constant 3.200000e+01 : f32
    %88 = vector.broadcast %cst_33 : f32 to vector<8x1xf32>
    %89 = arith.divf %87, %88 : vector<8x1xf32>
    %90 = vector.broadcast %82 : vector<8x1xf32> to vector<8x32xf32>
    %91 = arith.subf %76, %90 : vector<8x32xf32>
    %cst_34 = arith.constant 9.99999996E-13 : f32
    %92 = vector.broadcast %cst_34 : f32 to vector<8x1xf32>
    %93 = arith.addf %89, %92 : vector<8x1xf32>
    %94 = math.rsqrt %93 : vector<8x1xf32>
    %95 = vector.broadcast %94 : vector<8x1xf32> to vector<8x32xf32>
    %96 = arith.mulf %91, %95 : vector<8x32xf32>
    %97 = vector.broadcast %77 : vector<1x32xf32> to vector<8x32xf32>
    %98 = arith.mulf %96, %97 : vector<8x32xf32>
    %99 = vector.broadcast %78 : vector<1x32xf32> to vector<8x32xf32>
    %100 = arith.addf %98, %99 : vector<8x32xf32>
    %101 = arith.truncf %100 : vector<8x32xf32> to vector<8x32xbf16>
    %c0_35 = arith.constant 0 : index
    %c0_36 = arith.constant 0 : index
    %c0_37 = arith.constant 0 : index
    %102 = vector.load %arg6[%c0_35, %c0_36, %c0_37] : memref<2x32x64xbf16, #tpu.memory_space<vmem>>, vector<1x32x64xbf16>
    %103 = vector.shape_cast %102 : vector<1x32x64xbf16> to vector<32x64xbf16>
    %cst_38 = arith.constant dense<0.000000e+00> : vector<8x64xf32>
    %104 = tpu.matmul %101, %103, %cst_38 {dimension_numbers = #tpu.dot_dimension_numbers<[1], [0], [0], [1], [0, 0, 1, 1], [], []>} : vector<8x32xbf16>, vector<32x64xbf16>, vector<8x64xf32> -> vector<8x64xf32>
    %c0_39 = arith.constant 0 : index
    %c0_40 = arith.constant 0 : index
    %c0_41 = arith.constant 0 : index
    %105 = vector.load %arg9[%c0_39, %c0_40, %c0_41] : memref<2x1x64xf32, #tpu.memory_space<vmem>>, vector<1x1x64xf32>
    %106 = vector.shape_cast %105 : vector<1x1x64xf32> to vector<1x64xf32>
    %107 = vector.broadcast %106 : vector<1x64xf32> to vector<8x64xf32>
    %108 = arith.addf %104, %107 : vector<8x64xf32>
    %cst_42 = arith.constant 5.000000e-01 : f32
    %109 = vector.broadcast %cst_42 : f32 to vector<8x64xf32>
    %110 = arith.mulf %109, %108 : vector<8x64xf32>
    %cst_43 = arith.constant 4.471500e-02 : f32
    %111 = vector.broadcast %cst_43 : f32 to vector<8x64xf32>
    %112 = arith.mulf %111, %108 : vector<8x64xf32>
    %113 = arith.mulf %112, %108 : vector<8x64xf32>
    %114 = arith.mulf %113, %108 : vector<8x64xf32>
    %115 = arith.addf %108, %114 : vector<8x64xf32>
    %cst_44 = arith.constant 0.797884583 : f32
    %116 = vector.broadcast %cst_44 : f32 to vector<8x64xf32>
    %117 = arith.mulf %116, %115 : vector<8x64xf32>
    %118 = math.tanh %117 : vector<8x64xf32>
    %cst_45 = arith.constant 1.000000e+00 : f32
    %119 = vector.broadcast %cst_45 : f32 to vector<8x64xf32>
    %120 = arith.addf %119, %118 : vector<8x64xf32>
    %121 = arith.mulf %110, %120 : vector<8x64xf32>
    %122 = arith.truncf %121 : vector<8x64xf32> to vector<8x64xbf16>
    %c0_46 = arith.constant 0 : index
    %c0_47 = arith.constant 0 : index
    %c0_48 = arith.constant 0 : index
    %123 = vector.load %arg7[%c0_46, %c0_47, %c0_48] : memref<2x64x32xbf16, #tpu.memory_space<vmem>>, vector<1x64x32xbf16>
    %124 = vector.shape_cast %123 : vector<1x64x32xbf16> to vector<64x32xbf16>
    %cst_49 = arith.constant dense<0.000000e+00> : vector<8x32xf32>
    %125 = tpu.matmul %122, %124, %cst_49 {dimension_numbers = #tpu.dot_dimension_numbers<[1], [0], [0], [1], [0, 0, 1, 1], [], []>} : vector<8x64xbf16>, vector<64x32xbf16>, vector<8x32xf32> -> vector<8x32xf32>
    %126 = vector.extract_strided_slice %29 {offsets = [3, 0], sizes = [1, 32], strides = [1, 1]} : vector<6x32xf32> to vector<1x32xf32>
    %127 = vector.broadcast %126 : vector<1x32xf32> to vector<8x32xf32>
    %128 = arith.addf %125, %127 : vector<8x32xf32>
    %129 = arith.addf %128, %100 : vector<8x32xf32>
    %130 = vector.extract_strided_slice %29 {offsets = [4, 0], sizes = [1, 32], strides = [1, 1]} : vector<6x32xf32> to vector<1x32xf32>
    %131 = vector.extract_strided_slice %29 {offsets = [5, 0], sizes = [1, 32], strides = [1, 1]} : vector<6x32xf32> to vector<1x32xf32>
    %cst_50 = arith.constant dense<0.000000e+00> : vector<8xf32>
    %132 = vector.multi_reduction <add>, %129, %cst_50 [1] : vector<8x32xf32> to vector<8xf32>
    %133 = vector.shape_cast %132 : vector<8xf32> to vector<8x1xf32>
    %cst_51 = arith.constant 3.200000e+01 : f32
    %134 = vector.broadcast %cst_51 : f32 to vector<8x1xf32>
    %135 = arith.divf %133, %134 : vector<8x1xf32>
    %136 = vector.broadcast %135 : vector<8x1xf32> to vector<8x32xf32>
    %137 = arith.subf %129, %136 : vector<8x32xf32>
    %138 = arith.mulf %137, %137 : vector<8x32xf32>
    %cst_52 = arith.constant dense<0.000000e+00> : vector<8xf32>
    %139 = vector.multi_reduction <add>, %138, %cst_52 [1] : vector<8x32xf32> to vector<8xf32>
    %140 = vector.shape_cast %139 : vector<8xf32> to vector<8x1xf32>
    %cst_53 = arith.constant 3.200000e+01 : f32
    %141 = vector.broadcast %cst_53 : f32 to vector<8x1xf32>
    %142 = arith.divf %140, %141 : vector<8x1xf32>
    %143 = vector.broadcast %135 : vector<8x1xf32> to vector<8x32xf32>
    %144 = arith.subf %129, %143 : vector<8x32xf32>
    %cst_54 = arith.constant 9.99999996E-13 : f32
    %145 = vector.broadcast %cst_54 : f32 to vector<8x1xf32>
    %146 = arith.addf %142, %145 : vector<8x1xf32>
    %147 = math.rsqrt %146 : vector<8x1xf32>
    %148 = vector.broadcast %147 : vector<8x1xf32> to vector<8x32xf32>
    %149 = arith.mulf %144, %148 : vector<8x32xf32>
    %150 = vector.broadcast %130 : vector<1x32xf32> to vector<8x32xf32>
    %151 = arith.mulf %149, %150 : vector<8x32xf32>
    %152 = vector.broadcast %131 : vector<1x32xf32> to vector<8x32xf32>
    %153 = arith.addf %151, %152 : vector<8x32xf32>
    %c1 = arith.constant 1 : index
    %c0_55 = arith.constant 0 : index
    %c0_56 = arith.constant 0 : index
    %154 = vector.load %arg10[%c1, %c0_55, %c0_56] : memref<2x6x32xf32, #tpu.memory_space<vmem>>, vector<1x6x32xf32>
    %155 = vector.shape_cast %154 : vector<1x6x32xf32> to vector<6x32xf32>
    %156 = arith.truncf %153 : vector<8x32xf32> to vector<8x32xbf16>
    %c1_57 = arith.constant 1 : index
    %c0_58 = arith.constant 0 : index
    %c0_59 = arith.constant 0 : index
    %157 = vector.load %arg4[%c1_57, %c0_58, %c0_59] : memref<2x32x96xbf16, #tpu.memory_space<vmem>>, vector<1x32x96xbf16>
    %158 = vector.shape_cast %157 : vector<1x32x96xbf16> to vector<32x96xbf16>
    %cst_60 = arith.constant dense<0.000000e+00> : vector<8x96xf32>
    %159 = tpu.matmul %156, %158, %cst_60 {dimension_numbers = #tpu.dot_dimension_numbers<[1], [0], [0], [1], [0, 0, 1, 1], [], []>} : vector<8x32xbf16>, vector<32x96xbf16>, vector<8x96xf32> -> vector<8x96xf32>
    %c1_61 = arith.constant 1 : index
    %c0_62 = arith.constant 0 : index
    %c0_63 = arith.constant 0 : index
    %160 = vector.load %arg8[%c1_61, %c0_62, %c0_63] : memref<2x1x96xf32, #tpu.memory_space<vmem>>, vector<1x1x96xf32>
    %161 = vector.shape_cast %160 : vector<1x1x96xf32> to vector<1x96xf32>
    %162 = vector.broadcast %161 : vector<1x96xf32> to vector<8x96xf32>
    %163 = arith.addf %159, %162 : vector<8x96xf32>
    %164 = vector.extract_strided_slice %163 {offsets = [0, 0], sizes = [8, 32], strides = [1, 1]} : vector<8x96xf32> to vector<8x32xf32>
    %165 = vector.shape_cast %164 : vector<8x32xf32> to vector<8x4x8xf32>
    %166 = tpu.transpose %165, [1, 0, 2] : vector<8x4x8xf32> -> vector<4x8x8xf32>
    %167 = vector.extract_strided_slice %163 {offsets = [0, 32], sizes = [8, 32], strides = [1, 1]} : vector<8x96xf32> to vector<8x32xf32>
    %168 = vector.shape_cast %167 : vector<8x32xf32> to vector<8x4x8xf32>
    %169 = tpu.transpose %168, [1, 0, 2] : vector<8x4x8xf32> -> vector<4x8x8xf32>
    %170 = vector.extract_strided_slice %163 {offsets = [0, 64], sizes = [8, 32], strides = [1, 1]} : vector<8x96xf32> to vector<8x32xf32>
    %171 = vector.shape_cast %170 : vector<8x32xf32> to vector<8x4x8xf32>
    %172 = tpu.transpose %171, [1, 0, 2] : vector<8x4x8xf32> -> vector<4x8x8xf32>
    %173 = arith.truncf %166 : vector<4x8x8xf32> to vector<4x8x8xbf16>
    %174 = arith.truncf %169 : vector<4x8x8xf32> to vector<4x8x8xbf16>
    "tpu.trace_start"() <{level = 10 : i32, message = "hqd,hkd->hqk"}> : () -> ()
    %cst_64 = arith.constant dense<0.000000e+00> : vector<4x8x8xf32>
    %175 = tpu.matmul %173, %174, %cst_64 {dimension_numbers = #tpu.dot_dimension_numbers<[2], [2], [1], [1], [0, 0, 0, 1, 1, 1], [0], [0]>} : vector<4x8x8xbf16>, vector<4x8x8xbf16>, vector<4x8x8xf32> -> vector<4x8x8xf32>
    "tpu.trace_stop"() : () -> ()
    %cst_65 = arith.constant 0.353553385 : f32
    %176 = vector.broadcast %cst_65 : f32 to vector<4x8x8xf32>
    %177 = arith.mulf %175, %176 : vector<4x8x8xf32>
    %178 = vector.broadcast %0 : vector<1x1x8xf32> to vector<4x8x8xf32>
    %179 = arith.addf %177, %178 : vector<4x8x8xf32>
    %cst_66 = arith.constant dense<0xFF800000> : vector<4x8xf32>
    %180 = vector.multi_reduction <maximumf>, %179, %cst_66 [2] : vector<4x8x8xf32> to vector<4x8xf32>
    %181 = vector.shape_cast %180 : vector<4x8xf32> to vector<4x8x1xf32>
    %182 = vector.broadcast %181 : vector<4x8x1xf32> to vector<4x8x8xf32>
    %183 = arith.subf %179, %182 : vector<4x8x8xf32>
    %184 = math.exp %183 : vector<4x8x8xf32>
    %cst_67 = arith.constant dense<0.000000e+00> : vector<4x8xf32>
    %185 = vector.multi_reduction <add>, %184, %cst_67 [2] : vector<4x8x8xf32> to vector<4x8xf32>
    %186 = vector.shape_cast %185 : vector<4x8xf32> to vector<4x8x1xf32>
    %187 = tpu.reciprocal %186 {approx = true} : vector<4x8x1xf32> -> vector<4x8x1xf32>
    %188 = vector.broadcast %187 : vector<4x8x1xf32> to vector<4x8x8xf32>
    %189 = arith.mulf %184, %188 : vector<4x8x8xf32>
    %190 = arith.truncf %189 : vector<4x8x8xf32> to vector<4x8x8xbf16>
    %191 = arith.truncf %172 : vector<4x8x8xf32> to vector<4x8x8xbf16>
    "tpu.trace_start"() <{level = 10 : i32, message = "hqk,hkd->hqd"}> : () -> ()
    %cst_68 = arith.constant dense<0.000000e+00> : vector<4x8x8xf32>
    %192 = tpu.matmul %190, %191, %cst_68 {dimension_numbers = #tpu.dot_dimension_numbers<[2], [1], [1], [2], [0, 0, 0, 1, 1, 2], [0], [0]>} : vector<4x8x8xbf16>, vector<4x8x8xbf16>, vector<4x8x8xf32> -> vector<4x8x8xf32>
    "tpu.trace_stop"() : () -> ()
    %193 = tpu.transpose %192, [1, 0, 2] : vector<4x8x8xf32> -> vector<8x4x8xf32>
    %194 = vector.shape_cast %193 : vector<8x4x8xf32> to vector<8x32xf32>
    %195 = arith.truncf %194 : vector<8x32xf32> to vector<8x32xbf16>
    %c1_69 = arith.constant 1 : index
    %c0_70 = arith.constant 0 : index
    %c0_71 = arith.constant 0 : index
    %196 = vector.load %arg5[%c1_69, %c0_70, %c0_71] : memref<2x32x32xbf16, #tpu.memory_space<vmem>>, vector<1x32x32xbf16>
    %197 = vector.shape_cast %196 : vector<1x32x32xbf16> to vector<32x32xbf16>
    %cst_72 = arith.constant dense<0.000000e+00> : vector<8x32xf32>
    %198 = tpu.matmul %195, %197, %cst_72 {dimension_numbers = #tpu.dot_dimension_numbers<[1], [0], [0], [1], [0, 0, 1, 1], [], []>} : vector<8x32xbf16>, vector<32x32xbf16>, vector<8x32xf32> -> vector<8x32xf32>
    %199 = vector.extract_strided_slice %155 {offsets = [0, 0], sizes = [1, 32], strides = [1, 1]} : vector<6x32xf32> to vector<1x32xf32>
    %200 = vector.broadcast %199 : vector<1x32xf32> to vector<8x32xf32>
    %201 = arith.addf %198, %200 : vector<8x32xf32>
    %202 = arith.addf %201, %153 : vector<8x32xf32>
    %203 = vector.extract_strided_slice %155 {offsets = [1, 0], sizes = [1, 32], strides = [1, 1]} : vector<6x32xf32> to vector<1x32xf32>
    %204 = vector.extract_strided_slice %155 {offsets = [2, 0], sizes = [1, 32], strides = [1, 1]} : vector<6x32xf32> to vector<1x32xf32>
    %cst_73 = arith.constant dense<0.000000e+00> : vector<8xf32>
    %205 = vector.multi_reduction <add>, %202, %cst_73 [1] : vector<8x32xf32> to vector<8xf32>
    %206 = vector.shape_cast %205 : vector<8xf32> to vector<8x1xf32>
    %cst_74 = arith.constant 3.200000e+01 : f32
    %207 = vector.broadcast %cst_74 : f32 to vector<8x1xf32>
    %208 = arith.divf %206, %207 : vector<8x1xf32>
    %209 = vector.broadcast %208 : vector<8x1xf32> to vector<8x32xf32>
    %210 = arith.subf %202, %209 : vector<8x32xf32>
    %211 = arith.mulf %210, %210 : vector<8x32xf32>
    %cst_75 = arith.constant dense<0.000000e+00> : vector<8xf32>
    %212 = vector.multi_reduction <add>, %211, %cst_75 [1] : vector<8x32xf32> to vector<8xf32>
    %213 = vector.shape_cast %212 : vector<8xf32> to vector<8x1xf32>
    %cst_76 = arith.constant 3.200000e+01 : f32
    %214 = vector.broadcast %cst_76 : f32 to vector<8x1xf32>
    %215 = arith.divf %213, %214 : vector<8x1xf32>
    %216 = vector.broadcast %208 : vector<8x1xf32> to vector<8x32xf32>
    %217 = arith.subf %202, %216 : vector<8x32xf32>
    %cst_77 = arith.constant 9.99999996E-13 : f32
    %218 = vector.broadcast %cst_77 : f32 to vector<8x1xf32>
    %219 = arith.addf %215, %218 : vector<8x1xf32>
    %220 = math.rsqrt %219 : vector<8x1xf32>
    %221 = vector.broadcast %220 : vector<8x1xf32> to vector<8x32xf32>
    %222 = arith.mulf %217, %221 : vector<8x32xf32>
    %223 = vector.broadcast %203 : vector<1x32xf32> to vector<8x32xf32>
    %224 = arith.mulf %222, %223 : vector<8x32xf32>
    %225 = vector.broadcast %204 : vector<1x32xf32> to vector<8x32xf32>
    %226 = arith.addf %224, %225 : vector<8x32xf32>
    %227 = arith.truncf %226 : vector<8x32xf32> to vector<8x32xbf16>
    %c1_78 = arith.constant 1 : index
    %c0_79 = arith.constant 0 : index
    %c0_80 = arith.constant 0 : index
    %228 = vector.load %arg6[%c1_78, %c0_79, %c0_80] : memref<2x32x64xbf16, #tpu.memory_space<vmem>>, vector<1x32x64xbf16>
    %229 = vector.shape_cast %228 : vector<1x32x64xbf16> to vector<32x64xbf16>
    %cst_81 = arith.constant dense<0.000000e+00> : vector<8x64xf32>
    %230 = tpu.matmul %227, %229, %cst_81 {dimension_numbers = #tpu.dot_dimension_numbers<[1], [0], [0], [1], [0, 0, 1, 1], [], []>} : vector<8x32xbf16>, vector<32x64xbf16>, vector<8x64xf32> -> vector<8x64xf32>
    %c1_82 = arith.constant 1 : index
    %c0_83 = arith.constant 0 : index
    %c0_84 = arith.constant 0 : index
    %231 = vector.load %arg9[%c1_82, %c0_83, %c0_84] : memref<2x1x64xf32, #tpu.memory_space<vmem>>, vector<1x1x64xf32>
    %232 = vector.shape_cast %231 : vector<1x1x64xf32> to vector<1x64xf32>
    %233 = vector.broadcast %232 : vector<1x64xf32> to vector<8x64xf32>
    %234 = arith.addf %230, %233 : vector<8x64xf32>
    %cst_85 = arith.constant 5.000000e-01 : f32
    %235 = vector.broadcast %cst_85 : f32 to vector<8x64xf32>
    %236 = arith.mulf %235, %234 : vector<8x64xf32>
    %cst_86 = arith.constant 4.471500e-02 : f32
    %237 = vector.broadcast %cst_86 : f32 to vector<8x64xf32>
    %238 = arith.mulf %237, %234 : vector<8x64xf32>
    %239 = arith.mulf %238, %234 : vector<8x64xf32>
    %240 = arith.mulf %239, %234 : vector<8x64xf32>
    %241 = arith.addf %234, %240 : vector<8x64xf32>
    %cst_87 = arith.constant 0.797884583 : f32
    %242 = vector.broadcast %cst_87 : f32 to vector<8x64xf32>
    %243 = arith.mulf %242, %241 : vector<8x64xf32>
    %244 = math.tanh %243 : vector<8x64xf32>
    %cst_88 = arith.constant 1.000000e+00 : f32
    %245 = vector.broadcast %cst_88 : f32 to vector<8x64xf32>
    %246 = arith.addf %245, %244 : vector<8x64xf32>
    %247 = arith.mulf %236, %246 : vector<8x64xf32>
    %248 = arith.truncf %247 : vector<8x64xf32> to vector<8x64xbf16>
    %c1_89 = arith.constant 1 : index
    %c0_90 = arith.constant 0 : index
    %c0_91 = arith.constant 0 : index
    %249 = vector.load %arg7[%c1_89, %c0_90, %c0_91] : memref<2x64x32xbf16, #tpu.memory_space<vmem>>, vector<1x64x32xbf16>
    %250 = vector.shape_cast %249 : vector<1x64x32xbf16> to vector<64x32xbf16>
    %cst_92 = arith.constant dense<0.000000e+00> : vector<8x32xf32>
    %251 = tpu.matmul %248, %250, %cst_92 {dimension_numbers = #tpu.dot_dimension_numbers<[1], [0], [0], [1], [0, 0, 1, 1], [], []>} : vector<8x64xbf16>, vector<64x32xbf16>, vector<8x32xf32> -> vector<8x32xf32>
    %252 = vector.extract_strided_slice %155 {offsets = [3, 0], sizes = [1, 32], strides = [1, 1]} : vector<6x32xf32> to vector<1x32xf32>
    %253 = vector.broadcast %252 : vector<1x32xf32> to vector<8x32xf32>
    %254 = arith.addf %251, %253 : vector<8x32xf32>
    %255 = arith.addf %254, %226 : vector<8x32xf32>
    %256 = vector.extract_strided_slice %155 {offsets = [4, 0], sizes = [1, 32], strides = [1, 1]} : vector<6x32xf32> to vector<1x32xf32>
    %257 = vector.extract_strided_slice %155 {offsets = [5, 0], sizes = [1, 32], strides = [1, 1]} : vector<6x32xf32> to vector<1x32xf32>
    %cst_93 = arith.constant dense<0.000000e+00> : vector<8xf32>
    %258 = vector.multi_reduction <add>, %255, %cst_93 [1] : vector<8x32xf32> to vector<8xf32>
    %259 = vector.shape_cast %258 : vector<8xf32> to vector<8x1xf32>
    %cst_94 = arith.constant 3.200000e+01 : f32
    %260 = vector.broadcast %cst_94 : f32 to vector<8x1xf32>
    %261 = arith.divf %259, %260 : vector<8x1xf32>
    %262 = vector.broadcast %261 : vector<8x1xf32> to vector<8x32xf32>
    %263 = arith.subf %255, %262 : vector<8x32xf32>
    %264 = arith.mulf %263, %263 : vector<8x32xf32>
    %cst_95 = arith.constant dense<0.000000e+00> : vector<8xf32>
    %265 = vector.multi_reduction <add>, %264, %cst_95 [1] : vector<8x32xf32> to vector<8xf32>
    %266 = vector.shape_cast %265 : vector<8xf32> to vector<8x1xf32>
    %cst_96 = arith.constant 3.200000e+01 : f32
    %267 = vector.broadcast %cst_96 : f32 to vector<8x1xf32>
    %268 = arith.divf %266, %267 : vector<8x1xf32>
    %269 = vector.broadcast %261 : vector<8x1xf32> to vector<8x32xf32>
    %270 = arith.subf %255, %269 : vector<8x32xf32>
    %cst_97 = arith.constant 9.99999996E-13 : f32
    %271 = vector.broadcast %cst_97 : f32 to vector<8x1xf32>
    %272 = arith.addf %268, %271 : vector<8x1xf32>
    %273 = math.rsqrt %272 : vector<8x1xf32>
    %274 = vector.broadcast %273 : vector<8x1xf32> to vector<8x32xf32>
    %275 = arith.mulf %270, %274 : vector<8x32xf32>
    %276 = vector.broadcast %256 : vector<1x32xf32> to vector<8x32xf32>
    %277 = arith.mulf %275, %276 : vector<8x32xf32>
    %278 = vector.broadcast %257 : vector<1x32xf32> to vector<8x32xf32>
    %279 = arith.addf %277, %278 : vector<8x32xf32>
    %280 = vector.extract_strided_slice %279 {offsets = [0, 0], sizes = [1, 32], strides = [1, 1]} : vector<8x32xf32> to vector<1x32xf32>
    %281 = arith.truncf %280 : vector<1x32xf32> to vector<1x32xbf16>
    %c0_98 = arith.constant 0 : index
    %c0_99 = arith.constant 0 : index
    %282 = vector.load %arg11[%c0_98, %c0_99] : memref<32x32xbf16, #tpu.memory_space<vmem>>, vector<32x32xbf16>
    %cst_100 = arith.constant dense<0.000000e+00> : vector<1x32xf32>
    %283 = tpu.matmul %281, %282, %cst_100 {dimension_numbers = #tpu.dot_dimension_numbers<[1], [0], [0], [1], [0, 0, 1, 1], [], []>} : vector<1x32xbf16>, vector<32x32xbf16>, vector<1x32xf32> -> vector<1x32xf32>
    %c0_101 = arith.constant 0 : index
    %c0_102 = arith.constant 0 : index
    %284 = vector.load %arg12[%c0_101, %c0_102] : memref<1x32xf32, #tpu.memory_space<vmem>>, vector<1x32xf32>
    %285 = arith.addf %283, %284 : vector<1x32xf32>
    %286 = math.tanh %285 : vector<1x32xf32>
    %287 = vector.shape_cast %286 : vector<1x32xf32> to vector<1x1x32xf32>
    %c0_103 = arith.constant 0 : index
    %c0_104 = arith.constant 0 : index
    %c0_105 = arith.constant 0 : index
    %288 = vector.load %arg13[%c0_103, %c0_104, %c0_105] : memref<1x1x32xf32, #tpu.memory_space<vmem>>, vector<1x1x32xf32>
    tpu.vector_store %arg13[%c0_103, %c0_104, %c0_105], %287 {strides = array<i32>} : memref<1x1x32xf32, #tpu.memory_space<vmem>>, vector<1x1x32xf32>,
    return
  }
  func.func @transform_0(%arg0: i32) -> (i32, i32, i32) {
    %c0_i32 = arith.constant 0 : i32
    %c0_i32_0 = arith.constant 0 : i32
    %c0_i32_1 = arith.constant 0 : i32
    return %arg0, %c0_i32, %c0_i32_0 : i32, i32, i32
  }
  func.func @transform_1(%arg0: i32) -> (i32, i32, i32) {
    %c0_i32 = arith.constant 0 : i32
    %c0_i32_0 = arith.constant 0 : i32
    %c0_i32_1 = arith.constant 0 : i32
    return %arg0, %c0_i32, %c0_i32_0 : i32, i32, i32
  }
  func.func @transform_2(%arg0: i32) -> (i32, i32) {
    %c0_i32 = arith.constant 0 : i32
    %c0_i32_0 = arith.constant 0 : i32
    %c0_i32_1 = arith.constant 0 : i32
    return %c0_i32, %c0_i32_0 : i32, i32
  }
  func.func @transform_3(%arg0: i32) -> (i32, i32, i32) {
    %c0_i32 = arith.constant 0 : i32
    %c0_i32_0 = arith.constant 0 : i32
    %c0_i32_1 = arith.constant 0 : i32
    %c0_i32_2 = arith.constant 0 : i32
    return %c0_i32, %c0_i32_0, %c0_i32_1 : i32, i32, i32
  }
  func.func @transform_4(%arg0: i32) -> (i32, i32, i32) {
    %c0_i32 = arith.constant 0 : i32
    %c0_i32_0 = arith.constant 0 : i32
    %c0_i32_1 = arith.constant 0 : i32
    %c0_i32_2 = arith.constant 0 : i32
    return %c0_i32, %c0_i32_0, %c0_i32_1 : i32, i32, i32
  }
  func.func @transform_5(%arg0: i32) -> (i32, i32, i32) {
    %c0_i32 = arith.constant 0 : i32
    %c0_i32_0 = arith.constant 0 : i32
    %c0_i32_1 = arith.constant 0 : i32
    %c0_i32_2 = arith.constant 0 : i32
    return %c0_i32, %c0_i32_0, %c0_i32_1 : i32, i32, i32
  }
  func.func @transform_6(%arg0: i32) -> (i32, i32, i32) {
    %c0_i32 = arith.constant 0 : i32
    %c0_i32_0 = arith.constant 0 : i32
    %c0_i32_1 = arith.constant 0 : i32
    %c0_i32_2 = arith.constant 0 : i32
    return %c0_i32, %c0_i32_0, %c0_i32_1 : i32, i32, i32
  }
  func.func @transform_7(%arg0: i32) -> (i32, i32, i32) {
    %c0_i32 = arith.constant 0 : i32
    %c0_i32_0 = arith.constant 0 : i32
    %c0_i32_1 = arith.constant 0 : i32
    %c0_i32_2 = arith.constant 0 : i32
    return %c0_i32, %c0_i32_0, %c0_i32_1 : i32, i32, i32
  }
  func.func @transform_8(%arg0: i32) -> (i32, i32, i32) {
    %c0_i32 = arith.constant 0 : i32
    %c0_i32_0 = arith.constant 0 : i32
    %c0_i32_1 = arith.constant 0 : i32
    %c0_i32_2 = arith.constant 0 : i32
    return %c0_i32, %c0_i32_0, %c0_i32_1 : i32, i32, i32
  }
  func.func @transform_9(%arg0: i32) -> (i32, i32, i32) {
    %c0_i32 = arith.constant 0 : i32
    %c0_i32_0 = arith.constant 0 : i32
    %c0_i32_1 = arith.constant 0 : i32
    %c0_i32_2 = arith.constant 0 : i32
    return %c0_i32, %c0_i32_0, %c0_i32_1 : i32, i32, i32
  }
  func.func @transform_10(%arg0: i32) -> (i32, i32) {
    %c0_i32 = arith.constant 0 : i32
    %c0_i32_0 = arith.constant 0 : i32
    %c0_i32_1 = arith.constant 0 : i32
    return %c0_i32, %c0_i32_0 : i32, i32
  }
  func.func @transform_11(%arg0: i32) -> (i32, i32) {
    %c0_i32 = arith.constant 0 : i32
    %c0_i32_0 = arith.constant 0 : i32
    %c0_i32_1 = arith.constant 0 : i32
    return %c0_i32, %c0_i32_0 : i32, i32
  }
  func.func @transform_12(%arg0: i32) -> (i32, i32, i32) {
    %c0_i32 = arith.constant 0 : i32
    %c0_i32_0 = arith.constant 0 : i32
    %c0_i32_1 = arith.constant 0 : i32
    return %arg0, %c0_i32, %c0_i32_0 : i32, i32, i32
  }
}

</mosaic_0001>

<llo_original>
// kernel: text_feature_extractor.1
$region0: #{text_feature_extractor.1}
  #allocation0 [shape = 'u32[]', space=smem, size = 0x4, offset = 0x4, fixed_abs, tag = 'smem constant byte address 0x4 - core index']
  #allocation1 [shape = 'u32[144,128]{1,0:T(1,128)}', space=vmem, size = 0x12000, scoped, tag = 'internal scratch']
  %s0 = inlined_call_operand.vmem [shape: f32[2,8,32], index: 0, kind: input, shape index: {}]
  %s1 = inlined_call_operand.vmem [shape: f32[2,1,8], index: 1, kind: input, shape index: {}]
  %s2 = inlined_call_operand.vmem [shape: f32[2,32], index: 2, kind: input, shape index: {}]
  %s3 = inlined_call_operand.vmem [shape: bf16[2,32,96], index: 3, kind: input, shape index: {}]
  %s4 = inlined_call_operand.vmem [shape: bf16[2,32,32], index: 4, kind: input, shape index: {}]
  %s5 = inlined_call_operand.vmem [shape: bf16[2,32,64], index: 5, kind: input, shape index: {}]
  %s6 = inlined_call_operand.vmem [shape: bf16[2,64,32], index: 6, kind: input, shape index: {}]
  %s7 = inlined_call_operand.vmem [shape: f32[2,1,96], index: 7, kind: input, shape index: {}]
  %s8 = inlined_call_operand.vmem [shape: f32[2,1,64], index: 8, kind: input, shape index: {}]
  %s9 = inlined_call_operand.vmem [shape: f32[2,6,32], index: 9, kind: input, shape index: {}]
  %s10 = inlined_call_operand.vmem [shape: bf16[32,32], index: 10, kind: input, shape index: {}]
  %s11 = inlined_call_operand.vmem [shape: f32[1,32], index: 11, kind: input, shape index: {}]
  %s12 = inlined_call_operand.hbm [shape: f32[2,1,32], index: 12, kind: output, shape index: {}]
  %s13 = sld [smem:[#allocation0]]
  $region81: #{text_feature_extractor.1} parent=0
    _
  %s15 = ssub.s32 1, %s13
  %s16 = scalar_select 0, %s15, %s13
  $region1: #{text_feature_extractor.1} parent=0
    #allocation2 [shape = 'u8[1024]{0}', space=vmem, size = 0x400, scoped, tag = 'output window, operand 0']
    #allocation3 [shape = 's32[2]{0}', space=sflag, size = 0x8, scoped, tag = 'scoped memory for text_feature_extractor.1']
    %17 = vsyncpa [#allocation3], 0
    %s18 = scalar_lea.sflag [#allocation3], 1
    %19 = vsyncpa %s18, 0
    loop: start=0, step=1, limit=4
    $region2: #{text_feature_extractor.1} parent=1 // loop_pre_header
      _
    $region3: #{text_feature_extractor.1} parent=1 // loop_header
      %s21 = sphi 0, %s25
      %p22 = scmp.ge.s32.totalorder %s21, 4
      %s31 = sphi 0, %s33
      %s34 = sphi 0, %s31
      %s35 = sphi 0, %s34
      %s51 = sphi 0, %s35
      %s57 = sphi 0, %s59
      %s60 = sphi 0, %s57
      %s61 = sphi 0, %s60
      %s77 = sphi 0, %s61
      %s81 = sphi 0, %s81
      %s83 = sphi 0, %s81
      %s84 = sphi 0, %s83
      %s98 = sphi 0, %s84
      %s102 = sphi 0, %s102
      %s104 = sphi 0, %s102
      %s105 = sphi 0, %s104
      %s119 = sphi 0, %s105
      %s123 = sphi 0, %s123
      %s125 = sphi 0, %s123
      %s126 = sphi 0, %s125
      %s140 = sphi 0, %s126
      %s144 = sphi 0, %s144
      %s146 = sphi 0, %s144
      %s147 = sphi 0, %s146
      %s161 = sphi 0, %s147
      %s165 = sphi 0, %s165
      %s167 = sphi 0, %s165
      %s168 = sphi 0, %s167
      %s182 = sphi 0, %s168
      %s186 = sphi 0, %s186
      %s188 = sphi 0, %s186
      %s189 = sphi 0, %s188
      %s203 = sphi 0, %s189
      %s207 = sphi 0, %s207
      %s209 = sphi 0, %s207
      %s210 = sphi 0, %s209
      %s224 = sphi 0, %s210
      %s228 = sphi 0, %s228
      %s230 = sphi 0, %s228
      %s231 = sphi 0, %s230
      %s245 = sphi 0, %s231
      %s249 = sphi 0, %s249
      %s251 = sphi 0, %s249
      %s252 = sphi 0, %s251
      %s266 = sphi 0, %s252
      %s270 = sphi 0, %s270
      %s272 = sphi 0, %s270
      %s273 = sphi 0, %s272
      %s287 = sphi 0, %s273
      %s293 = sphi 0, %s295
      %s296 = sphi 0, %s293
      %s297 = sphi 0, %s296
      %s313 = sphi 0, %s297
    $region4: #{text_feature_extractor.1} parent=1 // loop_header_branch
      %24 = sbr.rel (%p22) target = $region8
    $region5: #{text_feature_extractor.1} parent=1 // loop_body
      %s26 = ssub.s32 %s21, 1
      %s27 = ssub.s32 %s21, 2
      %s28 = sadd.s32 %s21, 1
      %s29 = ssub.s32 %s21, %s28
      %p30 = scmp.eq.s32.totalorder %s29, 0
      %s32 = sadd.s32 %s31, 1
      %s33 = scalar_select %p30, %s31, %s32
      %p36 = pneg %p30
      %p37 = scmp.eq.s32.totalorder %s21, 1
      %p38 = por %p36, %p37
      %p39 = scmp.ne.s32.totalorder %s31, %s34
      %p40 = scmp.eq.s32.totalorder %s21, 0
      %p41 = por %p39, %p40
      %p42 = scmp.ne.s32.totalorder %s31, %s34
      %p43 = scmp.eq.s32.totalorder %s26, 1
      %p44 = por %p42, %p43
      %p45 = scmp.ne.s32.totalorder %s34, %s35
      %p46 = scmp.eq.s32.totalorder %s26, 0
      %p47 = por %p45, %p46
      %p48 = scmp.ne.s32.totalorder %s34, %s35
      %p49 = scmp.eq.s32.totalorder %s27, 1
      %p50 = por %p48, %p49
      %p52 = scmp.ne.s32.totalorder %s35, %s51
      %p53 = scmp.eq.s32.totalorder %s27, 0
      %p54 = por %p52, %p53
      %s55 = ssub.s32 %s21, %s28
      %p56 = scmp.eq.s32.totalorder %s55, 0
      %s58 = sadd.s32 %s57, 1
      %s59 = scalar_select %p56, %s57, %s58
      %p62 = pneg %p56
      %p63 = scmp.eq.s32.totalorder %s21, 1
      %p64 = por %p62, %p63
      %p65 = scmp.ne.s32.totalorder %s57, %s60
      %p66 = scmp.eq.s32.totalorder %s21, 0
      %p67 = por %p65, %p66
      %p68 = scmp.ne.s32.totalorder %s57, %s60
      %p69 = scmp.eq.s32.totalorder %s26, 1
      %p70 = por %p68, %p69
      %p71 = scmp.ne.s32.totalorder %s60, %s61
      %p72 = scmp.eq.s32.totalorder %s26, 0
      %p73 = por %p71, %p72
      %p74 = scmp.ne.s32.totalorder %s60, %s61
      %p75 = scmp.eq.s32.totalorder %s27, 1
      %p76 = por %p74, %p75
      %p78 = scmp.ne.s32.totalorder %s61, %s77
      %p79 = scmp.eq.s32.totalorder %s27, 0
      %p80 = por %p78, %p79
      %s82 = sadd.s32 %s81, 1
      %p85 = scmp.eq.s32.totalorder %s21, 1
      %p86 = scmp.ne.s32.totalorder %s81, %s83
      %p87 = scmp.eq.s32.totalorder %s21, 0
      %p88 = por %p86, %p87
      %p89 = scmp.ne.s32.totalorder %s81, %s83
      %p90 = scmp.eq.s32.totalorder %s26, 1
      %p91 = por %p89, %p90
      %p92 = scmp.ne.s32.totalorder %s83, %s84
      %p93 = scmp.eq.s32.totalorder %s26, 0
      %p94 = por %p92, %p93
      %p95 = scmp.ne.s32.totalorder %s83, %s84
      %p96 = scmp.eq.s32.totalorder %s27, 1
      %p97 = por %p95, %p96
      %p99 = scmp.ne.s32.totalorder %s84, %s98
      %p100 = scmp.eq.s32.totalorder %s27, 0
      %p101 = por %p99, %p100
      %s103 = sadd.s32 %s102, 1
      %p106 = scmp.eq.s32.totalorder %s21, 1
      %p107 = scmp.ne.s32.totalorder %s102, %s104
      %p108 = scmp.eq.s32.totalorder %s21, 0
      %p109 = por %p107, %p108
      %p110 = scmp.ne.s32.totalorder %s102, %s104
      %p111 = scmp.eq.s32.totalorder %s26, 1
      %p112 = por %p110, %p111
      %p113 = scmp.ne.s32.totalorder %s104, %s105
      %p114 = scmp.eq.s32.totalorder %s26, 0
      %p115 = por %p113, %p114
      %p116 = scmp.ne.s32.totalorder %s104, %s105
      %p117 = scmp.eq.s32.totalorder %s27, 1
      %p118 = por %p116, %p117
      %p120 = scmp.ne.s32.totalorder %s105, %s119
      %p121 = scmp.eq.s32.totalorder %s27, 0
      %p122 = por %p120, %p121
      %s124 = sadd.s32 %s123, 1
      %p127 = scmp.eq.s32.totalorder %s21, 1
      %p128 = scmp.ne.s32.totalorder %s123, %s125
      %p129 = scmp.eq.s32.totalorder %s21, 0
      %p130 = por %p128, %p129
      %p131 = scmp.ne.s32.totalorder %s123, %s125
      %p132 = scmp.eq.s32.totalorder %s26, 1
      %p133 = por %p131, %p132
      %p134 = scmp.ne.s32.totalorder %s125, %s126
      %p135 = scmp.eq.s32.totalorder %s26, 0
      %p136 = por %p134, %p135
      %p137 = scmp.ne.s32.totalorder %s125, %s126
      %p138 = scmp.eq.s32.totalorder %s27, 1
      %p139 = por %p137, %p138
      %p141 = scmp.ne.s32.totalorder %s126, %s140
      %p142 = scmp.eq.s32.totalorder %s27, 0
      %p143 = por %p141, %p142
      %s145 = sadd.s32 %s144, 1
      %p148 = scmp.eq.s32.totalorder %s21, 1
      %p149 = scmp.ne.s32.totalorder %s144, %s146
      %p150 = scmp.eq.s32.totalorder %s21, 0
      %p151 = por %p149, %p150
      %p152 = scmp.ne.s32.totalorder %s144, %s146
      %p153 = scmp.eq.s32.totalorder %s26, 1
      %p154 = por %p152, %p153
      %p155 = scmp.ne.s32.totalorder %s146, %s147
      %p156 = scmp.eq.s32.totalorder %s26, 0
      %p157 = por %p155, %p156
      %p158 = scmp.ne.s32.totalorder %s146, %s147
      %p159 = scmp.eq.s32.totalorder %s27, 1
      %p160 = por %p158, %p159
      %p162 = scmp.ne.s32.totalorder %s147, %s161
      %p163 = scmp.eq.s32.totalorder %s27, 0
      %p164 = por %p162, %p163
      %s166 = sadd.s32 %s165, 1
      %p169 = scmp.eq.s32.totalorder %s21, 1
      %p170 = scmp.ne.s32.totalorder %s165, %s167
      %p171 = scmp.eq.s32.totalorder %s21, 0
      %p172 = por %p170, %p171
      %p173 = scmp.ne.s32.totalorder %s165, %s167
      %p174 = scmp.eq.s32.totalorder %s26, 1
      %p175 = por %p173, %p174
      %p176 = scmp.ne.s32.totalorder %s167, %s168
      %p177 = scmp.eq.s32.totalorder %s26, 0
      %p178 = por %p176, %p177
      %p179 = scmp.ne.s32.totalorder %s167, %s168
      %p180 = scmp.eq.s32.totalorder %s27, 1
      %p181 = por %p179, %p180
      %p183 = scmp.ne.s32.totalorder %s168, %s182
      %p184 = scmp.eq.s32.totalorder %s27, 0
      %p185 = por %p183, %p184
      %s187 = sadd.s32 %s186, 1
      %p190 = scmp.eq.s32.totalorder %s21, 1
      %p191 = scmp.ne.s32.totalorder %s186, %s188
      %p192 = scmp.eq.s32.totalorder %s21, 0
      %p193 = por %p191, %p192
      %p194 = scmp.ne.s32.totalorder %s186, %s188
      %p195 = scmp.eq.s32.totalorder %s26, 1
      %p196 = por %p194, %p195
      %p197 = scmp.ne.s32.totalorder %s188, %s189
      %p198 = scmp.eq.s32.totalorder %s26, 0
      %p199 = por %p197, %p198
      %p200 = scmp.ne.s32.totalorder %s188, %s189
      %p201 = scmp.eq.s32.totalorder %s27, 1
      %p202 = por %p200, %p201
      %p204 = scmp.ne.s32.totalorder %s189, %s203
      %p205 = scmp.eq.s32.totalorder %s27, 0
      %p206 = por %p204, %p205
      %s208 = sadd.s32 %s207, 1
      %p211 = scmp.eq.s32.totalorder %s21, 1
      %p212 = scmp.ne.s32.totalorder %s207, %s209
      %p213 = scmp.eq.s32.totalorder %s21, 0
      %p214 = por %p212, %p213
      %p215 = scmp.ne.s32.totalorder %s207, %s209
      %p216 = scmp.eq.s32.totalorder %s26, 1
      %p217 = por %p215, %p216
      %p218 = scmp.ne.s32.totalorder %s209, %s210
      %p219 = scmp.eq.s32.totalorder %s26, 0
      %p220 = por %p218, %p219
      %p221 = scmp.ne.s32.totalorder %s209, %s210
      %p222 = scmp.eq.s32.totalorder %s27, 1
      %p223 = por %p221, %p222
      %p225 = scmp.ne.s32.totalorder %s210, %s224
      %p226 = scmp.eq.s32.totalorder %s27, 0
      %p227 = por %p225, %p226
      %s229 = sadd.s32 %s228, 1
      %p232 = scmp.eq.s32.totalorder %s21, 1
      %p233 = scmp.ne.s32.totalorder %s228, %s230
      %p234 = scmp.eq.s32.totalorder %s21, 0
      %p235 = por %p233, %p234
      %p236 = scmp.ne.s32.totalorder %s228, %s230
      %p237 = scmp.eq.s32.totalorder %s26, 1
      %p238 = por %p236, %p237
      %p239 = scmp.ne.s32.totalorder %s230, %s231
      %p240 = scmp.eq.s32.totalorder %s26, 0
      %p241 = por %p239, %p240
      %p242 = scmp.ne.s32.totalorder %s230, %s231
      %p243 = scmp.eq.s32.totalorder %s27, 1
      %p244 = por %p242, %p243
      %p246 = scmp.ne.s32.totalorder %s231, %s245
      %p247 = scmp.eq.s32.totalorder %s27, 0
      %p248 = por %p246, %p247
      %s250 = sadd.s32 %s249, 1
      %p253 = scmp.eq.s32.totalorder %s21, 1
      %p254 = scmp.ne.s32.totalorder %s249, %s251
      %p255 = scmp.eq.s32.totalorder %s21, 0
      %p256 = por %p254, %p255
      %p257 = scmp.ne.s32.totalorder %s249, %s251
      %p258 = scmp.eq.s32.totalorder %s26, 1
      %p259 = por %p257, %p258
      %p260 = scmp.ne.s32.totalorder %s251, %s252
      %p261 = scmp.eq.s32.totalorder %s26, 0
      %p262 = por %p260, %p261
      %p263 = scmp.ne.s32.totalorder %s251, %s252
      %p264 = scmp.eq.s32.totalorder %s27, 1
      %p265 = por %p263, %p264
      %p267 = scmp.ne.s32.totalorder %s252, %s266
      %p268 = scmp.eq.s32.totalorder %s27, 0
      %p269 = por %p267, %p268
      %s271 = sadd.s32 %s270, 1
      %p274 = scmp.eq.s32.totalorder %s21, 1
      %p275 = scmp.ne.s32.totalorder %s270, %s272
      %p276 = scmp.eq.s32.totalorder %s21, 0
      %p277 = por %p275, %p276
      %p278 = scmp.ne.s32.totalorder %s270, %s272
      %p279 = scmp.eq.s32.totalorder %s26, 1
      %p280 = por %p278, %p279
      %p281 = scmp.ne.s32.totalorder %s272, %s273
      %p282 = scmp.eq.s32.totalorder %s26, 0
      %p283 = por %p281, %p282
      %p284 = scmp.ne.s32.totalorder %s272, %s273
      %p285 = scmp.eq.s32.totalorder %s27, 1
      %p286 = por %p284, %p285
      %p288 = scmp.ne.s32.totalorder %s273, %s287
      %p289 = scmp.eq.s32.totalorder %s27, 0
      %p290 = por %p288, %p289
      %s291 = ssub.s32 %s21, %s28
      %p292 = scmp.eq.s32.totalorder %s291, 0
      %s294 = sadd.s32 %s293, 1
      %s295 = scalar_select %p292, %s293, %s294
      %p298 = pneg %p292
      %p299 = scmp.eq.s32.totalorder %s21, 1
      %p300 = por %p298, %p299
      %p301 = scmp.ne.s32.totalorder %s293, %s296
      %p302 = scmp.eq.s32.totalorder %s21, 0
      %p303 = por %p301, %p302
      %p304 = scmp.ne.s32.totalorder %s293, %s296
      %p305 = scmp.eq.s32.totalorder %s26, 1
      %p306 = por %p304, %p305
      %p307 = scmp.ne.s32.totalorder %s296, %s297
      %p308 = scmp.eq.s32.totalorder %s26, 0
      %p309 = por %p307, %p308
      %p310 = scmp.ne.s32.totalorder %s296, %s297
      %p311 = scmp.eq.s32.totalorder %s27, 1
      %p312 = por %p310, %p311
      %p314 = scmp.ne.s32.totalorder %s297, %s313
      %p315 = scmp.eq.s32.totalorder %s27, 0
      %p316 = por %p314, %p315
      %p317 = scmp.le.s32.totalorder 1, %s21
      %p318 = scmp.lt.s32.totalorder %s21, 3
      %p319 = pnand %p317, %p318
      %p320 = pneg %p319
      // Predicated region
      $region9: #{text_feature_extractor.1} parent=5 // pred_check
        _
      $region10: #{text_feature_extractor.1} parent=5 // pred_check_branch
        %322 = sbr.rel (%p319) target = $region12
      $region11: #{text_feature_extractor.1} parent=5 // pred_region
        %s323 = ssub.s32 %s21, 1
        // Predicated region
        $region13: #{text_feature_extractor.1} parent=11 // pred_check
          %p324 = pneg %p94
        $region14: #{text_feature_extractor.1} parent=11 // pred_check_branch
          %326 = sbr.rel (%p324) target = $region16
        $region15: #{text_feature_extractor.1} parent=11 // pred_region
          _
        $region16: #{text_feature_extractor.1} parent=11 // pred_fallthru
          _
        // Predicated region
        $region17: #{text_feature_extractor.1} parent=11 // pred_check
          %p327 = pneg %p115
        $region18: #{text_feature_extractor.1} parent=11 // pred_check_branch
          %329 = sbr.rel (%p327) target = $region20
        $region19: #{text_feature_extractor.1} parent=11 // pred_region
          _
        $region20: #{text_feature_extractor.1} parent=11 // pred_fallthru
          _
        // Predicated region
        $region21: #{text_feature_extractor.1} parent=11 // pred_check
          %p330 = pneg %p136
        $region22: #{text_feature_extractor.1} parent=11 // pred_check_branch
          %332 = sbr.rel (%p330) target = $region24
        $region23: #{text_feature_extractor.1} parent=11 // pred_region
          _
        $region24: #{text_feature_extractor.1} parent=11 // pred_fallthru
          _
        // Predicated region
        $region25: #{text_feature_extractor.1} parent=11 // pred_check
          %p333 = pneg %p157
        $region26: #{text_feature_extractor.1} parent=11 // pred_check_branch
          %335 = sbr.rel (%p333) target = $region28
        $region27: #{text_feature_extractor.1} parent=11 // pred_region
          _
        $region28: #{text_feature_extractor.1} parent=11 // pred_fallthru
          _
        // Predicated region
        $region29: #{text_feature_extractor.1} parent=11 // pred_check
          %p336 = pneg %p178
        $region30: #{text_feature_extractor.1} parent=11 // pred_check_branch
          %338 = sbr.rel (%p336) target = $region32
        $region31: #{text_feature_extractor.1} parent=11 // pred_region
          _
        $region32: #{text_feature_extractor.1} parent=11 // pred_fallthru
          _
        // Predicated region
        $region33: #{text_feature_extractor.1} parent=11 // pred_check
          %p339 = pneg %p199
        $region34: #{text_feature_extractor.1} parent=11 // pred_check_branch
          %341 = sbr.rel (%p339) target = $region36
        $region35: #{text_feature_extractor.1} parent=11 // pred_region
          _
        $region36: #{text_feature_extractor.1} parent=11 // pred_fallthru
          _
        // Predicated region
        $region37: #{text_feature_extractor.1} parent=11 // pred_check
          %p342 = pneg %p220
        $region38: #{text_feature_extractor.1} parent=11 // pred_check_branch
          %344 = sbr.rel (%p342) target = $region40
        $region39: #{text_feature_extractor.1} parent=11 // pred_region
          _
        $region40: #{text_feature_extractor.1} parent=11 // pred_fallthru
          _
        // Predicated region
        $region41: #{text_feature_extractor.1} parent=11 // pred_check
          %p345 = pneg %p241
        $region42: #{text_feature_extractor.1} parent=11 // pred_check_branch
          %347 = sbr.rel (%p345) target = $region44
        $region43: #{text_feature_extractor.1} parent=11 // pred_region
          _
        $region44: #{text_feature_extractor.1} parent=11 // pred_fallthru
          _
        // Predicated region
        $region45: #{text_feature_extractor.1} parent=11 // pred_check
          %p348 = pneg %p262
        $region46: #{text_feature_extractor.1} parent=11 // pred_check_branch
          %350 = sbr.rel (%p348) target = $region48
        $region47: #{text_feature_extractor.1} parent=11 // pred_region
          _
        $region48: #{text_feature_extractor.1} parent=11 // pred_fallthru
          _
        // Predicated region
        $region49: #{text_feature_extractor.1} parent=11 // pred_check
          %p351 = pneg %p283
        $region50: #{text_feature_extractor.1} parent=11 // pred_check_branch
          %353 = sbr.rel (%p351) target = $region52
        $region51: #{text_feature_extractor.1} parent=11 // pred_region
          _
        $region52: #{text_feature_extractor.1} parent=11 // pred_fallthru
          _
      $region12: #{text_feature_extractor.1} parent=5 // pred_fallthru
        _
      %p354 = scmp.lt.s32.totalorder %s21, 2
      // Predicated region
      $region53: #{text_feature_extractor.1} parent=5 // pred_check
        %p355 = pneg %p354
      $region54: #{text_feature_extractor.1} parent=5 // pred_check_branch
        %357 = sbr.rel (%p355) target = $region56
      $region55: #{text_feature_extractor.1} parent=5 // pred_region
        // Predicated region
        $region57: #{text_feature_extractor.1} parent=55 // pred_check
          %p358 = pneg %p41
        $region58: #{text_feature_extractor.1} parent=55 // pred_check_branch
          %360 = sbr.rel (%p358) target = $region60
        $region59: #{text_feature_extractor.1} parent=55 // pred_region
          %p361 = scmp.lt.s32.totalorder %s21, 1
          %s362 = scalar_select %p361, %s21, 1
          %s363 = smul.addr %s362, 8
          %s364 = scalar_lea.vmem %s0, %s363
        $region60: #{text_feature_extractor.1} parent=55 // pred_fallthru
          _
        // Predicated region
        $region61: #{text_feature_extractor.1} parent=55 // pred_check
          %p365 = pneg %p67
        $region62: #{text_feature_extractor.1} parent=55 // pred_check_branch
          %367 = sbr.rel (%p365) target = $region64
        $region63: #{text_feature_extractor.1} parent=55 // pred_region
          %p368 = scmp.lt.s32.totalorder %s21, 1
          %s369 = scalar_select %p368, %s21, 1
          %s370 = scalar_lea.vmem %s1, %s369
        $region64: #{text_feature_extractor.1} parent=55 // pred_fallthru
          _
      $region56: #{text_feature_extractor.1} parent=5 // pred_fallthru
        _
      %p371 = scmp.le.s32.totalorder 1, %s21
      %p372 = scmp.lt.s32.totalorder %s21, 3
      %p373 = pnand %p371, %p372
      %p374 = pneg %p373
      // Predicated region
      $region65: #{text_feature_extractor.1} parent=5 // pred_check
        _
      $region66: #{text_feature_extractor.1} parent=5 // pred_check_branch
        %376 = sbr.rel (%p373) target = $region68
      $region67: #{text_feature_extractor.1} parent=5 // pred_region
        %s377 = ssub.s32 %s21, 1
        %p378 = scmp.lt.s32.totalorder %s26, 1
        %s379 = scalar_select %p378, %s26, 1
        %s380 = smul.addr %s379, 8
        %s381 = scalar_lea.vmem %s0, %s380
        %p382 = pneg %p47
        %p383 = pneg %p44
        %p384 = scmp.lt.s32.totalorder %s26, 1
        %s385 = scalar_select %p384, %s26, 1
        %s386 = scalar_lea.vmem %s1, %s385
        %p387 = pneg %p73
        %p388 = pneg %p70
        %p389 = pneg %p94
        %p390 = pneg %p91
        %p391 = pneg %p115
        %p392 = pneg %p112
        %p393 = pneg %p136
        %p394 = pneg %p133
        %p395 = pneg %p157
        %p396 = pneg %p154
        %p397 = pneg %p178
        %p398 = pneg %p175
        %p399 = pneg %p199
        %p400 = pneg %p196
        %p401 = pneg %p220
        %p402 = pneg %p217
        %p403 = pneg %p241
        %p404 = pneg %p238
        %p405 = pneg %p262
        %p406 = pneg %p259
        %p407 = pneg %p283
        %p408 = pneg %p280
        %p409 = pneg %p309
        %p410 = pneg %p306
        %s411 = sand.u32 %s296, 1
        %s412 = scalar_lea.sflag [#allocation3], %s411
        %s413 = sand.u32 %s296, 1
        %s414 = scalar_lea.vmem [#allocation2], %s413
        %p415 = scmp.lt.s32.totalorder %s26, 1
        %s416 = scalar_select %p415, %s26, 1
        %s417 = smul.addr %s416, 8
        %s418 = scalar_lea.vmem %s0, %s417
        %p419 = scmp.lt.s32.totalorder %s26, 1
        %s420 = scalar_select %p419, %s26, 1
        %s421 = scalar_lea.vmem %s1, %s420
        %v423 = vld [vmem:[%s421] sm:$0x1]
        %v424 = vld [vmem:[%s2] sm:$0x3]
        %v425 = vld [vmem:[%s418] sm:$0xff]
        %vm426 = vcmask 261120
        %v427 = vsel %vm426, %v425, 0.0
        %428 = vadd.xlane.f32.xlu0 %v427
        %v429 = vpop.xlane.xlu0 %428
        %v430 = vrcp.pop 32.0
        %v431 = vmul.f32 %v429, %v430
        %v432 = vsub.f32 %v425, %v431
        %v433 = vmul.f32 %v432, %v432
        %v434 = vsel %vm426, %v433, 0.0
        %435 = vadd.xlane.f32.xlu0 %v434
        %v436 = vpop.xlane.xlu0 %435
        %v437 = vmul.f32 %v436, %v430
        %v438 = vadd.f32 %v437, 1e-12
        %v439 = vrsqrt.pop %v438
        %v440 = vmul.f32 %v432, %v439
        %v441 = vlaneseq
        %v442 = vshrl.u32 %v441, 7
        %v443 = vsub.s32 0, %v442
        %v444 = vrot.slane %v424, %v443
        %v445 = vmul.f32 %v440, %v444
        %v446 = vlaneseq
        %v447 = vshrl.u32 %v446, 7
        %v448 = vsub.s32 1, %v447
        %v449 = vrot.slane %v424, %v448
        %v450 = vadd.f32 %v445, %v449
        %v451 = vld [vmem:[%s9] sm:$0x3f]
        %v452 = vpack.c.bf16 %v450, %v450
        %v453 = vld [vmem:[%s3] sm:$0xf]
        %v454 = vld [vmem:[%s3 + $0x4] sm:$0xf]
        %v455 = vld [vmem:[%s3 + $0x8] sm:$0xf]
        %v456 = vld [vmem:[%s3 + $0xc] sm:$0xf]
        %v457 = vld [vmem:[%s7] sm:$0x1]
        %v459 = vlaneseq
        %v460 = vshrl.u32 %v459, 7
        %v461 = vsub.s32 0, %v460
        %v462 = vrot.slane %v457, %v461
        %v468 = vunpack.c.l.b16 %v453
        %v469 = vunpack.c.l.b16 %v454
        %v470 = vunpack.c.l.b16 %v455
        %v471 = vunpack.c.l.b16 %v456
        %v472 = vpack.c.b16 %v469, %v468
        %v473 = vpack.c.b16 %v471, %v470
        %v477 = vsel %vm426, %v452, 0
        %479 = vmatprep.subr.bf16.mxu0 0
        %480 = vmatpush1.bf16.msra.mxu0 0
        %481 = vmatprep.subr.bf16.mxu0 0
        %482 = vmatpush1.bf16.msra.mxu0 0
        %483 = vmatprep.subr.bf16.mxu0 0
        %484 = vmatpush1.bf16.msra.mxu0 0
        %485 = vmatprep.subr.bf16.mxu0 0
        %486 = vmatpush1.bf16.msra.mxu0 0
        %487 = vmatprep.subr.bf16.mxu0 0
        %488 = vmatpush1.bf16.msra.mxu0 0
        %489 = vmatprep.subr.bf16.mxu0 0
        %490 = vmatpush1.bf16.msra.mxu0 0
        %491 = vmatprep.subr.bf16.mxu0 0
        %492 = vmatpush1.bf16.msra.mxu0 %v473
        %493 = vmatprep.subr.bf16.mxu0 0
        %494 = vmatpush1.bf16.msra.mxu0 %v472
        %495 = vmatprep.subr.bf16.mxu0 0
        %496 = vmatpush2.bf16.msra.mxu0 0
        %497 = vmatprep.subr.bf16.mxu0 0
        %498 = vmatpush2.bf16.msra.mxu0 0
        %499 = vmatprep.subr.bf16.mxu0 0
        %500 = vmatpush2.bf16.msra.mxu0 0
        %501 = vmatprep.subr.bf16.mxu0 0
        %502 = vmatpush2.bf16.msra.mxu0 0
        %503 = vmatprep.subr.bf16.mxu0 0
        %504 = vmatpush2.bf16.msra.mxu0 0
        %505 = vmatprep.subr.bf16.mxu0 0
        %506 = vmatpush2.bf16.msra.mxu0 0
        %507 = vmatprep.subr.bf16.mxu0 0
        %508 = vmatpush2.bf16.msra.mxu0 0
        %509 = vmatprep.subr.bf16.mxu0 0
        %510 = vmatpush2.bf16.msra.mxu0 0
        %511 = vmatprep.mubr.bf16.mxu0 0
        %512 = vmatmul.mubr.bf16.gmra.mxu0 %v477
        %v513 = vpop.f32.mrf.mxu0
        %v514 = vadd.f32 %v462, %v513
        %v515 = vpop.f32.mrf.mxu0
        %v516 = vpop.f32.mrf.mxu0
        %v517 = vpop.f32.mrf.mxu0
        %518 = vdwg.mxu0
        %520 = vrot.lane.b32.xlu0 %v514, 120
        %v521 = vpop.permute.xlu0 %520
        %523 = vrot.lane.b32.xlu0 %v514, 112
        %v524 = vpop.permute.xlu0 %523
        %526 = vrot.lane.b32.xlu0 %v514, 104
        %v527 = vpop.permute.xlu0 %526
        %v529 = vcombine.low %v514, %v524
        %v530 = vcombine.high %v514, %v524
        %v532 = vunpack.c.l.s4 1983009808
        %v533 = vunpack.c.0.s8 %v532
        %v534 = vlaneseq
        %v535 = vshrl.u32 %v534, 7
        %v536 = vsub.s32 %v533, %v535
        %v537 = vrot.slane %v529, %v536
        %v539 = vunpack.c.l.s4 1983009808
        %v540 = vunpack.c.0.s8 %v539
        %v541 = vlaneseq
        %v542 = vshrl.u32 %v541, 7
        %v543 = vsub.s32 %v540, %v542
        %v544 = vrot.slane %v530, %v543
        %v545 = vcombine.low %v521, %v527
        %v546 = vcombine.high %v521, %v527
        %v548 = vunpack.c.l.s4 1983009808
        %v549 = vunpack.c.0.s8 %v548
        %v550 = vlaneseq
        %v551 = vshrl.u32 %v550, 7
        %v552 = vsub.s32 %v549, %v551
        %v553 = vrot.slane %v545, %v552
        %v555 = vunpack.c.l.s4 1983009808
        %v556 = vunpack.c.0.s8 %v555
        %v557 = vlaneseq
        %v558 = vshrl.u32 %v557, 7
        %v559 = vsub.s32 %v556, %v558
        %v560 = vrot.slane %v546, %v559
        %v561 = vcombine.low %v537, %v553
        %v562 = vcombine.high %v537, %v553
        %v564 = vunpack.c.l.s4 1934713408
        %v565 = vunpack.c.0.s8 %v564
        %v566 = vlaneseq
        %v567 = vshrl.u32 %v566, 7
        %v568 = vsub.s32 %v565, %v567
        %v569 = vrot.slane %v561, %v568
        %v571 = vunpack.c.l.s4 1934713408
        %v572 = vunpack.c.0.s8 %v571
        %v573 = vlaneseq
        %v574 = vshrl.u32 %v573, 7
        %v575 = vsub.s32 %v572, %v574
        %v576 = vrot.slane %v562, %v575
        %v577 = vcombine.low %v544, %v560
        %v578 = vcombine.high %v544, %v560
        %v580 = vunpack.c.l.s4 1934713408
        %v581 = vunpack.c.0.s8 %v580
        %v582 = vlaneseq
        %v583 = vshrl.u32 %v582, 7
        %v584 = vsub.s32 %v581, %v583
        %v585 = vrot.slane %v577, %v584
        %v587 = vunpack.c.l.s4 1934713408
        %v588 = vunpack.c.0.s8 %v587
        %v589 = vlaneseq
        %v590 = vshrl.u32 %v589, 7
        %v591 = vsub.s32 %v588, %v590
        %v592 = vrot.slane %v578, %v591
        %v593 = vcombine.high %v569, 0.0
        %v594 = vcombine.high %v576, 0.0
        %v595 = vcombine.high %v585, 0.0
        %v596 = vcombine.high %v592, 0.0
        %v597 = vcombine.low %v569, %v576
        %v599 = vunpack.c.l.s4 1983009808
        %v600 = vunpack.c.0.s8 %v599
        %v601 = vlaneseq
        %v602 = vshrl.u32 %v601, 7
        %v603 = vsub.s32 %v600, %v602
        %v604 = vrot.slane %v597, %v603
        %v605 = vcombine.low %v593, %v594
        %v607 = vunpack.c.l.s4 1983009808
        %v608 = vunpack.c.0.s8 %v607
        %v609 = vlaneseq
        %v610 = vshrl.u32 %v609, 7
        %v611 = vsub.s32 %v608, %v610
        %v612 = vrot.slane %v605, %v611
        %v613 = vcombine.low %v585, %v592
        %v615 = vunpack.c.l.s4 1983009808
        %v616 = vunpack.c.0.s8 %v615
        %v617 = vlaneseq
        %v618 = vshrl.u32 %v617, 7
        %v619 = vsub.s32 %v616, %v618
        %v620 = vrot.slane %v613, %v619
        %v621 = vcombine.low %v595, %v596
        %v623 = vunpack.c.l.s4 1983009808
        %v624 = vunpack.c.0.s8 %v623
        %v625 = vlaneseq
        %v626 = vshrl.u32 %v625, 7
        %v627 = vsub.s32 %v624, %v626
        %v628 = vrot.slane %v621, %v627
        %v629 = vcombine.low %v604, %v612
        %v630 = vcombine.high %v604, %v612
        %v632 = vunpack.c.l.s4 1934713408
        %v633 = vunpack.c.0.s8 %v632
        %v634 = vlaneseq
        %v635 = vshrl.u32 %v634, 7
        %v636 = vsub.s32 %v633, %v635
        %v637 = vrot.slane %v629, %v636
        %v639 = vunpack.c.l.s4 1934713408
        %v640 = vunpack.c.0.s8 %v639
        %v641 = vlaneseq
        %v642 = vshrl.u32 %v641, 7
        %v643 = vsub.s32 %v640, %v642
        %v644 = vrot.slane %v630, %v643
        %v645 = vcombine.low %v620, %v628
        %v646 = vcombine.high %v620, %v628
        %v648 = vunpack.c.l.s4 1934713408
        %v649 = vunpack.c.0.s8 %v648
        %v650 = vlaneseq
        %v651 = vshrl.u32 %v650, 7
        %v652 = vsub.s32 %v649, %v651
        %v653 = vrot.slane %v645, %v652
        %v655 = vunpack.c.l.s4 1934713408
        %v656 = vunpack.c.0.s8 %v655
        %v657 = vlaneseq
        %v658 = vshrl.u32 %v657, 7
        %v659 = vsub.s32 %v656, %v658
        %v660 = vrot.slane %v646, %v659
        %v661 = vcombine.low %v637, %v653
        %v662 = vcombine.high %v637, %v653
        %v663 = vcombine.low %v644, %v660
        %v664 = vcombine.high %v644, %v660
        %665 = vrot.lane.b32.xlu0 %v514, 96
        %v666 = vpop.permute.xlu0 %665
        %667 = vrot.lane.b32.xlu0 %v521, 96
        %v668 = vpop.permute.xlu0 %667
        %669 = vrot.lane.b32.xlu0 %v524, 96
        %v670 = vpop.permute.xlu0 %669
        %671 = vrot.lane.b32.xlu0 %v527, 96
        %v672 = vpop.permute.xlu0 %671
        %v677 = vcombine.low %v666, %v670
        %v678 = vcombine.high %v666, %v670
        %v680 = vunpack.c.l.s4 1983009808
        %v681 = vunpack.c.0.s8 %v680
        %v682 = vlaneseq
        %v683 = vshrl.u32 %v682, 7
        %v684 = vsub.s32 %v681, %v683
        %v685 = vrot.slane %v677, %v684
        %v687 = vunpack.c.l.s4 1983009808
        %v688 = vunpack.c.0.s8 %v687
        %v689 = vlaneseq
        %v690 = vshrl.u32 %v689, 7
        %v691 = vsub.s32 %v688, %v690
        %v692 = vrot.slane %v678, %v691
        %v693 = vcombine.low %v668, %v672
        %v694 = vcombine.high %v668, %v672
        %v696 = vunpack.c.l.s4 1983009808
        %v697 = vunpack.c.0.s8 %v696
        %v698 = vlaneseq
        %v699 = vshrl.u32 %v698, 7
        %v700 = vsub.s32 %v697, %v699
        %v701 = vrot.slane %v693, %v700
        %v703 = vunpack.c.l.s4 1983009808
        %v704 = vunpack.c.0.s8 %v703
        %v705 = vlaneseq
        %v706 = vshrl.u32 %v705, 7
        %v707 = vsub.s32 %v704, %v706
        %v708 = vrot.slane %v694, %v707
        %v709 = vcombine.low %v685, %v701
        %v710 = vcombine.high %v685, %v701
        %v712 = vunpack.c.l.s4 1934713408
        %v713 = vunpack.c.0.s8 %v712
        %v714 = vlaneseq
        %v715 = vshrl.u32 %v714, 7
        %v716 = vsub.s32 %v713, %v715
        %v717 = vrot.slane %v709, %v716
        %v719 = vunpack.c.l.s4 1934713408
        %v720 = vunpack.c.0.s8 %v719
        %v721 = vlaneseq
        %v722 = vshrl.u32 %v721, 7
        %v723 = vsub.s32 %v720, %v722
        %v724 = vrot.slane %v710, %v723
        %v725 = vcombine.low %v692, %v708
        %v726 = vcombine.high %v692, %v708
        %v728 = vunpack.c.l.s4 1934713408
        %v729 = vunpack.c.0.s8 %v728
        %v730 = vlaneseq
        %v731 = vshrl.u32 %v730, 7
        %v732 = vsub.s32 %v729, %v731
        %v733 = vrot.slane %v725, %v732
        %v735 = vunpack.c.l.s4 1934713408
        %v736 = vunpack.c.0.s8 %v735
        %v737 = vlaneseq
        %v738 = vshrl.u32 %v737, 7
        %v739 = vsub.s32 %v736, %v738
        %v740 = vrot.slane %v726, %v739
        %v741 = vcombine.high %v717, 0.0
        %v742 = vcombine.high %v724, 0.0
        %v743 = vcombine.high %v733, 0.0
        %v744 = vcombine.high %v740, 0.0
        %v745 = vcombine.low %v717, %v724
        %v747 = vunpack.c.l.s4 1983009808
        %v748 = vunpack.c.0.s8 %v747
        %v749 = vlaneseq
        %v750 = vshrl.u32 %v749, 7
        %v751 = vsub.s32 %v748, %v750
        %v752 = vrot.slane %v745, %v751
        %v753 = vcombine.low %v741, %v742
        %v755 = vunpack.c.l.s4 1983009808
        %v756 = vunpack.c.0.s8 %v755
        %v757 = vlaneseq
        %v758 = vshrl.u32 %v757, 7
        %v759 = vsub.s32 %v756, %v758
        %v760 = vrot.slane %v753, %v759
        %v761 = vcombine.low %v733, %v740
        %v763 = vunpack.c.l.s4 1983009808
        %v764 = vunpack.c.0.s8 %v763
        %v765 = vlaneseq
        %v766 = vshrl.u32 %v765, 7
        %v767 = vsub.s32 %v764, %v766
        %v768 = vrot.slane %v761, %v767
        %v769 = vcombine.low %v743, %v744
        %v771 = vunpack.c.l.s4 1983009808
        %v772 = vunpack.c.0.s8 %v771
        %v773 = vlaneseq
        %v774 = vshrl.u32 %v773, 7
        %v775 = vsub.s32 %v772, %v774
        %v776 = vrot.slane %v769, %v775
        %v777 = vcombine.low %v752, %v760
        %v778 = vcombine.high %v752, %v760
        %v780 = vunpack.c.l.s4 1934713408
        %v781 = vunpack.c.0.s8 %v780
        %v782 = vlaneseq
        %v783 = vshrl.u32 %v782, 7
        %v784 = vsub.s32 %v781, %v783
        %v785 = vrot.slane %v777, %v784
        %v787 = vunpack.c.l.s4 1934713408
        %v788 = vunpack.c.0.s8 %v787
        %v789 = vlaneseq
        %v790 = vshrl.u32 %v789, 7
        %v791 = vsub.s32 %v788, %v790
        %v792 = vrot.slane %v778, %v791
        %v793 = vcombine.low %v768, %v776
        %v794 = vcombine.high %v768, %v776
        %v796 = vunpack.c.l.s4 1934713408
        %v797 = vunpack.c.0.s8 %v796
        %v798 = vlaneseq
        %v799 = vshrl.u32 %v798, 7
        %v800 = vsub.s32 %v797, %v799
        %v801 = vrot.slane %v793, %v800
        %v803 = vunpack.c.l.s4 1934713408
        %v804 = vunpack.c.0.s8 %v803
        %v805 = vlaneseq
        %v806 = vshrl.u32 %v805, 7
        %v807 = vsub.s32 %v804, %v806
        %v808 = vrot.slane %v794, %v807
        %v809 = vcombine.low %v785, %v801
        %v810 = vcombine.high %v785, %v801
        %v811 = vcombine.low %v792, %v808
        %v812 = vcombine.high %v792, %v808
        %813 = vrot.lane.b32.xlu0 %v514, 64
        %v814 = vpop.permute.xlu0 %813
        %815 = vrot.lane.b32.xlu0 %v521, 64
        %v816 = vpop.permute.xlu0 %815
        %817 = vrot.lane.b32.xlu0 %v524, 64
        %v818 = vpop.permute.xlu0 %817
        %819 = vrot.lane.b32.xlu0 %v527, 64
        %v820 = vpop.permute.xlu0 %819
        %v825 = vcombine.low %v814, %v818
        %v826 = vcombine.high %v814, %v818
        %v828 = vunpack.c.l.s4 1983009808
        %v829 = vunpack.c.0.s8 %v828
        %v830 = vlaneseq
        %v831 = vshrl.u32 %v830, 7
        %v832 = vsub.s32 %v829, %v831
        %v833 = vrot.slane %v825, %v832
        %v835 = vunpack.c.l.s4 1983009808
        %v836 = vunpack.c.0.s8 %v835
        %v837 = vlaneseq
        %v838 = vshrl.u32 %v837, 7
        %v839 = vsub.s32 %v836, %v838
        %v840 = vrot.slane %v826, %v839
        %v841 = vcombine.low %v816, %v820
        %v842 = vcombine.high %v816, %v820
        %v844 = vunpack.c.l.s4 1983009808
        %v845 = vunpack.c.0.s8 %v844
        %v846 = vlaneseq
        %v847 = vshrl.u32 %v846, 7
        %v848 = vsub.s32 %v845, %v847
        %v849 = vrot.slane %v841, %v848
        %v851 = vunpack.c.l.s4 1983009808
        %v852 = vunpack.c.0.s8 %v851
        %v853 = vlaneseq
        %v854 = vshrl.u32 %v853, 7
        %v855 = vsub.s32 %v852, %v854
        %v856 = vrot.slane %v842, %v855
        %v857 = vcombine.low %v833, %v849
        %v858 = vcombine.high %v833, %v849
        %v860 = vunpack.c.l.s4 1934713408
        %v861 = vunpack.c.0.s8 %v860
        %v862 = vlaneseq
        %v863 = vshrl.u32 %v862, 7
        %v864 = vsub.s32 %v861, %v863
        %v865 = vrot.slane %v857, %v864
        %v867 = vunpack.c.l.s4 1934713408
        %v868 = vunpack.c.0.s8 %v867
        %v869 = vlaneseq
        %v870 = vshrl.u32 %v869, 7
        %v871 = vsub.s32 %v868, %v870
        %v872 = vrot.slane %v858, %v871
        %v873 = vcombine.low %v840, %v856
        %v874 = vcombine.high %v840, %v856
        %v876 = vunpack.c.l.s4 1934713408
        %v877 = vunpack.c.0.s8 %v876
        %v878 = vlaneseq
        %v879 = vshrl.u32 %v878, 7
        %v880 = vsub.s32 %v877, %v879
        %v881 = vrot.slane %v873, %v880
        %v883 = vunpack.c.l.s4 1934713408
        %v884 = vunpack.c.0.s8 %v883
        %v885 = vlaneseq
        %v886 = vshrl.u32 %v885, 7
        %v887 = vsub.s32 %v884, %v886
        %v888 = vrot.slane %v874, %v887
        %v889 = vcombine.high %v865, 0.0
        %v890 = vcombine.high %v872, 0.0
        %v891 = vcombine.high %v881, 0.0
        %v892 = vcombine.high %v888, 0.0
        %v893 = vcombine.low %v865, %v872
        %v895 = vunpack.c.l.s4 1983009808
        %v896 = vunpack.c.0.s8 %v895
        %v897 = vlaneseq
        %v898 = vshrl.u32 %v897, 7
        %v899 = vsub.s32 %v896, %v898
        %v900 = vrot.slane %v893, %v899
        %v901 = vcombine.low %v889, %v890
        %v903 = vunpack.c.l.s4 1983009808
        %v904 = vunpack.c.0.s8 %v903
        %v905 = vlaneseq
        %v906 = vshrl.u32 %v905, 7
        %v907 = vsub.s32 %v904, %v906
        %v908 = vrot.slane %v901, %v907
        %v909 = vcombine.low %v881, %v888
        %v911 = vunpack.c.l.s4 1983009808
        %v912 = vunpack.c.0.s8 %v911
        %v913 = vlaneseq
        %v914 = vshrl.u32 %v913, 7
        %v915 = vsub.s32 %v912, %v914
        %v916 = vrot.slane %v909, %v915
        %v917 = vcombine.low %v891, %v892
        %v919 = vunpack.c.l.s4 1983009808
        %v920 = vunpack.c.0.s8 %v919
        %v921 = vlaneseq
        %v922 = vshrl.u32 %v921, 7
        %v923 = vsub.s32 %v920, %v922
        %v924 = vrot.slane %v917, %v923
        %v925 = vcombine.low %v900, %v908
        %v926 = vcombine.high %v900, %v908
        %v928 = vunpack.c.l.s4 1934713408
        %v929 = vunpack.c.0.s8 %v928
        %v930 = vlaneseq
        %v931 = vshrl.u32 %v930, 7
        %v932 = vsub.s32 %v929, %v931
        %v933 = vrot.slane %v925, %v932
        %v935 = vunpack.c.l.s4 1934713408
        %v936 = vunpack.c.0.s8 %v935
        %v937 = vlaneseq
        %v938 = vshrl.u32 %v937, 7
        %v939 = vsub.s32 %v936, %v938
        %v940 = vrot.slane %v926, %v939
        %v941 = vcombine.low %v916, %v924
        %v942 = vcombine.high %v916, %v924
        %v944 = vunpack.c.l.s4 1934713408
        %v945 = vunpack.c.0.s8 %v944
        %v946 = vlaneseq
        %v947 = vshrl.u32 %v946, 7
        %v948 = vsub.s32 %v945, %v947
        %v949 = vrot.slane %v941, %v948
        %v951 = vunpack.c.l.s4 1934713408
        %v952 = vunpack.c.0.s8 %v951
        %v953 = vlaneseq
        %v954 = vshrl.u32 %v953, 7
        %v955 = vsub.s32 %v952, %v954
        %v956 = vrot.slane %v942, %v955
        %v957 = vcombine.low %v933, %v949
        %v958 = vcombine.high %v933, %v949
        %v959 = vcombine.low %v940, %v956
        %v960 = vcombine.high %v940, %v956
        %v961 = vpack.c.bf16 %v661, %v661
        %v962 = vpack.c.bf16 %v662, %v662
        %v963 = vpack.c.bf16 %v663, %v663
        %v964 = vpack.c.bf16 %v664, %v664
        %v965 = vpack.c.bf16 %v809, %v809
        %v966 = vpack.c.bf16 %v810, %v810
        %v967 = vpack.c.bf16 %v811, %v811
        %v968 = vpack.c.bf16 %v812, %v812
        %vm969 = vcmask 64512
        %v971 = vsel %vm969, %v961, 0
        %v974 = vsel %vm969, %v965, 0
        %976 = vmatprep.subr.bf16.mxu0 0
        %977 = vmatpush1.bf16.xpose.msra.mxu0 0
        %978 = vmatprep.subr.bf16.mxu0 0
        %979 = vmatpush1.bf16.xpose.msra.mxu0 0
        %980 = vmatprep.subr.bf16.mxu0 0
        %981 = vmatpush1.bf16.xpose.msra.mxu0 0
        %982 = vmatprep.subr.bf16.mxu0 0
        %983 = vmatpush1.bf16.xpose.msra.mxu0 0
        %984 = vmatprep.subr.bf16.mxu0 0
        %985 = vmatpush1.bf16.xpose.msra.mxu0 0
        %986 = vmatprep.subr.bf16.mxu0 0
        %987 = vmatpush1.bf16.xpose.msra.mxu0 0
        %988 = vmatprep.subr.bf16.mxu0 0
        %989 = vmatpush1.bf16.xpose.msra.mxu0 0
        %990 = vmatprep.subr.bf16.mxu0 0
        %991 = vmatpush1.bf16.xpose.msra.mxu0 %v974
        %992 = vmatprep.subr.bf16.mxu0 0
        %993 = vmatpush2.bf16.xpose.msra.mxu0 0
        %994 = vmatprep.subr.bf16.mxu0 0
        %995 = vmatpush2.bf16.xpose.msra.mxu0 0
        %996 = vmatprep.subr.bf16.mxu0 0
        %997 = vmatpush2.bf16.xpose.msra.mxu0 0
        %998 = vmatprep.subr.bf16.mxu0 0
        %999 = vmatpush2.bf16.xpose.msra.mxu0 0
        %1000 = vmatprep.subr.bf16.mxu0 0
        %1001 = vmatpush2.bf16.xpose.msra.mxu0 0
        %1002 = vmatprep.subr.bf16.mxu0 0
        %1003 = vmatpush2.bf16.xpose.msra.mxu0 0
        %1004 = vmatprep.subr.bf16.mxu0 0
        %1005 = vmatpush2.bf16.xpose.msra.mxu0 0
        %1006 = vmatprep.subr.bf16.mxu0 0
        %1007 = vmatpush2.bf16.xpose.msra.mxu0 0
        %1008 = vmatprep.mubr.bf16.mxu0 0
        %1009 = vmatmul.mubr.bf16.gmra.mxu0 %v971
        %v1010 = vpop.f32.mrf.mxu0
        %v1011 = vadd.f32 0.0, %v1010
        %v1012 = vpop.f32.mrf.mxu0
        %v1013 = vpop.f32.mrf.mxu0
        %v1014 = vpop.f32.mrf.mxu0
        %1015 = vdwg.mxu0
        %v1017 = vsel %vm969, %v962, 0
        %v1020 = vsel %vm969, %v966, 0
        %1022 = vmatprep.subr.bf16.mxu0 0
        %1023 = vmatpush1.bf16.xpose.msra.mxu0 0
        %1024 = vmatprep.subr.bf16.mxu0 0
        %1025 = vmatpush1.bf16.xpose.msra.mxu0 0
        %1026 = vmatprep.subr.bf16.mxu0 0
        %1027 = vmatpush1.bf16.xpose.msra.mxu0 0
        %1028 = vmatprep.subr.bf16.mxu0 0
        %1029 = vmatpush1.bf16.xpose.msra.mxu0 0
        %1030 = vmatprep.subr.bf16.mxu0 0
        %1031 = vmatpush1.bf16.xpose.msra.mxu0 0
        %1032 = vmatprep.subr.bf16.mxu0 0
        %1033 = vmatpush1.bf16.xpose.msra.mxu0 0
        %1034 = vmatprep.subr.bf16.mxu0 0
        %1035 = vmatpush1.bf16.xpose.msra.mxu0 0
        %1036 = vmatprep.subr.bf16.mxu0 0
        %1037 = vmatpush1.bf16.xpose.msra.mxu0 %v1020
        %1038 = vmatprep.subr.bf16.mxu0 0
        %1039 = vmatpush2.bf16.xpose.msra.mxu0 0
        %1040 = vmatprep.subr.bf16.mxu0 0
        %1041 = vmatpush2.bf16.xpose.msra.mxu0 0
        %1042 = vmatprep.subr.bf16.mxu0 0
        %1043 = vmatpush2.bf16.xpose.msra.mxu0 0
        %1044 = vmatprep.subr.bf16.mxu0 0
        %1045 = vmatpush2.bf16.xpose.msra.mxu0 0
        %1046 = vmatprep.subr.bf16.mxu0 0
        %1047 = vmatpush2.bf16.xpose.msra.mxu0 0
        %1048 = vmatprep.subr.bf16.mxu0 0
        %1049 = vmatpush2.bf16.xpose.msra.mxu0 0
        %1050 = vmatprep.subr.bf16.mxu0 0
        %1051 = vmatpush2.bf16.xpose.msra.mxu0 0
        %1052 = vmatprep.subr.bf16.mxu0 0
        %1053 = vmatpush2.bf16.xpose.msra.mxu0 0
        %1054 = vmatprep.mubr.bf16.mxu0 0
        %1055 = vmatmul.mubr.bf16.gmra.mxu0 %v1017
        %v1056 = vpop.f32.mrf.mxu0
        %v1057 = vadd.f32 0.0, %v1056
        %v1058 = vpop.f32.mrf.mxu0
        %v1059 = vpop.f32.mrf.mxu0
        %v1060 = vpop.f32.mrf.mxu0
        %1061 = vdwg.mxu0
        %v1063 = vsel %vm969, %v963, 0
        %v1066 = vsel %vm969, %v967, 0
        %1068 = vmatprep.subr.bf16.mxu0 0
        %1069 = vmatpush1.bf16.xpose.msra.mxu0 0
        %1070 = vmatprep.subr.bf16.mxu0 0
        %1071 = vmatpush1.bf16.xpose.msra.mxu0 0
        %1072 = vmatprep.subr.bf16.mxu0 0
        %1073 = vmatpush1.bf16.xpose.msra.mxu0 0
        %1074 = vmatprep.subr.bf16.mxu0 0
        %1075 = vmatpush1.bf16.xpose.msra.mxu0 0
        %1076 = vmatprep.subr.bf16.mxu0 0
        %1077 = vmatpush1.bf16.xpose.msra.mxu0 0
        %1078 = vmatprep.subr.bf16.mxu0 0
        %1079 = vmatpush1.bf16.xpose.msra.mxu0 0
        %1080 = vmatprep.subr.bf16.mxu0 0
        %1081 = vmatpush1.bf16.xpose.msra.mxu0 0
        %1082 = vmatprep.subr.bf16.mxu0 0
        %1083 = vmatpush1.bf16.xpose.msra.mxu0 %v1066
        %1084 = vmatprep.subr.bf16.mxu0 0
        %1085 = vmatpush2.bf16.xpose.msra.mxu0 0
        %1086 = vmatprep.subr.bf16.mxu0 0
        %1087 = vmatpush2.bf16.xpose.msra.mxu0 0
        %1088 = vmatprep.subr.bf16.mxu0 0
        %1089 = vmatpush2.bf16.xpose.msra.mxu0 0
        %1090 = vmatprep.subr.bf16.mxu0 0
        %1091 = vmatpush2.bf16.xpose.msra.mxu0 0
        %1092 = vmatprep.subr.bf16.mxu0 0
        %1093 = vmatpush2.bf16.xpose.msra.mxu0 0
        %1094 = vmatprep.subr.bf16.mxu0 0
        %1095 = vmatpush2.bf16.xpose.msra.mxu0 0
        %1096 = vmatprep.subr.bf16.mxu0 0
        %1097 = vmatpush2.bf16.xpose.msra.mxu0 0
        %1098 = vmatprep.subr.bf16.mxu0 0
        %1099 = vmatpush2.bf16.xpose.msra.mxu0 0
        %1100 = vmatprep.mubr.bf16.mxu0 0
        %1101 = vmatmul.mubr.bf16.gmra.mxu0 %v1063
        %v1102 = vpop.f32.mrf.mxu0
        %v1103 = vadd.f32 0.0, %v1102
        %v1104 = vpop.f32.mrf.mxu0
        %v1105 = vpop.f32.mrf.mxu0
        %v1106 = vpop.f32.mrf.mxu0
        %1107 = vdwg.mxu0
        %v1109 = vsel %vm969, %v964, 0
        %v1112 = vsel %vm969, %v968, 0
        %1114 = vmatprep.subr.bf16.mxu0 0
        %1115 = vmatpush1.bf16.xpose.msra.mxu0 0
        %1116 = vmatprep.subr.bf16.mxu0 0
        %1117 = vmatpush1.bf16.xpose.msra.mxu0 0
        %1118 = vmatprep.subr.bf16.mxu0 0
        %1119 = vmatpush1.bf16.xpose.msra.mxu0 0
        %1120 = vmatprep.subr.bf16.mxu0 0
        %1121 = vmatpush1.bf16.xpose.msra.mxu0 0
        %1122 = vmatprep.subr.bf16.mxu0 0
        %1123 = vmatpush1.bf16.xpose.msra.mxu0 0
        %1124 = vmatprep.subr.bf16.mxu0 0
        %1125 = vmatpush1.bf16.xpose.msra.mxu0 0
        %1126 = vmatprep.subr.bf16.mxu0 0
        %1127 = vmatpush1.bf16.xpose.msra.mxu0 0
        %1128 = vmatprep.subr.bf16.mxu0 0
        %1129 = vmatpush1.bf16.xpose.msra.mxu0 %v1112
        %1130 = vmatprep.subr.bf16.mxu0 0
        %1131 = vmatpush2.bf16.xpose.msra.mxu0 0
        %1132 = vmatprep.subr.bf16.mxu0 0
        %1133 = vmatpush2.bf16.xpose.msra.mxu0 0
        %1134 = vmatprep.subr.bf16.mxu0 0
        %1135 = vmatpush2.bf16.xpose.msra.mxu0 0
        %1136 = vmatprep.subr.bf16.mxu0 0
        %1137 = vmatpush2.bf16.xpose.msra.mxu0 0
        %1138 = vmatprep.subr.bf16.mxu0 0
        %1139 = vmatpush2.bf16.xpose.msra.mxu0 0
        %1140 = vmatprep.subr.bf16.mxu0 0
        %1141 = vmatpush2.bf16.xpose.msra.mxu0 0
        %1142 = vmatprep.subr.bf16.mxu0 0
        %1143 = vmatpush2.bf16.xpose.msra.mxu0 0
        %1144 = vmatprep.subr.bf16.mxu0 0
        %1145 = vmatpush2.bf16.xpose.msra.mxu0 0
        %1146 = vmatprep.mubr.bf16.mxu0 0
        %1147 = vmatmul.mubr.bf16.gmra.mxu0 %v1109
        %v1148 = vpop.f32.mrf.mxu0
        %v1149 = vadd.f32 0.0, %v1148
        %v1150 = vpop.f32.mrf.mxu0
        %v1151 = vpop.f32.mrf.mxu0
        %v1152 = vpop.f32.mrf.mxu0
        %1153 = vdwg.mxu0
        %v1154 = vmul.f32 %v1011, 0.35355338
        %v1155 = vmul.f32 %v1057, 0.35355338
        %v1156 = vmul.f32 %v1103, 0.35355338
        %v1157 = vmul.f32 %v1149, 0.35355338
        %v1159 = vlaneseq
        %v1160 = vshrl.u32 %v1159, 7
        %v1161 = vsub.s32 0, %v1160
        %v1162 = vrot.slane %v423, %v1161
        %v1164 = vadd.f32 %v1154, %v1162
        %v1165 = vadd.f32 %v1155, %v1162
        %v1166 = vadd.f32 %v1156, %v1162
        %v1167 = vadd.f32 %v1157, %v1162
        %v1168 = vsel %vm969, %v1164, -inf
        %1169 = vmax.xlane.f32.xlu0 %v1168
        %v1170 = vpop.xlane.xlu0 %1169
        %v1171 = vsel %vm969, %v1165, -inf
        %1172 = vmax.xlane.f32.xlu0 %v1171
        %v1173 = vpop.xlane.xlu0 %1172
        %v1174 = vsel %vm969, %v1166, -inf
        %1175 = vmax.xlane.f32.xlu0 %v1174
        %v1176 = vpop.xlane.xlu0 %1175
        %v1177 = vsel %vm969, %v1167, -inf
        %1178 = vmax.xlane.f32.xlu0 %v1177
        %v1179 = vpop.xlane.xlu0 %1178
        %v1180 = vsub.f32 %v1164, %v1170
        %v1181 = vsub.f32 %v1165, %v1173
        %v1182 = vsub.f32 %v1166, %v1176
        %v1183 = vsub.f32 %v1167, %v1179
        %v1184 = vmul.f32 %v1180, 1.442695
        %v1185 = vpow.pop %v1184
        %v1186 = vmul.f32 %v1181, 1.442695
        %v1187 = vpow.pop %v1186
        %v1188 = vmul.f32 %v1182, 1.442695
        %v1189 = vpow.pop %v1188
        %v1190 = vmul.f32 %v1183, 1.442695
        %v1191 = vpow.pop %v1190
        %v1192 = vsel %vm969, %v1185, 0.0
        %1193 = vadd.xlane.f32.xlu0 %v1192
        %v1194 = vpop.xlane.xlu0 %1193
        %v1195 = vsel %vm969, %v1187, 0.0
        %1196 = vadd.xlane.f32.xlu0 %v1195
        %v1197 = vpop.xlane.xlu0 %1196
        %v1198 = vsel %vm969, %v1189, 0.0
        %1199 = vadd.xlane.f32.xlu0 %v1198
        %v1200 = vpop.xlane.xlu0 %1199
        %v1201 = vsel %vm969, %v1191, 0.0
        %1202 = vadd.xlane.f32.xlu0 %v1201
        %v1203 = vpop.xlane.xlu0 %1202
        %v1204 = vrcp.pop %v1194
        %v1205 = vrcp.pop %v1197
        %v1206 = vrcp.pop %v1200
        %v1207 = vrcp.pop %v1203
        %v1208 = vmul.f32 %v1185, %v1204
        %v1209 = vmul.f32 %v1187, %v1205
        %v1210 = vmul.f32 %v1189, %v1206
        %v1211 = vmul.f32 %v1191, %v1207
        %v1212 = vpack.c.bf16 %v1208, %v1208
        %v1213 = vpack.c.bf16 %v1209, %v1209
        %v1214 = vpack.c.bf16 %v1210, %v1210
        %v1215 = vpack.c.bf16 %v1211, %v1211
        %v1216 = vpack.c.bf16 %v957, %v957
        %v1217 = vpack.c.bf16 %v958, %v958
        %v1218 = vpack.c.bf16 %v959, %v959
        %v1219 = vpack.c.bf16 %v960, %v960
        %v1221 = vsel %vm969, %v1212, 0
        %vm1223 = vcmask 1043456
        %v1225 = vsel %vm1223, %v1216, 0
        %1227 = vmatprep.subr.bf16.mxu0 0
        %1228 = vmatpush1.bf16.msra.mxu0 0
        %1229 = vmatprep.subr.bf16.mxu0 0
        %1230 = vmatpush1.bf16.msra.mxu0 0
        %1231 = vmatprep.subr.bf16.mxu0 0
        %1232 = vmatpush1.bf16.msra.mxu0 0
        %1233 = vmatprep.subr.bf16.mxu0 0
        %1234 = vmatpush1.bf16.msra.mxu0 0
        %1235 = vmatprep.subr.bf16.mxu0 0
        %1236 = vmatpush1.bf16.msra.mxu0 0
        %1237 = vmatprep.subr.bf16.mxu0 0
        %1238 = vmatpush1.bf16.msra.mxu0 0
        %1239 = vmatprep.subr.bf16.mxu0 0
        %1240 = vmatpush1.bf16.msra.mxu0 0
        %1241 = vmatprep.subr.bf16.mxu0 0
        %1242 = vmatpush1.bf16.msra.mxu0 %v1225
        %1243 = vmatprep.subr.bf16.mxu0 0
        %1244 = vmatpush2.bf16.msra.mxu0 0
        %1245 = vmatprep.subr.bf16.mxu0 0
        %1246 = vmatpush2.bf16.msra.mxu0 0
        %1247 = vmatprep.subr.bf16.mxu0 0
        %1248 = vmatpush2.bf16.msra.mxu0 0
        %1249 = vmatprep.subr.bf16.mxu0 0
        %1250 = vmatpush2.bf16.msra.mxu0 0
        %1251 = vmatprep.subr.bf16.mxu0 0
        %1252 = vmatpush2.bf16.msra.mxu0 0
        %1253 = vmatprep.subr.bf16.mxu0 0
        %1254 = vmatpush2.bf16.msra.mxu0 0
        %1255 = vmatprep.subr.bf16.mxu0 0
        %1256 = vmatpush2.bf16.msra.mxu0 0
        %1257 = vmatprep.subr.bf16.mxu0 0
        %1258 = vmatpush2.bf16.msra.mxu0 0
        %1259 = vmatprep.mubr.bf16.mxu0 0
        %1260 = vmatmul.mubr.bf16.gmra.mxu0 %v1221
        %v1261 = vpop.f32.mrf.mxu0
        %v1262 = vadd.f32 0.0, %v1261
        %v1263 = vpop.f32.mrf.mxu0
        %v1264 = vpop.f32.mrf.mxu0
        %v1265 = vpop.f32.mrf.mxu0
        %1266 = vdwg.mxu0
        %v1268 = vsel %vm969, %v1213, 0
        %v1271 = vsel %vm1223, %v1217, 0
        %1273 = vmatprep.subr.bf16.mxu0 0
        %1274 = vmatpush1.bf16.msra.mxu0 0
        %1275 = vmatprep.subr.bf16.mxu0 0
        %1276 = vmatpush1.bf16.msra.mxu0 0
        %1277 = vmatprep.subr.bf16.mxu0 0
        %1278 = vmatpush1.bf16.msra.mxu0 0
        %1279 = vmatprep.subr.bf16.mxu0 0
        %1280 = vmatpush1.bf16.msra.mxu0 0
        %1281 = vmatprep.subr.bf16.mxu0 0
        %1282 = vmatpush1.bf16.msra.mxu0 0
        %1283 = vmatprep.subr.bf16.mxu0 0
        %1284 = vmatpush1.bf16.msra.mxu0 0
        %1285 = vmatprep.subr.bf16.mxu0 0
        %1286 = vmatpush1.bf16.msra.mxu0 0
        %1287 = vmatprep.subr.bf16.mxu0 0
        %1288 = vmatpush1.bf16.msra.mxu0 %v1271
        %1289 = vmatprep.subr.bf16.mxu0 0
        %1290 = vmatpush2.bf16.msra.mxu0 0
        %1291 = vmatprep.subr.bf16.mxu0 0
        %1292 = vmatpush2.bf16.msra.mxu0 0
        %1293 = vmatprep.subr.bf16.mxu0 0
        %1294 = vmatpush2.bf16.msra.mxu0 0
        %1295 = vmatprep.subr.bf16.mxu0 0
        %1296 = vmatpush2.bf16.msra.mxu0 0
        %1297 = vmatprep.subr.bf16.mxu0 0
        %1298 = vmatpush2.bf16.msra.mxu0 0
        %1299 = vmatprep.subr.bf16.mxu0 0
        %1300 = vmatpush2.bf16.msra.mxu0 0
        %1301 = vmatprep.subr.bf16.mxu0 0
        %1302 = vmatpush2.bf16.msra.mxu0 0
        %1303 = vmatprep.subr.bf16.mxu0 0
        %1304 = vmatpush2.bf16.msra.mxu0 0
        %1305 = vmatprep.mubr.bf16.mxu0 0
        %1306 = vmatmul.mubr.bf16.gmra.mxu0 %v1268
        %v1307 = vpop.f32.mrf.mxu0
        %v1308 = vadd.f32 0.0, %v1307
        %v1309 = vpop.f32.mrf.mxu0
        %v1310 = vpop.f32.mrf.mxu0
        %v1311 = vpop.f32.mrf.mxu0
        %1312 = vdwg.mxu0
        %v1314 = vsel %vm969, %v1214, 0
        %v1317 = vsel %vm1223, %v1218, 0
        %1319 = vmatprep.subr.bf16.mxu0 0
        %1320 = vmatpush1.bf16.msra.mxu0 0
        %1321 = vmatprep.subr.bf16.mxu0 0
        %1322 = vmatpush1.bf16.msra.mxu0 0
        %1323 = vmatprep.subr.bf16.mxu0 0
        %1324 = vmatpush1.bf16.msra.mxu0 0
        %1325 = vmatprep.subr.bf16.mxu0 0
        %1326 = vmatpush1.bf16.msra.mxu0 0
        %1327 = vmatprep.subr.bf16.mxu0 0
        %1328 = vmatpush1.bf16.msra.mxu0 0
        %1329 = vmatprep.subr.bf16.mxu0 0
        %1330 = vmatpush1.bf16.msra.mxu0 0
        %1331 = vmatprep.subr.bf16.mxu0 0
        %1332 = vmatpush1.bf16.msra.mxu0 0
        %1333 = vmatprep.subr.bf16.mxu0 0
        %1334 = vmatpush1.bf16.msra.mxu0 %v1317
        %1335 = vmatprep.subr.bf16.mxu0 0
        %1336 = vmatpush2.bf16.msra.mxu0 0
        %1337 = vmatprep.subr.bf16.mxu0 0
        %1338 = vmatpush2.bf16.msra.mxu0 0
        %1339 = vmatprep.subr.bf16.mxu0 0
        %1340 = vmatpush2.bf16.msra.mxu0 0
        %1341 = vmatprep.subr.bf16.mxu0 0
        %1342 = vmatpush2.bf16.msra.mxu0 0
        %1343 = vmatprep.subr.bf16.mxu0 0
        %1344 = vmatpush2.bf16.msra.mxu0 0
        %1345 = vmatprep.subr.bf16.mxu0 0
        %1346 = vmatpush2.bf16.msra.mxu0 0
        %1347 = vmatprep.subr.bf16.mxu0 0
        %1348 = vmatpush2.bf16.msra.mxu0 0
        %1349 = vmatprep.subr.bf16.mxu0 0
        %1350 = vmatpush2.bf16.msra.mxu0 0
        %1351 = vmatprep.mubr.bf16.mxu0 0
        %1352 = vmatmul.mubr.bf16.gmra.mxu0 %v1314
        %v1353 = vpop.f32.mrf.mxu0
        %v1354 = vadd.f32 0.0, %v1353
        %v1355 = vpop.f32.mrf.mxu0
        %v1356 = vpop.f32.mrf.mxu0
        %v1357 = vpop.f32.mrf.mxu0
        %1358 = vdwg.mxu0
        %v1360 = vsel %vm969, %v1215, 0
        %v1363 = vsel %vm1223, %v1219, 0
        %1365 = vmatprep.subr.bf16.mxu0 0
        %1366 = vmatpush1.bf16.msra.mxu0 0
        %1367 = vmatprep.subr.bf16.mxu0 0
        %1368 = vmatpush1.bf16.msra.mxu0 0
        %1369 = vmatprep.subr.bf16.mxu0 0
        %1370 = vmatpush1.bf16.msra.mxu0 0
        %1371 = vmatprep.subr.bf16.mxu0 0
        %1372 = vmatpush1.bf16.msra.mxu0 0
        %1373 = vmatprep.subr.bf16.mxu0 0
        %1374 = vmatpush1.bf16.msra.mxu0 0
        %1375 = vmatprep.subr.bf16.mxu0 0
        %1376 = vmatpush1.bf16.msra.mxu0 0
        %1377 = vmatprep.subr.bf16.mxu0 0
        %1378 = vmatpush1.bf16.msra.mxu0 0
        %1379 = vmatprep.subr.bf16.mxu0 0
        %1380 = vmatpush1.bf16.msra.mxu0 %v1363
        %1381 = vmatprep.subr.bf16.mxu0 0
        %1382 = vmatpush2.bf16.msra.mxu0 0
        %1383 = vmatprep.subr.bf16.mxu0 0
        %1384 = vmatpush2.bf16.msra.mxu0 0
        %1385 = vmatprep.subr.bf16.mxu0 0
        %1386 = vmatpush2.bf16.msra.mxu0 0
        %1387 = vmatprep.subr.bf16.mxu0 0
        %1388 = vmatpush2.bf16.msra.mxu0 0
        %1389 = vmatprep.subr.bf16.mxu0 0
        %1390 = vmatpush2.bf16.msra.mxu0 0
        %1391 = vmatprep.subr.bf16.mxu0 0
        %1392 = vmatpush2.bf16.msra.mxu0 0
        %1393 = vmatprep.subr.bf16.mxu0 0
        %1394 = vmatpush2.bf16.msra.mxu0 0
        %1395 = vmatprep.subr.bf16.mxu0 0
        %1396 = vmatpush2.bf16.msra.mxu0 0
        %1397 = vmatprep.mubr.bf16.mxu0 0
        %1398 = vmatmul.mubr.bf16.gmra.mxu0 %v1360
        %v1399 = vpop.f32.mrf.mxu0
        %v1400 = vadd.f32 0.0, %v1399
        %v1401 = vpop.f32.mrf.mxu0
        %v1402 = vpop.f32.mrf.mxu0
        %v1403 = vpop.f32.mrf.mxu0
        %1404 = vdwg.mxu0
        %v1405 = vcombine.low %v1262, %v1354
        %v1406 = vcombine.high %v1262, %v1354
        %v1408 = vunpack.c.l.s4 1983009808
        %v1409 = vunpack.c.0.s8 %v1408
        %v1410 = vlaneseq
        %v1411 = vshrl.u32 %v1410, 7
        %v1412 = vsub.s32 %v1409, %v1411
        %v1413 = vrot.slane %v1405, %v1412
        %v1415 = vunpack.c.l.s4 1983009808
        %v1416 = vunpack.c.0.s8 %v1415
        %v1417 = vlaneseq
        %v1418 = vshrl.u32 %v1417, 7
        %v1419 = vsub.s32 %v1416, %v1418
        %v1420 = vrot.slane %v1406, %v1419
        %v1421 = vcombine.low %v1308, %v1400
        %v1422 = vcombine.high %v1308, %v1400
        %v1424 = vunpack.c.l.s4 1983009808
        %v1425 = vunpack.c.0.s8 %v1424
        %v1426 = vlaneseq
        %v1427 = vshrl.u32 %v1426, 7
        %v1428 = vsub.s32 %v1425, %v1427
        %v1429 = vrot.slane %v1421, %v1428
        %v1431 = vunpack.c.l.s4 1983009808
        %v1432 = vunpack.c.0.s8 %v1431
        %v1433 = vlaneseq
        %v1434 = vshrl.u32 %v1433, 7
        %v1435 = vsub.s32 %v1432, %v1434
        %v1436 = vrot.slane %v1422, %v1435
        %v1437 = vcombine.low %v1413, %v1429
        %v1438 = vcombine.high %v1413, %v1429
        %v1440 = vunpack.c.l.s4 1934713408
        %v1441 = vunpack.c.0.s8 %v1440
        %v1442 = vlaneseq
        %v1443 = vshrl.u32 %v1442, 7
        %v1444 = vsub.s32 %v1441, %v1443
        %v1445 = vrot.slane %v1437, %v1444
        %v1447 = vunpack.c.l.s4 1934713408
        %v1448 = vunpack.c.0.s8 %v1447
        %v1449 = vlaneseq
        %v1450 = vshrl.u32 %v1449, 7
        %v1451 = vsub.s32 %v1448, %v1450
        %v1452 = vrot.slane %v1438, %v1451
        %v1453 = vcombine.low %v1420, %v1436
        %v1454 = vcombine.high %v1420, %v1436
        %v1456 = vunpack.c.l.s4 1934713408
        %v1457 = vunpack.c.0.s8 %v1456
        %v1458 = vlaneseq
        %v1459 = vshrl.u32 %v1458, 7
        %v1460 = vsub.s32 %v1457, %v1459
        %v1461 = vrot.slane %v1453, %v1460
        %v1463 = vunpack.c.l.s4 1934713408
        %v1464 = vunpack.c.0.s8 %v1463
        %v1465 = vlaneseq
        %v1466 = vshrl.u32 %v1465, 7
        %v1467 = vsub.s32 %v1464, %v1466
        %v1468 = vrot.slane %v1454, %v1467
        %v1469 = vcombine.high %v1445, 0.0
        %v1470 = vcombine.high %v1452, 0.0
        %v1471 = vcombine.high %v1461, 0.0
        %v1472 = vcombine.high %v1468, 0.0
        %v1473 = vcombine.low %v1445, %v1452
        %v1475 = vunpack.c.l.s4 1983009808
        %v1476 = vunpack.c.0.s8 %v1475
        %v1477 = vlaneseq
        %v1478 = vshrl.u32 %v1477, 7
        %v1479 = vsub.s32 %v1476, %v1478
        %v1480 = vrot.slane %v1473, %v1479
        %v1481 = vcombine.low %v1469, %v1470
        %v1483 = vunpack.c.l.s4 1983009808
        %v1484 = vunpack.c.0.s8 %v1483
        %v1485 = vlaneseq
        %v1486 = vshrl.u32 %v1485, 7
        %v1487 = vsub.s32 %v1484, %v1486
        %v1488 = vrot.slane %v1481, %v1487
        %v1489 = vcombine.low %v1461, %v1468
        %v1491 = vunpack.c.l.s4 1983009808
        %v1492 = vunpack.c.0.s8 %v1491
        %v1493 = vlaneseq
        %v1494 = vshrl.u32 %v1493, 7
        %v1495 = vsub.s32 %v1492, %v1494
        %v1496 = vrot.slane %v1489, %v1495
        %v1497 = vcombine.low %v1471, %v1472
        %v1499 = vunpack.c.l.s4 1983009808
        %v1500 = vunpack.c.0.s8 %v1499
        %v1501 = vlaneseq
        %v1502 = vshrl.u32 %v1501, 7
        %v1503 = vsub.s32 %v1500, %v1502
        %v1504 = vrot.slane %v1497, %v1503
        %v1505 = vcombine.low %v1480, %v1488
        %v1506 = vcombine.high %v1480, %v1488
        %v1508 = vunpack.c.l.s4 1934713408
        %v1509 = vunpack.c.0.s8 %v1508
        %v1510 = vlaneseq
        %v1511 = vshrl.u32 %v1510, 7
        %v1512 = vsub.s32 %v1509, %v1511
        %v1513 = vrot.slane %v1505, %v1512
        %v1515 = vunpack.c.l.s4 1934713408
        %v1516 = vunpack.c.0.s8 %v1515
        %v1517 = vlaneseq
        %v1518 = vshrl.u32 %v1517, 7
        %v1519 = vsub.s32 %v1516, %v1518
        %v1520 = vrot.slane %v1506, %v1519
        %v1521 = vcombine.low %v1496, %v1504
        %v1522 = vcombine.high %v1496, %v1504
        %v1524 = vunpack.c.l.s4 1934713408
        %v1525 = vunpack.c.0.s8 %v1524
        %v1526 = vlaneseq
        %v1527 = vshrl.u32 %v1526, 7
        %v1528 = vsub.s32 %v1525, %v1527
        %v1529 = vrot.slane %v1521, %v1528
        %v1531 = vunpack.c.l.s4 1934713408
        %v1532 = vunpack.c.0.s8 %v1531
        %v1533 = vlaneseq
        %v1534 = vshrl.u32 %v1533, 7
        %v1535 = vsub.s32 %v1532, %v1534
        %v1536 = vrot.slane %v1522, %v1535
        %v1537 = vcombine.low %v1513, %v1529
        %v1538 = vcombine.high %v1513, %v1529
        %v1539 = vcombine.low %v1520, %v1536
        %v1540 = vcombine.high %v1520, %v1536
        %1542 = vrot.lane.b32.xlu0 %v1538, 8
        %v1543 = vpop.permute.xlu0 %1542
        %1546 = vrot.lane.b32.xlu0 %v1539, 16
        %v1547 = vpop.permute.xlu0 %1546
        %1550 = vrot.lane.b32.xlu0 %v1540, 24
        %v1551 = vpop.permute.xlu0 %1550
        %v1553 = vsel %vm969, %v1537, %v1543
        %vm1554 = vcmask 130048
        %v1555 = vsel %vm1554, %v1553, %v1547
        %vm1556 = vcmask 195584
        %v1557 = vsel %vm1556, %v1555, %v1551
        %v1558 = vpack.c.bf16 %v1557, %v1557
        %v1559 = vld [vmem:[%s4] sm:$0xf]
        %v1560 = vld [vmem:[%s4 + $0x4] sm:$0xf]
        %v1561 = vld [vmem:[%s4 + $0x8] sm:$0xf]
        %v1562 = vld [vmem:[%s4 + $0xc] sm:$0xf]
        %v1563 = vlaneseq
        %v1564 = vshrl.u32 %v1563, 7
        %v1565 = vsub.s32 0, %v1564
        %v1566 = vrot.slane %v451, %v1565
        %v1571 = vunpack.c.l.b16 %v1559
        %v1572 = vunpack.c.l.b16 %v1560
        %v1573 = vunpack.c.l.b16 %v1561
        %v1574 = vunpack.c.l.b16 %v1562
        %v1575 = vpack.c.b16 %v1572, %v1571
        %v1576 = vpack.c.b16 %v1574, %v1573
        %v1580 = vsel %vm426, %v1558, 0
        %1582 = vmatprep.subr.bf16.mxu0 0
        %1583 = vmatpush1.bf16.msra.mxu0 0
        %1584 = vmatprep.subr.bf16.mxu0 0
        %1585 = vmatpush1.bf16.msra.mxu0 0
        %1586 = vmatprep.subr.bf16.mxu0 0
        %1587 = vmatpush1.bf16.msra.mxu0 0
        %1588 = vmatprep.subr.bf16.mxu0 0
        %1589 = vmatpush1.bf16.msra.mxu0 0
        %1590 = vmatprep.subr.bf16.mxu0 0
        %1591 = vmatpush1.bf16.msra.mxu0 0
        %1592 = vmatprep.subr.bf16.mxu0 0
        %1593 = vmatpush1.bf16.msra.mxu0 0
        %1594 = vmatprep.subr.bf16.mxu0 0
        %1595 = vmatpush1.bf16.msra.mxu0 %v1576
        %1596 = vmatprep.subr.bf16.mxu0 0
        %1597 = vmatpush1.bf16.msra.mxu0 %v1575
        %1598 = vmatprep.subr.bf16.mxu0 0
        %1599 = vmatpush2.bf16.msra.mxu0 0
        %1600 = vmatprep.subr.bf16.mxu0 0
        %1601 = vmatpush2.bf16.msra.mxu0 0
        %1602 = vmatprep.subr.bf16.mxu0 0
        %1603 = vmatpush2.bf16.msra.mxu0 0
        %1604 = vmatprep.subr.bf16.mxu0 0
        %1605 = vmatpush2.bf16.msra.mxu0 0
        %1606 = vmatprep.subr.bf16.mxu0 0
        %1607 = vmatpush2.bf16.msra.mxu0 0
        %1608 = vmatprep.subr.bf16.mxu0 0
        %1609 = vmatpush2.bf16.msra.mxu0 0
        %1610 = vmatprep.subr.bf16.mxu0 0
        %1611 = vmatpush2.bf16.msra.mxu0 0
        %1612 = vmatprep.subr.bf16.mxu0 0
        %1613 = vmatpush2.bf16.msra.mxu0 0
        %1614 = vmatprep.mubr.bf16.mxu0 0
        %1615 = vmatmul.mubr.bf16.gmra.mxu0 %v1580
        %v1616 = vpop.f32.mrf.mxu0
        %v1617 = vadd.f32 %v1566, %v1616
        %v1618 = vpop.f32.mrf.mxu0
        %v1619 = vpop.f32.mrf.mxu0
        %v1620 = vpop.f32.mrf.mxu0
        %1621 = vdwg.mxu0
        %v1622 = vadd.f32 %v1617, %v450
        %v1623 = vsel %vm426, %v1622, 0.0
        %1624 = vadd.xlane.f32.xlu0 %v1623
        %v1625 = vpop.xlane.xlu0 %1624
        %v1626 = vmul.f32 %v1625, %v430
        %v1627 = vsub.f32 %v1622, %v1626
        %v1628 = vmul.f32 %v1627, %v1627
        %v1629 = vsel %vm426, %v1628, 0.0
        %1630 = vadd.xlane.f32.xlu0 %v1629
        %v1631 = vpop.xlane.xlu0 %1630
        %v1632 = vmul.f32 %v1631, %v430
        %v1633 = vadd.f32 %v1632, 1e-12
        %v1634 = vrsqrt.pop %v1633
        %v1635 = vmul.f32 %v1627, %v1634
        %v1636 = vlaneseq
        %v1637 = vshrl.u32 %v1636, 7
        %v1638 = vsub.s32 1, %v1637
        %v1639 = vrot.slane %v451, %v1638
        %v1640 = vmul.f32 %v1635, %v1639
        %v1641 = vlaneseq
        %v1642 = vshrl.u32 %v1641, 7
        %v1643 = vsub.s32 2, %v1642
        %v1644 = vrot.slane %v451, %v1643
        %v1645 = vadd.f32 %v1640, %v1644
        %v1646 = vpack.c.bf16 %v1645, %v1645
        %v1647 = vld [vmem:[%s5] sm:$0xf]
        %v1648 = vld [vmem:[%s5 + $0x4] sm:$0xf]
        %v1649 = vld [vmem:[%s5 + $0x8] sm:$0xf]
        %v1650 = vld [vmem:[%s5 + $0xc] sm:$0xf]
        %v1651 = vld [vmem:[%s8] sm:$0x1]
        %v1653 = vlaneseq
        %v1654 = vshrl.u32 %v1653, 7
        %v1655 = vsub.s32 0, %v1654
        %v1656 = vrot.slane %v1651, %v1655
        %v1662 = vunpack.c.l.b16 %v1647
        %v1663 = vunpack.c.l.b16 %v1648
        %v1664 = vunpack.c.l.b16 %v1649
        %v1665 = vunpack.c.l.b16 %v1650
        %v1666 = vpack.c.b16 %v1663, %v1662
        %v1667 = vpack.c.b16 %v1665, %v1664
        %v1671 = vsel %vm426, %v1646, 0
        %1673 = vmatprep.subr.bf16.mxu0 0
        %1674 = vmatpush1.bf16.msra.mxu0 0
        %1675 = vmatprep.subr.bf16.mxu0 0
        %1676 = vmatpush1.bf16.msra.mxu0 0
        %1677 = vmatprep.subr.bf16.mxu0 0
        %1678 = vmatpush1.bf16.msra.mxu0 0
        %1679 = vmatprep.subr.bf16.mxu0 0
        %1680 = vmatpush1.bf16.msra.mxu0 0
        %1681 = vmatprep.subr.bf16.mxu0 0
        %1682 = vmatpush1.bf16.msra.mxu0 0
        %1683 = vmatprep.subr.bf16.mxu0 0
        %1684 = vmatpush1.bf16.msra.mxu0 0
        %1685 = vmatprep.subr.bf16.mxu0 0
        %1686 = vmatpush1.bf16.msra.mxu0 %v1667
        %1687 = vmatprep.subr.bf16.mxu0 0
        %1688 = vmatpush1.bf16.msra.mxu0 %v1666
        %1689 = vmatprep.subr.bf16.mxu0 0
        %1690 = vmatpush2.bf16.msra.mxu0 0
        %1691 = vmatprep.subr.bf16.mxu0 0
        %1692 = vmatpush2.bf16.msra.mxu0 0
        %1693 = vmatprep.subr.bf16.mxu0 0
        %1694 = vmatpush2.bf16.msra.mxu0 0
        %1695 = vmatprep.subr.bf16.mxu0 0
        %1696 = vmatpush2.bf16.msra.mxu0 0
        %1697 = vmatprep.subr.bf16.mxu0 0
        %1698 = vmatpush2.bf16.msra.mxu0 0
        %1699 = vmatprep.subr.bf16.mxu0 0
        %1700 = vmatpush2.bf16.msra.mxu0 0
        %1701 = vmatprep.subr.bf16.mxu0 0
        %1702 = vmatpush2.bf16.msra.mxu0 0
        %1703 = vmatprep.subr.bf16.mxu0 0
        %1704 = vmatpush2.bf16.msra.mxu0 0
        %1705 = vmatprep.mubr.bf16.mxu0 0
        %1706 = vmatmul.mubr.bf16.gmra.mxu0 %v1671
        %v1707 = vpop.f32.mrf.mxu0
        %v1708 = vadd.f32 %v1656, %v1707
        %v1709 = vpop.f32.mrf.mxu0
        %v1710 = vpop.f32.mrf.mxu0
        %v1711 = vpop.f32.mrf.mxu0
        %1712 = vdwg.mxu0
        %v1713 = vmul.f32 %v1708, 0.5
        %v1714 = vmul.f32 %v1708, 0.044715
        %v1715 = vmul.f32 %v1714, %v1708
        %v1716 = vmul.f32 %v1715, %v1708
        %v1717 = vadd.f32 %v1708, %v1716
        %v1718 = vmul.f32 %v1717, 0.7978846
        %v1719 = vtanh.pop %v1718
        %v1720 = vadd.f32 %v1719, 1.0
        %v1721 = vmul.f32 %v1713, %v1720
        %v1722 = vpack.c.bf16 %v1721, %v1721
        %v1723 = vld [vmem:[%s6] sm:$0xf]
        %v1724 = vld [vmem:[%s6 + $0x4] sm:$0xf]
        %v1725 = vld [vmem:[%s6 + $0x8] sm:$0xf]
        %v1726 = vld [vmem:[%s6 + $0xc] sm:$0xf]
        %v1727 = vld [vmem:[%s6 + $0x10] sm:$0xf]
        %v1728 = vld [vmem:[%s6 + $0x14] sm:$0xf]
        %v1729 = vld [vmem:[%s6 + $0x18] sm:$0xf]
        %v1730 = vld [vmem:[%s6 + $0x1c] sm:$0xf]
        %v1731 = vlaneseq
        %v1732 = vshrl.u32 %v1731, 7
        %v1733 = vsub.s32 3, %v1732
        %v1734 = vrot.slane %v451, %v1733
        %v1743 = vunpack.c.l.b16 %v1723
        %v1744 = vunpack.c.l.b16 %v1724
        %v1745 = vunpack.c.l.b16 %v1725
        %v1746 = vunpack.c.l.b16 %v1726
        %v1747 = vunpack.c.l.b16 %v1727
        %v1748 = vunpack.c.l.b16 %v1728
        %v1749 = vunpack.c.l.b16 %v1729
        %v1750 = vunpack.c.l.b16 %v1730
        %v1751 = vpack.c.b16 %v1744, %v1743
        %v1752 = vpack.c.b16 %v1746, %v1745
        %v1753 = vpack.c.b16 %v1748, %v1747
        %v1754 = vpack.c.b16 %v1750, %v1749
        %vm1759 = vcmask 523264
        %v1761 = vsel %vm1759, %v1722, 0
        %1763 = vmatprep.subr.bf16.mxu0 0
        %1764 = vmatpush1.bf16.msra.mxu0 0
        %1765 = vmatprep.subr.bf16.mxu0 0
        %1766 = vmatpush1.bf16.msra.mxu0 0
        %1767 = vmatprep.subr.bf16.mxu0 0
        %1768 = vmatpush1.bf16.msra.mxu0 0
        %1769 = vmatprep.subr.bf16.mxu0 0
        %1770 = vmatpush1.bf16.msra.mxu0 0
        %1771 = vmatprep.subr.bf16.mxu0 0
        %1772 = vmatpush1.bf16.msra.mxu0 %v1754
        %1773 = vmatprep.subr.bf16.mxu0 0
        %1774 = vmatpush1.bf16.msra.mxu0 %v1753
        %1775 = vmatprep.subr.bf16.mxu0 0
        %1776 = vmatpush1.bf16.msra.mxu0 %v1752
        %1777 = vmatprep.subr.bf16.mxu0 0
        %1778 = vmatpush1.bf16.msra.mxu0 %v1751
        %1779 = vmatprep.subr.bf16.mxu0 0
        %1780 = vmatpush2.bf16.msra.mxu0 0
        %1781 = vmatprep.subr.bf16.mxu0 0
        %1782 = vmatpush2.bf16.msra.mxu0 0
        %1783 = vmatprep.subr.bf16.mxu0 0
        %1784 = vmatpush2.bf16.msra.mxu0 0
        %1785 = vmatprep.subr.bf16.mxu0 0
        %1786 = vmatpush2.bf16.msra.mxu0 0
        %1787 = vmatprep.subr.bf16.mxu0 0
        %1788 = vmatpush2.bf16.msra.mxu0 0
        %1789 = vmatprep.subr.bf16.mxu0 0
        %1790 = vmatpush2.bf16.msra.mxu0 0
        %1791 = vmatprep.subr.bf16.mxu0 0
        %1792 = vmatpush2.bf16.msra.mxu0 0
        %1793 = vmatprep.subr.bf16.mxu0 0
        %1794 = vmatpush2.bf16.msra.mxu0 0
        %1795 = vmatprep.mubr.bf16.mxu0 0
        %1796 = vmatmul.mubr.bf16.gmra.mxu0 %v1761
        %v1797 = vpop.f32.mrf.mxu0
        %v1798 = vadd.f32 %v1734, %v1797
        %v1799 = vpop.f32.mrf.mxu0
        %v1800 = vpop.f32.mrf.mxu0
        %v1801 = vpop.f32.mrf.mxu0
        %1802 = vdwg.mxu0
        %v1803 = vadd.f32 %v1798, %v1645
        %v1804 = vsel %vm426, %v1803, 0.0
        %1805 = vadd.xlane.f32.xlu0 %v1804
        %v1806 = vpop.xlane.xlu0 %1805
        %v1807 = vmul.f32 %v1806, %v430
        %v1808 = vsub.f32 %v1803, %v1807
        %v1809 = vmul.f32 %v1808, %v1808
        %v1810 = vsel %vm426, %v1809, 0.0
        %1811 = vadd.xlane.f32.xlu0 %v1810
        %v1812 = vpop.xlane.xlu0 %1811
        %v1813 = vmul.f32 %v1812, %v430
        %v1814 = vadd.f32 %v1813, 1e-12
        %v1815 = vrsqrt.pop %v1814
        %v1816 = vmul.f32 %v1808, %v1815
        %v1817 = vlaneseq
        %v1818 = vshrl.u32 %v1817, 7
        %v1819 = vsub.s32 4, %v1818
        %v1820 = vrot.slane %v451, %v1819
        %v1821 = vmul.f32 %v1816, %v1820
        %v1822 = vlaneseq
        %v1823 = vshrl.u32 %v1822, 7
        %v1824 = vsub.s32 5, %v1823
        %v1825 = vrot.slane %v451, %v1824
        %v1826 = vadd.f32 %v1821, %v1825
        %s1827 = scalar_lea.vmem %s9, 8
        %v1828 = vld [vmem:[%s1827] sm:$0x3f]
        %v1829 = vpack.c.bf16 %v1826, %v1826
        %s1830 = scalar_lea.vmem %s3, 16
        %v1831 = vld [vmem:[%s1830] sm:$0xf]
        %v1832 = vld [vmem:[%s1830 + $0x4] sm:$0xf]
        %v1833 = vld [vmem:[%s1830 + $0x8] sm:$0xf]
        %v1834 = vld [vmem:[%s1830 + $0xc] sm:$0xf]
        %s1835 = scalar_lea.vmem %s7, 1
        %v1836 = vld [vmem:[%s1835] sm:$0x1]
        %v1838 = vlaneseq
        %v1839 = vshrl.u32 %v1838, 7
        %v1840 = vsub.s32 0, %v1839
        %v1841 = vrot.slane %v1836, %v1840
        %v1847 = vunpack.c.l.b16 %v1831
        %v1848 = vunpack.c.l.b16 %v1832
        %v1849 = vunpack.c.l.b16 %v1833
        %v1850 = vunpack.c.l.b16 %v1834
        %v1851 = vpack.c.b16 %v1848, %v1847
        %v1852 = vpack.c.b16 %v1850, %v1849
        %v1856 = vsel %vm426, %v1829, 0
        %1858 = vmatprep.subr.bf16.mxu0 0
        %1859 = vmatpush1.bf16.msra.mxu0 0
        %1860 = vmatprep.subr.bf16.mxu0 0
        %1861 = vmatpush1.bf16.msra.mxu0 0
        %1862 = vmatprep.subr.bf16.mxu0 0
        %1863 = vmatpush1.bf16.msra.mxu0 0
        %1864 = vmatprep.subr.bf16.mxu0 0
        %1865 = vmatpush1.bf16.msra.mxu0 0
        %1866 = vmatprep.subr.bf16.mxu0 0
        %1867 = vmatpush1.bf16.msra.mxu0 0
        %1868 = vmatprep.subr.bf16.mxu0 0
        %1869 = vmatpush1.bf16.msra.mxu0 0
        %1870 = vmatprep.subr.bf16.mxu0 0
        %1871 = vmatpush1.bf16.msra.mxu0 %v1852
        %1872 = vmatprep.subr.bf16.mxu0 0
        %1873 = vmatpush1.bf16.msra.mxu0 %v1851
        %1874 = vmatprep.subr.bf16.mxu0 0
        %1875 = vmatpush2.bf16.msra.mxu0 0
        %1876 = vmatprep.subr.bf16.mxu0 0
        %1877 = vmatpush2.bf16.msra.mxu0 0
        %1878 = vmatprep.subr.bf16.mxu0 0
        %1879 = vmatpush2.bf16.msra.mxu0 0
        %1880 = vmatprep.subr.bf16.mxu0 0
        %1881 = vmatpush2.bf16.msra.mxu0 0
        %1882 = vmatprep.subr.bf16.mxu0 0
        %1883 = vmatpush2.bf16.msra.mxu0 0
        %1884 = vmatprep.subr.bf16.mxu0 0
        %1885 = vmatpush2.bf16.msra.mxu0 0
        %1886 = vmatprep.subr.bf16.mxu0 0
        %1887 = vmatpush2.bf16.msra.mxu0 0
        %1888 = vmatprep.subr.bf16.mxu0 0
        %1889 = vmatpush2.bf16.msra.mxu0 0
        %1890 = vmatprep.mubr.bf16.mxu0 0
        %1891 = vmatmul.mubr.bf16.gmra.mxu0 %v1856
        %v1892 = vpop.f32.mrf.mxu0
        %v1893 = vadd.f32 %v1841, %v1892
        %v1894 = vpop.f32.mrf.mxu0
        %v1895 = vpop.f32.mrf.mxu0
        %v1896 = vpop.f32.mrf.mxu0
        %1897 = vdwg.mxu0
        %1899 = vrot.lane.b32.xlu0 %v1893, 120
        %v1900 = vpop.permute.xlu0 %1899
        %1902 = vrot.lane.b32.xlu0 %v1893, 112
        %v1903 = vpop.permute.xlu0 %1902
        %1905 = vrot.lane.b32.xlu0 %v1893, 104
        %v1906 = vpop.permute.xlu0 %1905
        %v1908 = vcombine.low %v1893, %v1903
        %v1909 = vcombine.high %v1893, %v1903
        %v1911 = vunpack.c.l.s4 1983009808
        %v1912 = vunpack.c.0.s8 %v1911
        %v1913 = vlaneseq
        %v1914 = vshrl.u32 %v1913, 7
        %v1915 = vsub.s32 %v1912, %v1914
        %v1916 = vrot.slane %v1908, %v1915
        %v1918 = vunpack.c.l.s4 1983009808
        %v1919 = vunpack.c.0.s8 %v1918
        %v1920 = vlaneseq
        %v1921 = vshrl.u32 %v1920, 7
        %v1922 = vsub.s32 %v1919, %v1921
        %v1923 = vrot.slane %v1909, %v1922
        %v1924 = vcombine.low %v1900, %v1906
        %v1925 = vcombine.high %v1900, %v1906
        %v1927 = vunpack.c.l.s4 1983009808
        %v1928 = vunpack.c.0.s8 %v1927
        %v1929 = vlaneseq
        %v1930 = vshrl.u32 %v1929, 7
        %v1931 = vsub.s32 %v1928, %v1930
        %v1932 = vrot.slane %v1924, %v1931
        %v1934 = vunpack.c.l.s4 1983009808
        %v1935 = vunpack.c.0.s8 %v1934
        %v1936 = vlaneseq
        %v1937 = vshrl.u32 %v1936, 7
        %v1938 = vsub.s32 %v1935, %v1937
        %v1939 = vrot.slane %v1925, %v1938
        %v1940 = vcombine.low %v1916, %v1932
        %v1941 = vcombine.high %v1916, %v1932
        %v1943 = vunpack.c.l.s4 1934713408
        %v1944 = vunpack.c.0.s8 %v1943
        %v1945 = vlaneseq
        %v1946 = vshrl.u32 %v1945, 7
        %v1947 = vsub.s32 %v1944, %v1946
        %v1948 = vrot.slane %v1940, %v1947
        %v1950 = vunpack.c.l.s4 1934713408
        %v1951 = vunpack.c.0.s8 %v1950
        %v1952 = vlaneseq
        %v1953 = vshrl.u32 %v1952, 7
        %v1954 = vsub.s32 %v1951, %v1953
        %v1955 = vrot.slane %v1941, %v1954
        %v1956 = vcombine.low %v1923, %v1939
        %v1957 = vcombine.high %v1923, %v1939
        %v1959 = vunpack.c.l.s4 1934713408
        %v1960 = vunpack.c.0.s8 %v1959
        %v1961 = vlaneseq
        %v1962 = vshrl.u32 %v1961, 7
        %v1963 = vsub.s32 %v1960, %v1962
        %v1964 = vrot.slane %v1956, %v1963
        %v1966 = vunpack.c.l.s4 1934713408
        %v1967 = vunpack.c.0.s8 %v1966
        %v1968 = vlaneseq
        %v1969 = vshrl.u32 %v1968, 7
        %v1970 = vsub.s32 %v1967, %v1969
        %v1971 = vrot.slane %v1957, %v1970
        %v1972 = vcombine.high %v1948, 0.0
        %v1973 = vcombine.high %v1955, 0.0
        %v1974 = vcombine.high %v1964, 0.0
        %v1975 = vcombine.high %v1971, 0.0
        %v1976 = vcombine.low %v1948, %v1955
        %v1978 = vunpack.c.l.s4 1983009808
        %v1979 = vunpack.c.0.s8 %v1978
        %v1980 = vlaneseq
        %v1981 = vshrl.u32 %v1980, 7
        %v1982 = vsub.s32 %v1979, %v1981
        %v1983 = vrot.slane %v1976, %v1982
        %v1984 = vcombine.low %v1972, %v1973
        %v1986 = vunpack.c.l.s4 1983009808
        %v1987 = vunpack.c.0.s8 %v1986
        %v1988 = vlaneseq
        %v1989 = vshrl.u32 %v1988, 7
        %v1990 = vsub.s32 %v1987, %v1989
        %v1991 = vrot.slane %v1984, %v1990
        %v1992 = vcombine.low %v1964, %v1971
        %v1994 = vunpack.c.l.s4 1983009808
        %v1995 = vunpack.c.0.s8 %v1994
        %v1996 = vlaneseq
        %v1997 = vshrl.u32 %v1996, 7
        %v1998 = vsub.s32 %v1995, %v1997
        %v1999 = vrot.slane %v1992, %v1998
        %v2000 = vcombine.low %v1974, %v1975
        %v2002 = vunpack.c.l.s4 1983009808
        %v2003 = vunpack.c.0.s8 %v2002
        %v2004 = vlaneseq
        %v2005 = vshrl.u32 %v2004, 7
        %v2006 = vsub.s32 %v2003, %v2005
        %v2007 = vrot.slane %v2000, %v2006
        %v2008 = vcombine.low %v1983, %v1991
        %v2009 = vcombine.high %v1983, %v1991
        %v2011 = vunpack.c.l.s4 1934713408
        %v2012 = vunpack.c.0.s8 %v2011
        %v2013 = vlaneseq
        %v2014 = vshrl.u32 %v2013, 7
        %v2015 = vsub.s32 %v2012, %v2014
        %v2016 = vrot.slane %v2008, %v2015
        %v2018 = vunpack.c.l.s4 1934713408
        %v2019 = vunpack.c.0.s8 %v2018
        %v2020 = vlaneseq
        %v2021 = vshrl.u32 %v2020, 7
        %v2022 = vsub.s32 %v2019, %v2021
        %v2023 = vrot.slane %v2009, %v2022
        %v2024 = vcombine.low %v1999, %v2007
        %v2025 = vcombine.high %v1999, %v2007
        %v2027 = vunpack.c.l.s4 1934713408
        %v2028 = vunpack.c.0.s8 %v2027
        %v2029 = vlaneseq
        %v2030 = vshrl.u32 %v2029, 7
        %v2031 = vsub.s32 %v2028, %v2030
        %v2032 = vrot.slane %v2024, %v2031
        %v2034 = vunpack.c.l.s4 1934713408
        %v2035 = vunpack.c.0.s8 %v2034
        %v2036 = vlaneseq
        %v2037 = vshrl.u32 %v2036, 7
        %v2038 = vsub.s32 %v2035, %v2037
        %v2039 = vrot.slane %v2025, %v2038
        %v2040 = vcombine.low %v2016, %v2032
        %v2041 = vcombine.high %v2016, %v2032
        %v2042 = vcombine.low %v2023, %v2039
        %v2043 = vcombine.high %v2023, %v2039
        %2044 = vrot.lane.b32.xlu0 %v1893, 96
        %v2045 = vpop.permute.xlu0 %2044
        %2046 = vrot.lane.b32.xlu0 %v1900, 96
        %v2047 = vpop.permute.xlu0 %2046
        %2048 = vrot.lane.b32.xlu0 %v1903, 96
        %v2049 = vpop.permute.xlu0 %2048
        %2050 = vrot.lane.b32.xlu0 %v1906, 96
        %v2051 = vpop.permute.xlu0 %2050
        %v2056 = vcombine.low %v2045, %v2049
        %v2057 = vcombine.high %v2045, %v2049
        %v2059 = vunpack.c.l.s4 1983009808
        %v2060 = vunpack.c.0.s8 %v2059
        %v2061 = vlaneseq
        %v2062 = vshrl.u32 %v2061, 7
        %v2063 = vsub.s32 %v2060, %v2062
        %v2064 = vrot.slane %v2056, %v2063
        %v2066 = vunpack.c.l.s4 1983009808
        %v2067 = vunpack.c.0.s8 %v2066
        %v2068 = vlaneseq
        %v2069 = vshrl.u32 %v2068, 7
        %v2070 = vsub.s32 %v2067, %v2069
        %v2071 = vrot.slane %v2057, %v2070
        %v2072 = vcombine.low %v2047, %v2051
        %v2073 = vcombine.high %v2047, %v2051
        %v2075 = vunpack.c.l.s4 1983009808
        %v2076 = vunpack.c.0.s8 %v2075
        %v2077 = vlaneseq
        %v2078 = vshrl.u32 %v2077, 7
        %v2079 = vsub.s32 %v2076, %v2078
        %v2080 = vrot.slane %v2072, %v2079
        %v2082 = vunpack.c.l.s4 1983009808
        %v2083 = vunpack.c.0.s8 %v2082
        %v2084 = vlaneseq
        %v2085 = vshrl.u32 %v2084, 7
        %v2086 = vsub.s32 %v2083, %v2085
        %v2087 = vrot.slane %v2073, %v2086
        %v2088 = vcombine.low %v2064, %v2080
        %v2089 = vcombine.high %v2064, %v2080
        %v2091 = vunpack.c.l.s4 1934713408
        %v2092 = vunpack.c.0.s8 %v2091
        %v2093 = vlaneseq
        %v2094 = vshrl.u32 %v2093, 7
        %v2095 = vsub.s32 %v2092, %v2094
        %v2096 = vrot.slane %v2088, %v2095
        %v2098 = vunpack.c.l.s4 1934713408
        %v2099 = vunpack.c.0.s8 %v2098
        %v2100 = vlaneseq
        %v2101 = vshrl.u32 %v2100, 7
        %v2102 = vsub.s32 %v2099, %v2101
        %v2103 = vrot.slane %v2089, %v2102
        %v2104 = vcombine.low %v2071, %v2087
        %v2105 = vcombine.high %v2071, %v2087
        %v2107 = vunpack.c.l.s4 1934713408
        %v2108 = vunpack.c.0.s8 %v2107
        %v2109 = vlaneseq
        %v2110 = vshrl.u32 %v2109, 7
        %v2111 = vsub.s32 %v2108, %v2110
        %v2112 = vrot.slane %v2104, %v2111
        %v2114 = vunpack.c.l.s4 1934713408
        %v2115 = vunpack.c.0.s8 %v2114
        %v2116 = vlaneseq
        %v2117 = vshrl.u32 %v2116, 7
        %v2118 = vsub.s32 %v2115, %v2117
        %v2119 = vrot.slane %v2105, %v2118
        %v2120 = vcombine.high %v2096, 0.0
        %v2121 = vcombine.high %v2103, 0.0
        %v2122 = vcombine.high %v2112, 0.0
        %v2123 = vcombine.high %v2119, 0.0
        %v2124 = vcombine.low %v2096, %v2103
        %v2126 = vunpack.c.l.s4 1983009808
        %v2127 = vunpack.c.0.s8 %v2126
        %v2128 = vlaneseq
        %v2129 = vshrl.u32 %v2128, 7
        %v2130 = vsub.s32 %v2127, %v2129
        %v2131 = vrot.slane %v2124, %v2130
        %v2132 = vcombine.low %v2120, %v2121
        %v2134 = vunpack.c.l.s4 1983009808
        %v2135 = vunpack.c.0.s8 %v2134
        %v2136 = vlaneseq
        %v2137 = vshrl.u32 %v2136, 7
        %v2138 = vsub.s32 %v2135, %v2137
        %v2139 = vrot.slane %v2132, %v2138
        %v2140 = vcombine.low %v2112, %v2119
        %v2142 = vunpack.c.l.s4 1983009808
        %v2143 = vunpack.c.0.s8 %v2142
        %v2144 = vlaneseq
        %v2145 = vshrl.u32 %v2144, 7
        %v2146 = vsub.s32 %v2143, %v2145
        %v2147 = vrot.slane %v2140, %v2146
        %v2148 = vcombine.low %v2122, %v2123
        %v2150 = vunpack.c.l.s4 1983009808
        %v2151 = vunpack.c.0.s8 %v2150
        %v2152 = vlaneseq
        %v2153 = vshrl.u32 %v2152, 7
        %v2154 = vsub.s32 %v2151, %v2153
        %v2155 = vrot.slane %v2148, %v2154
        %v2156 = vcombine.low %v2131, %v2139
        %v2157 = vcombine.high %v2131, %v2139
        %v2159 = vunpack.c.l.s4 1934713408
        %v2160 = vunpack.c.0.s8 %v2159
        %v2161 = vlaneseq
        %v2162 = vshrl.u32 %v2161, 7
        %v2163 = vsub.s32 %v2160, %v2162
        %v2164 = vrot.slane %v2156, %v2163
        %v2166 = vunpack.c.l.s4 1934713408
        %v2167 = vunpack.c.0.s8 %v2166
        %v2168 = vlaneseq
        %v2169 = vshrl.u32 %v2168, 7
        %v2170 = vsub.s32 %v2167, %v2169
        %v2171 = vrot.slane %v2157, %v2170
        %v2172 = vcombine.low %v2147, %v2155
        %v2173 = vcombine.high %v2147, %v2155
        %v2175 = vunpack.c.l.s4 1934713408
        %v2176 = vunpack.c.0.s8 %v2175
        %v2177 = vlaneseq
        %v2178 = vshrl.u32 %v2177, 7
        %v2179 = vsub.s32 %v2176, %v2178
        %v2180 = vrot.slane %v2172, %v2179
        %v2182 = vunpack.c.l.s4 1934713408
        %v2183 = vunpack.c.0.s8 %v2182
        %v2184 = vlaneseq
        %v2185 = vshrl.u32 %v2184, 7
        %v2186 = vsub.s32 %v2183, %v2185
        %v2187 = vrot.slane %v2173, %v2186
        %v2188 = vcombine.low %v2164, %v2180
        %v2189 = vcombine.high %v2164, %v2180
        %v2190 = vcombine.low %v2171, %v2187
        %v2191 = vcombine.high %v2171, %v2187
        %2192 = vrot.lane.b32.xlu0 %v1893, 64
        %v2193 = vpop.permute.xlu0 %2192
        %2194 = vrot.lane.b32.xlu0 %v1900, 64
        %v2195 = vpop.permute.xlu0 %2194
        %2196 = vrot.lane.b32.xlu0 %v1903, 64
        %v2197 = vpop.permute.xlu0 %2196
        %2198 = vrot.lane.b32.xlu0 %v1906, 64
        %v2199 = vpop.permute.xlu0 %2198
        %v2204 = vcombine.low %v2193, %v2197
        %v2205 = vcombine.high %v2193, %v2197
        %v2207 = vunpack.c.l.s4 1983009808
        %v2208 = vunpack.c.0.s8 %v2207
        %v2209 = vlaneseq
        %v2210 = vshrl.u32 %v2209, 7
        %v2211 = vsub.s32 %v2208, %v2210
        %v2212 = vrot.slane %v2204, %v2211
        %v2214 = vunpack.c.l.s4 1983009808
        %v2215 = vunpack.c.0.s8 %v2214
        %v2216 = vlaneseq
        %v2217 = vshrl.u32 %v2216, 7
        %v2218 = vsub.s32 %v2215, %v2217
        %v2219 = vrot.slane %v2205, %v2218
        %v2220 = vcombine.low %v2195, %v2199
        %v2221 = vcombine.high %v2195, %v2199
        %v2223 = vunpack.c.l.s4 1983009808
        %v2224 = vunpack.c.0.s8 %v2223
        %v2225 = vlaneseq
        %v2226 = vshrl.u32 %v2225, 7
        %v2227 = vsub.s32 %v2224, %v2226
        %v2228 = vrot.slane %v2220, %v2227
        %v2230 = vunpack.c.l.s4 1983009808
        %v2231 = vunpack.c.0.s8 %v2230
        %v2232 = vlaneseq
        %v2233 = vshrl.u32 %v2232, 7
        %v2234 = vsub.s32 %v2231, %v2233
        %v2235 = vrot.slane %v2221, %v2234
        %v2236 = vcombine.low %v2212, %v2228
        %v2237 = vcombine.high %v2212, %v2228
        %v2239 = vunpack.c.l.s4 1934713408
        %v2240 = vunpack.c.0.s8 %v2239
        %v2241 = vlaneseq
        %v2242 = vshrl.u32 %v2241, 7
        %v2243 = vsub.s32 %v2240, %v2242
        %v2244 = vrot.slane %v2236, %v2243
        %v2246 = vunpack.c.l.s4 1934713408
        %v2247 = vunpack.c.0.s8 %v2246
        %v2248 = vlaneseq
        %v2249 = vshrl.u32 %v2248, 7
        %v2250 = vsub.s32 %v2247, %v2249
        %v2251 = vrot.slane %v2237, %v2250
        %v2252 = vcombine.low %v2219, %v2235
        %v2253 = vcombine.high %v2219, %v2235
        %v2255 = vunpack.c.l.s4 1934713408
        %v2256 = vunpack.c.0.s8 %v2255
        %v2257 = vlaneseq
        %v2258 = vshrl.u32 %v2257, 7
        %v2259 = vsub.s32 %v2256, %v2258
        %v2260 = vrot.slane %v2252, %v2259
        %v2262 = vunpack.c.l.s4 1934713408
        %v2263 = vunpack.c.0.s8 %v2262
        %v2264 = vlaneseq
        %v2265 = vshrl.u32 %v2264, 7
        %v2266 = vsub.s32 %v2263, %v2265
        %v2267 = vrot.slane %v2253, %v2266
        %v2268 = vcombine.high %v2244, 0.0
        %v2269 = vcombine.high %v2251, 0.0
        %v2270 = vcombine.high %v2260, 0.0
        %v2271 = vcombine.high %v2267, 0.0
        %v2272 = vcombine.low %v2244, %v2251
        %v2274 = vunpack.c.l.s4 1983009808
        %v2275 = vunpack.c.0.s8 %v2274
        %v2276 = vlaneseq
        %v2277 = vshrl.u32 %v2276, 7
        %v2278 = vsub.s32 %v2275, %v2277
        %v2279 = vrot.slane %v2272, %v2278
        %v2280 = vcombine.low %v2268, %v2269
        %v2282 = vunpack.c.l.s4 1983009808
        %v2283 = vunpack.c.0.s8 %v2282
        %v2284 = vlaneseq
        %v2285 = vshrl.u32 %v2284, 7
        %v2286 = vsub.s32 %v2283, %v2285
        %v2287 = vrot.slane %v2280, %v2286
        %v2288 = vcombine.low %v2260, %v2267
        %v2290 = vunpack.c.l.s4 1983009808
        %v2291 = vunpack.c.0.s8 %v2290
        %v2292 = vlaneseq
        %v2293 = vshrl.u32 %v2292, 7
        %v2294 = vsub.s32 %v2291, %v2293
        %v2295 = vrot.slane %v2288, %v2294
        %v2296 = vcombine.low %v2270, %v2271
        %v2298 = vunpack.c.l.s4 1983009808
        %v2299 = vunpack.c.0.s8 %v2298
        %v2300 = vlaneseq
        %v2301 = vshrl.u32 %v2300, 7
        %v2302 = vsub.s32 %v2299, %v2301
        %v2303 = vrot.slane %v2296, %v2302
        %v2304 = vcombine.low %v2279, %v2287
        %v2305 = vcombine.high %v2279, %v2287
        %v2307 = vunpack.c.l.s4 1934713408
        %v2308 = vunpack.c.0.s8 %v2307
        %v2309 = vlaneseq
        %v2310 = vshrl.u32 %v2309, 7
        %v2311 = vsub.s32 %v2308, %v2310
        %v2312 = vrot.slane %v2304, %v2311
        %v2314 = vunpack.c.l.s4 1934713408
        %v2315 = vunpack.c.0.s8 %v2314
        %v2316 = vlaneseq
        %v2317 = vshrl.u32 %v2316, 7
        %v2318 = vsub.s32 %v2315, %v2317
        %v2319 = vrot.slane %v2305, %v2318
        %v2320 = vcombine.low %v2295, %v2303
        %v2321 = vcombine.high %v2295, %v2303
        %v2323 = vunpack.c.l.s4 1934713408
        %v2324 = vunpack.c.0.s8 %v2323
        %v2325 = vlaneseq
        %v2326 = vshrl.u32 %v2325, 7
        %v2327 = vsub.s32 %v2324, %v2326
        %v2328 = vrot.slane %v2320, %v2327
        %v2330 = vunpack.c.l.s4 1934713408
        %v2331 = vunpack.c.0.s8 %v2330
        %v2332 = vlaneseq
        %v2333 = vshrl.u32 %v2332, 7
        %v2334 = vsub.s32 %v2331, %v2333
        %v2335 = vrot.slane %v2321, %v2334
        %v2336 = vcombine.low %v2312, %v2328
        %v2337 = vcombine.high %v2312, %v2328
        %v2338 = vcombine.low %v2319, %v2335
        %v2339 = vcombine.high %v2319, %v2335
        %v2340 = vpack.c.bf16 %v2040, %v2040
        %v2341 = vpack.c.bf16 %v2041, %v2041
        %v2342 = vpack.c.bf16 %v2042, %v2042
        %v2343 = vpack.c.bf16 %v2043, %v2043
        %v2344 = vpack.c.bf16 %v2188, %v2188
        %v2345 = vpack.c.bf16 %v2189, %v2189
        %v2346 = vpack.c.bf16 %v2190, %v2190
        %v2347 = vpack.c.bf16 %v2191, %v2191
        %v2349 = vsel %vm969, %v2340, 0
        %v2352 = vsel %vm969, %v2344, 0
        %2354 = vmatprep.subr.bf16.mxu0 0
        %2355 = vmatpush1.bf16.xpose.msra.mxu0 0
        %2356 = vmatprep.subr.bf16.mxu0 0
        %2357 = vmatpush1.bf16.xpose.msra.mxu0 0
        %2358 = vmatprep.subr.bf16.mxu0 0
        %2359 = vmatpush1.bf16.xpose.msra.mxu0 0
        %2360 = vmatprep.subr.bf16.mxu0 0
        %2361 = vmatpush1.bf16.xpose.msra.mxu0 0
        %2362 = vmatprep.subr.bf16.mxu0 0
        %2363 = vmatpush1.bf16.xpose.msra.mxu0 0
        %2364 = vmatprep.subr.bf16.mxu0 0
        %2365 = vmatpush1.bf16.xpose.msra.mxu0 0
        %2366 = vmatprep.subr.bf16.mxu0 0
        %2367 = vmatpush1.bf16.xpose.msra.mxu0 0
        %2368 = vmatprep.subr.bf16.mxu0 0
        %2369 = vmatpush1.bf16.xpose.msra.mxu0 %v2352
        %2370 = vmatprep.subr.bf16.mxu0 0
        %2371 = vmatpush2.bf16.xpose.msra.mxu0 0
        %2372 = vmatprep.subr.bf16.mxu0 0
        %2373 = vmatpush2.bf16.xpose.msra.mxu0 0
        %2374 = vmatprep.subr.bf16.mxu0 0
        %2375 = vmatpush2.bf16.xpose.msra.mxu0 0
        %2376 = vmatprep.subr.bf16.mxu0 0
        %2377 = vmatpush2.bf16.xpose.msra.mxu0 0
        %2378 = vmatprep.subr.bf16.mxu0 0
        %2379 = vmatpush2.bf16.xpose.msra.mxu0 0
        %2380 = vmatprep.subr.bf16.mxu0 0
        %2381 = vmatpush2.bf16.xpose.msra.mxu0 0
        %2382 = vmatprep.subr.bf16.mxu0 0
        %2383 = vmatpush2.bf16.xpose.msra.mxu0 0
        %2384 = vmatprep.subr.bf16.mxu0 0
        %2385 = vmatpush2.bf16.xpose.msra.mxu0 0
        %2386 = vmatprep.mubr.bf16.mxu0 0
        %2387 = vmatmul.mubr.bf16.gmra.mxu0 %v2349
        %v2388 = vpop.f32.mrf.mxu0
        %v2389 = vadd.f32 0.0, %v2388
        %v2390 = vpop.f32.mrf.mxu0
        %v2391 = vpop.f32.mrf.mxu0
        %v2392 = vpop.f32.mrf.mxu0
        %2393 = vdwg.mxu0
        %v2395 = vsel %vm969, %v2341, 0
        %v2398 = vsel %vm969, %v2345, 0
        %2400 = vmatprep.subr.bf16.mxu0 0
        %2401 = vmatpush1.bf16.xpose.msra.mxu0 0
        %2402 = vmatprep.subr.bf16.mxu0 0
        %2403 = vmatpush1.bf16.xpose.msra.mxu0 0
        %2404 = vmatprep.subr.bf16.mxu0 0
        %2405 = vmatpush1.bf16.xpose.msra.mxu0 0
        %2406 = vmatprep.subr.bf16.mxu0 0
        %2407 = vmatpush1.bf16.xpose.msra.mxu0 0
        %2408 = vmatprep.subr.bf16.mxu0 0
        %2409 = vmatpush1.bf16.xpose.msra.mxu0 0
        %2410 = vmatprep.subr.bf16.mxu0 0
        %2411 = vmatpush1.bf16.xpose.msra.mxu0 0
        %2412 = vmatprep.subr.bf16.mxu0 0
        %2413 = vmatpush1.bf16.xpose.msra.mxu0 0
        %2414 = vmatprep.subr.bf16.mxu0 0
        %2415 = vmatpush1.bf16.xpose.msra.mxu0 %v2398
        %2416 = vmatprep.subr.bf16.mxu0 0
        %2417 = vmatpush2.bf16.xpose.msra.mxu0 0
        %2418 = vmatprep.subr.bf16.mxu0 0
        %2419 = vmatpush2.bf16.xpose.msra.mxu0 0
        %2420 = vmatprep.subr.bf16.mxu0 0
        %2421 = vmatpush2.bf16.xpose.msra.mxu0 0
        %2422 = vmatprep.subr.bf16.mxu0 0
        %2423 = vmatpush2.bf16.xpose.msra.mxu0 0
        %2424 = vmatprep.subr.bf16.mxu0 0
        %2425 = vmatpush2.bf16.xpose.msra.mxu0 0
        %2426 = vmatprep.subr.bf16.mxu0 0
        %2427 = vmatpush2.bf16.xpose.msra.mxu0 0
        %2428 = vmatprep.subr.bf16.mxu0 0
        %2429 = vmatpush2.bf16.xpose.msra.mxu0 0
        %2430 = vmatprep.subr.bf16.mxu0 0
        %2431 = vmatpush2.bf16.xpose.msra.mxu0 0
        %2432 = vmatprep.mubr.bf16.mxu0 0
        %2433 = vmatmul.mubr.bf16.gmra.mxu0 %v2395
        %v2434 = vpop.f32.mrf.mxu0
        %v2435 = vadd.f32 0.0, %v2434
        %v2436 = vpop.f32.mrf.mxu0
        %v2437 = vpop.f32.mrf.mxu0
        %v2438 = vpop.f32.mrf.mxu0
        %2439 = vdwg.mxu0
        %v2441 = vsel %vm969, %v2342, 0
        %v2444 = vsel %vm969, %v2346, 0
        %2446 = vmatprep.subr.bf16.mxu0 0
        %2447 = vmatpush1.bf16.xpose.msra.mxu0 0
        %2448 = vmatprep.subr.bf16.mxu0 0
        %2449 = vmatpush1.bf16.xpose.msra.mxu0 0
        %2450 = vmatprep.subr.bf16.mxu0 0
        %2451 = vmatpush1.bf16.xpose.msra.mxu0 0
        %2452 = vmatprep.subr.bf16.mxu0 0
        %2453 = vmatpush1.bf16.xpose.msra.mxu0 0
        %2454 = vmatprep.subr.bf16.mxu0 0
        %2455 = vmatpush1.bf16.xpose.msra.mxu0 0
        %2456 = vmatprep.subr.bf16.mxu0 0
        %2457 = vmatpush1.bf16.xpose.msra.mxu0 0
        %2458 = vmatprep.subr.bf16.mxu0 0
        %2459 = vmatpush1.bf16.xpose.msra.mxu0 0
        %2460 = vmatprep.subr.bf16.mxu0 0
        %2461 = vmatpush1.bf16.xpose.msra.mxu0 %v2444
        %2462 = vmatprep.subr.bf16.mxu0 0
        %2463 = vmatpush2.bf16.xpose.msra.mxu0 0
        %2464 = vmatprep.subr.bf16.mxu0 0
        %2465 = vmatpush2.bf16.xpose.msra.mxu0 0
        %2466 = vmatprep.subr.bf16.mxu0 0
        %2467 = vmatpush2.bf16.xpose.msra.mxu0 0
        %2468 = vmatprep.subr.bf16.mxu0 0
        %2469 = vmatpush2.bf16.xpose.msra.mxu0 0
        %2470 = vmatprep.subr.bf16.mxu0 0
        %2471 = vmatpush2.bf16.xpose.msra.mxu0 0
        %2472 = vmatprep.subr.bf16.mxu0 0
        %2473 = vmatpush2.bf16.xpose.msra.mxu0 0
        %2474 = vmatprep.subr.bf16.mxu0 0
        %2475 = vmatpush2.bf16.xpose.msra.mxu0 0
        %2476 = vmatprep.subr.bf16.mxu0 0
        %2477 = vmatpush2.bf16.xpose.msra.mxu0 0
        %2478 = vmatprep.mubr.bf16.mxu0 0
        %2479 = vmatmul.mubr.bf16.gmra.mxu0 %v2441
        %v2480 = vpop.f32.mrf.mxu0
        %v2481 = vadd.f32 0.0, %v2480
        %v2482 = vpop.f32.mrf.mxu0
        %v2483 = vpop.f32.mrf.mxu0
        %v2484 = vpop.f32.mrf.mxu0
        %2485 = vdwg.mxu0
        %v2487 = vsel %vm969, %v2343, 0
        %v2490 = vsel %vm969, %v2347, 0
        %2492 = vmatprep.subr.bf16.mxu0 0
        %2493 = vmatpush1.bf16.xpose.msra.mxu0 0
        %2494 = vmatprep.subr.bf16.mxu0 0
        %2495 = vmatpush1.bf16.xpose.msra.mxu0 0
        %2496 = vmatprep.subr.bf16.mxu0 0
        %2497 = vmatpush1.bf16.xpose.msra.mxu0 0
        %2498 = vmatprep.subr.bf16.mxu0 0
        %2499 = vmatpush1.bf16.xpose.msra.mxu0 0
        %2500 = vmatprep.subr.bf16.mxu0 0
        %2501 = vmatpush1.bf16.xpose.msra.mxu0 0
        %2502 = vmatprep.subr.bf16.mxu0 0
        %2503 = vmatpush1.bf16.xpose.msra.mxu0 0
        %2504 = vmatprep.subr.bf16.mxu0 0
        %2505 = vmatpush1.bf16.xpose.msra.mxu0 0
        %2506 = vmatprep.subr.bf16.mxu0 0
        %2507 = vmatpush1.bf16.xpose.msra.mxu0 %v2490
        %2508 = vmatprep.subr.bf16.mxu0 0
        %2509 = vmatpush2.bf16.xpose.msra.mxu0 0
        %2510 = vmatprep.subr.bf16.mxu0 0
        %2511 = vmatpush2.bf16.xpose.msra.mxu0 0
        %2512 = vmatprep.subr.bf16.mxu0 0
        %2513 = vmatpush2.bf16.xpose.msra.mxu0 0
        %2514 = vmatprep.subr.bf16.mxu0 0
        %2515 = vmatpush2.bf16.xpose.msra.mxu0 0
        %2516 = vmatprep.subr.bf16.mxu0 0
        %2517 = vmatpush2.bf16.xpose.msra.mxu0 0
        %2518 = vmatprep.subr.bf16.mxu0 0
        %2519 = vmatpush2.bf16.xpose.msra.mxu0 0
        %2520 = vmatprep.subr.bf16.mxu0 0
        %2521 = vmatpush2.bf16.xpose.msra.mxu0 0
        %2522 = vmatprep.subr.bf16.mxu0 0
        %2523 = vmatpush2.bf16.xpose.msra.mxu0 0
        %2524 = vmatprep.mubr.bf16.mxu0 0
        %2525 = vmatmul.mubr.bf16.gmra.mxu0 %v2487
        %v2526 = vpop.f32.mrf.mxu0
        %v2527 = vadd.f32 0.0, %v2526
        %v2528 = vpop.f32.mrf.mxu0
        %v2529 = vpop.f32.mrf.mxu0
        %v2530 = vpop.f32.mrf.mxu0
        %2531 = vdwg.mxu0
        %v2532 = vmul.f32 %v2389, 0.35355338
        %v2533 = vmul.f32 %v2435, 0.35355338
        %v2534 = vmul.f32 %v2481, 0.35355338
        %v2535 = vmul.f32 %v2527, 0.35355338
        %v2536 = vadd.f32 %v2532, %v1162
        %v2537 = vadd.f32 %v2533, %v1162
        %v2538 = vadd.f32 %v2534, %v1162
        %v2539 = vadd.f32 %v2535, %v1162
        %v2540 = vsel %vm969, %v2536, -inf
        %2541 = vmax.xlane.f32.xlu0 %v2540
        %v2542 = vpop.xlane.xlu0 %2541
        %v2543 = vsel %vm969, %v2537, -inf
        %2544 = vmax.xlane.f32.xlu0 %v2543
        %v2545 = vpop.xlane.xlu0 %2544
        %v2546 = vsel %vm969, %v2538, -inf
        %2547 = vmax.xlane.f32.xlu0 %v2546
        %v2548 = vpop.xlane.xlu0 %2547
        %v2549 = vsel %vm969, %v2539, -inf
        %2550 = vmax.xlane.f32.xlu0 %v2549
        %v2551 = vpop.xlane.xlu0 %2550
        %v2552 = vsub.f32 %v2536, %v2542
        %v2553 = vsub.f32 %v2537, %v2545
        %v2554 = vsub.f32 %v2538, %v2548
        %v2555 = vsub.f32 %v2539, %v2551
        %v2556 = vmul.f32 %v2552, 1.442695
        %v2557 = vpow.pop %v2556
        %v2558 = vmul.f32 %v2553, 1.442695
        %v2559 = vpow.pop %v2558
        %v2560 = vmul.f32 %v2554, 1.442695
        %v2561 = vpow.pop %v2560
        %v2562 = vmul.f32 %v2555, 1.442695
        %v2563 = vpow.pop %v2562
        %v2564 = vsel %vm969, %v2557, 0.0
        %2565 = vadd.xlane.f32.xlu0 %v2564
        %v2566 = vpop.xlane.xlu0 %2565
        %v2567 = vsel %vm969, %v2559, 0.0
        %2568 = vadd.xlane.f32.xlu0 %v2567
        %v2569 = vpop.xlane.xlu0 %2568
        %v2570 = vsel %vm969, %v2561, 0.0
        %2571 = vadd.xlane.f32.xlu0 %v2570
        %v2572 = vpop.xlane.xlu0 %2571
        %v2573 = vsel %vm969, %v2563, 0.0
        %2574 = vadd.xlane.f32.xlu0 %v2573
        %v2575 = vpop.xlane.xlu0 %2574
        %v2576 = vrcp.pop %v2566
        %v2577 = vrcp.pop %v2569
        %v2578 = vrcp.pop %v2572
        %v2579 = vrcp.pop %v2575
        %v2580 = vmul.f32 %v2557, %v2576
        %v2581 = vmul.f32 %v2559, %v2577
        %v2582 = vmul.f32 %v2561, %v2578
        %v2583 = vmul.f32 %v2563, %v2579
        %v2584 = vpack.c.bf16 %v2580, %v2580
        %v2585 = vpack.c.bf16 %v2581, %v2581
        %v2586 = vpack.c.bf16 %v2582, %v2582
        %v2587 = vpack.c.bf16 %v2583, %v2583
        %v2588 = vpack.c.bf16 %v2336, %v2336
        %v2589 = vpack.c.bf16 %v2337, %v2337
        %v2590 = vpack.c.bf16 %v2338, %v2338
        %v2591 = vpack.c.bf16 %v2339, %v2339
        %v2593 = vsel %vm969, %v2584, 0
        %v2596 = vsel %vm1223, %v2588, 0
        %2598 = vmatprep.subr.bf16.mxu0 0
        %2599 = vmatpush1.bf16.msra.mxu0 0
        %2600 = vmatprep.subr.bf16.mxu0 0
        %2601 = vmatpush1.bf16.msra.mxu0 0
        %2602 = vmatprep.subr.bf16.mxu0 0
        %2603 = vmatpush1.bf16.msra.mxu0 0
        %2604 = vmatprep.subr.bf16.mxu0 0
        %2605 = vmatpush1.bf16.msra.mxu0 0
        %2606 = vmatprep.subr.bf16.mxu0 0
        %2607 = vmatpush1.bf16.msra.mxu0 0
        %2608 = vmatprep.subr.bf16.mxu0 0
        %2609 = vmatpush1.bf16.msra.mxu0 0
        %2610 = vmatprep.subr.bf16.mxu0 0
        %2611 = vmatpush1.bf16.msra.mxu0 0
        %2612 = vmatprep.subr.bf16.mxu0 0
        %2613 = vmatpush1.bf16.msra.mxu0 %v2596
        %2614 = vmatprep.subr.bf16.mxu0 0
        %2615 = vmatpush2.bf16.msra.mxu0 0
        %2616 = vmatprep.subr.bf16.mxu0 0
        %2617 = vmatpush2.bf16.msra.mxu0 0
        %2618 = vmatprep.subr.bf16.mxu0 0
        %2619 = vmatpush2.bf16.msra.mxu0 0
        %2620 = vmatprep.subr.bf16.mxu0 0
        %2621 = vmatpush2.bf16.msra.mxu0 0
        %2622 = vmatprep.subr.bf16.mxu0 0
        %2623 = vmatpush2.bf16.msra.mxu0 0
        %2624 = vmatprep.subr.bf16.mxu0 0
        %2625 = vmatpush2.bf16.msra.mxu0 0
        %2626 = vmatprep.subr.bf16.mxu0 0
        %2627 = vmatpush2.bf16.msra.mxu0 0
        %2628 = vmatprep.subr.bf16.mxu0 0
        %2629 = vmatpush2.bf16.msra.mxu0 0
        %2630 = vmatprep.mubr.bf16.mxu0 0
        %2631 = vmatmul.mubr.bf16.gmra.mxu0 %v2593
        %v2632 = vpop.f32.mrf.mxu0
        %v2633 = vadd.f32 0.0, %v2632
        %v2634 = vpop.f32.mrf.mxu0
        %v2635 = vpop.f32.mrf.mxu0
        %v2636 = vpop.f32.mrf.mxu0
        %2637 = vdwg.mxu0
        %v2639 = vsel %vm969, %v2585, 0
        %v2642 = vsel %vm1223, %v2589, 0
        %2644 = vmatprep.subr.bf16.mxu0 0
        %2645 = vmatpush1.bf16.msra.mxu0 0
        %2646 = vmatprep.subr.bf16.mxu0 0
        %2647 = vmatpush1.bf16.msra.mxu0 0
        %2648 = vmatprep.subr.bf16.mxu0 0
        %2649 = vmatpush1.bf16.msra.mxu0 0
        %2650 = vmatprep.subr.bf16.mxu0 0
        %2651 = vmatpush1.bf16.msra.mxu0 0
        %2652 = vmatprep.subr.bf16.mxu0 0
        %2653 = vmatpush1.bf16.msra.mxu0 0
        %2654 = vmatprep.subr.bf16.mxu0 0
        %2655 = vmatpush1.bf16.msra.mxu0 0
        %2656 = vmatprep.subr.bf16.mxu0 0
        %2657 = vmatpush1.bf16.msra.mxu0 0
        %2658 = vmatprep.subr.bf16.mxu0 0
        %2659 = vmatpush1.bf16.msra.mxu0 %v2642
        %2660 = vmatprep.subr.bf16.mxu0 0
        %2661 = vmatpush2.bf16.msra.mxu0 0
        %2662 = vmatprep.subr.bf16.mxu0 0
        %2663 = vmatpush2.bf16.msra.mxu0 0
        %2664 = vmatprep.subr.bf16.mxu0 0
        %2665 = vmatpush2.bf16.msra.mxu0 0
        %2666 = vmatprep.subr.bf16.mxu0 0
        %2667 = vmatpush2.bf16.msra.mxu0 0
        %2668 = vmatprep.subr.bf16.mxu0 0
        %2669 = vmatpush2.bf16.msra.mxu0 0
        %2670 = vmatprep.subr.bf16.mxu0 0
        %2671 = vmatpush2.bf16.msra.mxu0 0
        %2672 = vmatprep.subr.bf16.mxu0 0
        %2673 = vmatpush2.bf16.msra.mxu0 0
        %2674 = vmatprep.subr.bf16.mxu0 0
        %2675 = vmatpush2.bf16.msra.mxu0 0
        %2676 = vmatprep.mubr.bf16.mxu0 0
        %2677 = vmatmul.mubr.bf16.gmra.mxu0 %v2639
        %v2678 = vpop.f32.mrf.mxu0
        %v2679 = vadd.f32 0.0, %v2678
        %v2680 = vpop.f32.mrf.mxu0
        %v2681 = vpop.f32.mrf.mxu0
        %v2682 = vpop.f32.mrf.mxu0
        %2683 = vdwg.mxu0
        %v2685 = vsel %vm969, %v2586, 0
        %v2688 = vsel %vm1223, %v2590, 0
        %2690 = vmatprep.subr.bf16.mxu0 0
        %2691 = vmatpush1.bf16.msra.mxu0 0
        %2692 = vmatprep.subr.bf16.mxu0 0
        %2693 = vmatpush1.bf16.msra.mxu0 0
        %2694 = vmatprep.subr.bf16.mxu0 0
        %2695 = vmatpush1.bf16.msra.mxu0 0
        %2696 = vmatprep.subr.bf16.mxu0 0
        %2697 = vmatpush1.bf16.msra.mxu0 0
        %2698 = vmatprep.subr.bf16.mxu0 0
        %2699 = vmatpush1.bf16.msra.mxu0 0
        %2700 = vmatprep.subr.bf16.mxu0 0
        %2701 = vmatpush1.bf16.msra.mxu0 0
        %2702 = vmatprep.subr.bf16.mxu0 0
        %2703 = vmatpush1.bf16.msra.mxu0 0
        %2704 = vmatprep.subr.bf16.mxu0 0
        %2705 = vmatpush1.bf16.msra.mxu0 %v2688
        %2706 = vmatprep.subr.bf16.mxu0 0
        %2707 = vmatpush2.bf16.msra.mxu0 0
        %2708 = vmatprep.subr.bf16.mxu0 0
        %2709 = vmatpush2.bf16.msra.mxu0 0
        %2710 = vmatprep.subr.bf16.mxu0 0
        %2711 = vmatpush2.bf16.msra.mxu0 0
        %2712 = vmatprep.subr.bf16.mxu0 0
        %2713 = vmatpush2.bf16.msra.mxu0 0
        %2714 = vmatprep.subr.bf16.mxu0 0
        %2715 = vmatpush2.bf16.msra.mxu0 0
        %2716 = vmatprep.subr.bf16.mxu0 0
        %2717 = vmatpush2.bf16.msra.mxu0 0
        %2718 = vmatprep.subr.bf16.mxu0 0
        %2719 = vmatpush2.bf16.msra.mxu0 0
        %2720 = vmatprep.subr.bf16.mxu0 0
        %2721 = vmatpush2.bf16.msra.mxu0 0
        %2722 = vmatprep.mubr.bf16.mxu0 0
        %2723 = vmatmul.mubr.bf16.gmra.mxu0 %v2685
        %v2724 = vpop.f32.mrf.mxu0
        %v2725 = vadd.f32 0.0, %v2724
        %v2726 = vpop.f32.mrf.mxu0
        %v2727 = vpop.f32.mrf.mxu0
        %v2728 = vpop.f32.mrf.mxu0
        %2729 = vdwg.mxu0
        %v2731 = vsel %vm969, %v2587, 0
        %v2734 = vsel %vm1223, %v2591, 0
        %2736 = vmatprep.subr.bf16.mxu0 0
        %2737 = vmatpush1.bf16.msra.mxu0 0
        %2738 = vmatprep.subr.bf16.mxu0 0
        %2739 = vmatpush1.bf16.msra.mxu0 0
        %2740 = vmatprep.subr.bf16.mxu0 0
        %2741 = vmatpush1.bf16.msra.mxu0 0
        %2742 = vmatprep.subr.bf16.mxu0 0
        %2743 = vmatpush1.bf16.msra.mxu0 0
        %2744 = vmatprep.subr.bf16.mxu0 0
        %2745 = vmatpush1.bf16.msra.mxu0 0
        %2746 = vmatprep.subr.bf16.mxu0 0
        %2747 = vmatpush1.bf16.msra.mxu0 0
        %2748 = vmatprep.subr.bf16.mxu0 0
        %2749 = vmatpush1.bf16.msra.mxu0 0
        %2750 = vmatprep.subr.bf16.mxu0 0
        %2751 = vmatpush1.bf16.msra.mxu0 %v2734
        %2752 = vmatprep.subr.bf16.mxu0 0
        %2753 = vmatpush2.bf16.msra.mxu0 0
        %2754 = vmatprep.subr.bf16.mxu0 0
        %2755 = vmatpush2.bf16.msra.mxu0 0
        %2756 = vmatprep.subr.bf16.mxu0 0
        %2757 = vmatpush2.bf16.msra.mxu0 0
        %2758 = vmatprep.subr.bf16.mxu0 0
        %2759 = vmatpush2.bf16.msra.mxu0 0
        %2760 = vmatprep.subr.bf16.mxu0 0
        %2761 = vmatpush2.bf16.msra.mxu0 0
        %2762 = vmatprep.subr.bf16.mxu0 0
        %2763 = vmatpush2.bf16.msra.mxu0 0
        %2764 = vmatprep.subr.bf16.mxu0 0
        %2765 = vmatpush2.bf16.msra.mxu0 0
        %2766 = vmatprep.subr.bf16.mxu0 0
        %2767 = vmatpush2.bf16.msra.mxu0 0
        %2768 = vmatprep.mubr.bf16.mxu0 0
        %2769 = vmatmul.mubr.bf16.gmra.mxu0 %v2731
        %v2770 = vpop.f32.mrf.mxu0
        %v2771 = vadd.f32 0.0, %v2770
        %v2772 = vpop.f32.mrf.mxu0
        %v2773 = vpop.f32.mrf.mxu0
        %v2774 = vpop.f32.mrf.mxu0
        %2775 = vdwg.mxu0
        %v2776 = vcombine.low %v2633, %v2725
        %v2777 = vcombine.high %v2633, %v2725
        %v2779 = vunpack.c.l.s4 1983009808
        %v2780 = vunpack.c.0.s8 %v2779
        %v2781 = vlaneseq
        %v2782 = vshrl.u32 %v2781, 7
        %v2783 = vsub.s32 %v2780, %v2782
        %v2784 = vrot.slane %v2776, %v2783
        %v2786 = vunpack.c.l.s4 1983009808
        %v2787 = vunpack.c.0.s8 %v2786
        %v2788 = vlaneseq
        %v2789 = vshrl.u32 %v2788, 7
        %v2790 = vsub.s32 %v2787, %v2789
        %v2791 = vrot.slane %v2777, %v2790
        %v2792 = vcombine.low %v2679, %v2771
        %v2793 = vcombine.high %v2679, %v2771
        %v2795 = vunpack.c.l.s4 1983009808
        %v2796 = vunpack.c.0.s8 %v2795
        %v2797 = vlaneseq
        %v2798 = vshrl.u32 %v2797, 7
        %v2799 = vsub.s32 %v2796, %v2798
        %v2800 = vrot.slane %v2792, %v2799
        %v2802 = vunpack.c.l.s4 1983009808
        %v2803 = vunpack.c.0.s8 %v2802
        %v2804 = vlaneseq
        %v2805 = vshrl.u32 %v2804, 7
        %v2806 = vsub.s32 %v2803, %v2805
        %v2807 = vrot.slane %v2793, %v2806
        %v2808 = vcombine.low %v2784, %v2800
        %v2809 = vcombine.high %v2784, %v2800
        %v2811 = vunpack.c.l.s4 1934713408
        %v2812 = vunpack.c.0.s8 %v2811
        %v2813 = vlaneseq
        %v2814 = vshrl.u32 %v2813, 7
        %v2815 = vsub.s32 %v2812, %v2814
        %v2816 = vrot.slane %v2808, %v2815
        %v2818 = vunpack.c.l.s4 1934713408
        %v2819 = vunpack.c.0.s8 %v2818
        %v2820 = vlaneseq
        %v2821 = vshrl.u32 %v2820, 7
        %v2822 = vsub.s32 %v2819, %v2821
        %v2823 = vrot.slane %v2809, %v2822
        %v2824 = vcombine.low %v2791, %v2807
        %v2825 = vcombine.high %v2791, %v2807
        %v2827 = vunpack.c.l.s4 1934713408
        %v2828 = vunpack.c.0.s8 %v2827
        %v2829 = vlaneseq
        %v2830 = vshrl.u32 %v2829, 7
        %v2831 = vsub.s32 %v2828, %v2830
        %v2832 = vrot.slane %v2824, %v2831
        %v2834 = vunpack.c.l.s4 1934713408
        %v2835 = vunpack.c.0.s8 %v2834
        %v2836 = vlaneseq
        %v2837 = vshrl.u32 %v2836, 7
        %v2838 = vsub.s32 %v2835, %v2837
        %v2839 = vrot.slane %v2825, %v2838
        %v2840 = vcombine.high %v2816, 0.0
        %v2841 = vcombine.high %v2823, 0.0
        %v2842 = vcombine.high %v2832, 0.0
        %v2843 = vcombine.high %v2839, 0.0
        %v2844 = vcombine.low %v2816, %v2823
        %v2846 = vunpack.c.l.s4 1983009808
        %v2847 = vunpack.c.0.s8 %v2846
        %v2848 = vlaneseq
        %v2849 = vshrl.u32 %v2848, 7
        %v2850 = vsub.s32 %v2847, %v2849
        %v2851 = vrot.slane %v2844, %v2850
        %v2852 = vcombine.low %v2840, %v2841
        %v2854 = vunpack.c.l.s4 1983009808
        %v2855 = vunpack.c.0.s8 %v2854
        %v2856 = vlaneseq
        %v2857 = vshrl.u32 %v2856, 7
        %v2858 = vsub.s32 %v2855, %v2857
        %v2859 = vrot.slane %v2852, %v2858
        %v2860 = vcombine.low %v2832, %v2839
        %v2862 = vunpack.c.l.s4 1983009808
        %v2863 = vunpack.c.0.s8 %v2862
        %v2864 = vlaneseq
        %v2865 = vshrl.u32 %v2864, 7
        %v2866 = vsub.s32 %v2863, %v2865
        %v2867 = vrot.slane %v2860, %v2866
        %v2868 = vcombine.low %v2842, %v2843
        %v2870 = vunpack.c.l.s4 1983009808
        %v2871 = vunpack.c.0.s8 %v2870
        %v2872 = vlaneseq
        %v2873 = vshrl.u32 %v2872, 7
        %v2874 = vsub.s32 %v2871, %v2873
        %v2875 = vrot.slane %v2868, %v2874
        %v2876 = vcombine.low %v2851, %v2859
        %v2877 = vcombine.high %v2851, %v2859
        %v2879 = vunpack.c.l.s4 1934713408
        %v2880 = vunpack.c.0.s8 %v2879
        %v2881 = vlaneseq
        %v2882 = vshrl.u32 %v2881, 7
        %v2883 = vsub.s32 %v2880, %v2882
        %v2884 = vrot.slane %v2876, %v2883
        %v2886 = vunpack.c.l.s4 1934713408
        %v2887 = vunpack.c.0.s8 %v2886
        %v2888 = vlaneseq
        %v2889 = vshrl.u32 %v2888, 7
        %v2890 = vsub.s32 %v2887, %v2889
        %v2891 = vrot.slane %v2877, %v2890
        %v2892 = vcombine.low %v2867, %v2875
        %v2893 = vcombine.high %v2867, %v2875
        %v2895 = vunpack.c.l.s4 1934713408
        %v2896 = vunpack.c.0.s8 %v2895
        %v2897 = vlaneseq
        %v2898 = vshrl.u32 %v2897, 7
        %v2899 = vsub.s32 %v2896, %v2898
        %v2900 = vrot.slane %v2892, %v2899
        %v2902 = vunpack.c.l.s4 1934713408
        %v2903 = vunpack.c.0.s8 %v2902
        %v2904 = vlaneseq
        %v2905 = vshrl.u32 %v2904, 7
        %v2906 = vsub.s32 %v2903, %v2905
        %v2907 = vrot.slane %v2893, %v2906
        %v2908 = vcombine.low %v2884, %v2900
        %v2909 = vcombine.high %v2884, %v2900
        %v2910 = vcombine.low %v2891, %v2907
        %v2911 = vcombine.high %v2891, %v2907
        %2913 = vrot.lane.b32.xlu0 %v2909, 8
        %v2914 = vpop.permute.xlu0 %2913
        %2917 = vrot.lane.b32.xlu0 %v2910, 16
        %v2918 = vpop.permute.xlu0 %2917
        %2921 = vrot.lane.b32.xlu0 %v2911, 24
        %v2922 = vpop.permute.xlu0 %2921
        %v2924 = vsel %vm969, %v2908, %v2914
        %v2925 = vsel %vm1554, %v2924, %v2918
        %v2926 = vsel %vm1556, %v2925, %v2922
        %v2927 = vpack.c.bf16 %v2926, %v2926
        %s2928 = scalar_lea.vmem %s4, 16
        %v2929 = vld [vmem:[%s2928] sm:$0xf]
        %v2930 = vld [vmem:[%s2928 + $0x4] sm:$0xf]
        %v2931 = vld [vmem:[%s2928 + $0x8] sm:$0xf]
        %v2932 = vld [vmem:[%s2928 + $0xc] sm:$0xf]
        %v2933 = vlaneseq
        %v2934 = vshrl.u32 %v2933, 7
        %v2935 = vsub.s32 0, %v2934
        %v2936 = vrot.slane %v1828, %v2935
        %v2941 = vunpack.c.l.b16 %v2929
        %v2942 = vunpack.c.l.b16 %v2930
        %v2943 = vunpack.c.l.b16 %v2931
        %v2944 = vunpack.c.l.b16 %v2932
        %v2945 = vpack.c.b16 %v2942, %v2941
        %v2946 = vpack.c.b16 %v2944, %v2943
        %v2950 = vsel %vm426, %v2927, 0
        %2952 = vmatprep.subr.bf16.mxu0 0
        %2953 = vmatpush1.bf16.msra.mxu0 0
        %2954 = vmatprep.subr.bf16.mxu0 0
        %2955 = vmatpush1.bf16.msra.mxu0 0
        %2956 = vmatprep.subr.bf16.mxu0 0
        %2957 = vmatpush1.bf16.msra.mxu0 0
        %2958 = vmatprep.subr.bf16.mxu0 0
        %2959 = vmatpush1.bf16.msra.mxu0 0
        %2960 = vmatprep.subr.bf16.mxu0 0
        %2961 = vmatpush1.bf16.msra.mxu0 0
        %2962 = vmatprep.subr.bf16.mxu0 0
        %2963 = vmatpush1.bf16.msra.mxu0 0
        %2964 = vmatprep.subr.bf16.mxu0 0
        %2965 = vmatpush1.bf16.msra.mxu0 %v2946
        %2966 = vmatprep.subr.bf16.mxu0 0
        %2967 = vmatpush1.bf16.msra.mxu0 %v2945
        %2968 = vmatprep.subr.bf16.mxu0 0
        %2969 = vmatpush2.bf16.msra.mxu0 0
        %2970 = vmatprep.subr.bf16.mxu0 0
        %2971 = vmatpush2.bf16.msra.mxu0 0
        %2972 = vmatprep.subr.bf16.mxu0 0
        %2973 = vmatpush2.bf16.msra.mxu0 0
        %2974 = vmatprep.subr.bf16.mxu0 0
        %2975 = vmatpush2.bf16.msra.mxu0 0
        %2976 = vmatprep.subr.bf16.mxu0 0
        %2977 = vmatpush2.bf16.msra.mxu0 0
        %2978 = vmatprep.subr.bf16.mxu0 0
        %2979 = vmatpush2.bf16.msra.mxu0 0
        %2980 = vmatprep.subr.bf16.mxu0 0
        %2981 = vmatpush2.bf16.msra.mxu0 0
        %2982 = vmatprep.subr.bf16.mxu0 0
        %2983 = vmatpush2.bf16.msra.mxu0 0
        %2984 = vmatprep.mubr.bf16.mxu0 0
        %2985 = vmatmul.mubr.bf16.gmra.mxu0 %v2950
        %v2986 = vpop.f32.mrf.mxu0
        %v2987 = vadd.f32 %v2936, %v2986
        %v2988 = vpop.f32.mrf.mxu0
        %v2989 = vpop.f32.mrf.mxu0
        %v2990 = vpop.f32.mrf.mxu0
        %2991 = vdwg.mxu0
        %v2992 = vadd.f32 %v2987, %v1826
        %v2993 = vsel %vm426, %v2992, 0.0
        %2994 = vadd.xlane.f32.xlu0 %v2993
        %v2995 = vpop.xlane.xlu0 %2994
        %v2996 = vmul.f32 %v2995, %v430
        %v2997 = vsub.f32 %v2992, %v2996
        %v2998 = vmul.f32 %v2997, %v2997
        %v2999 = vsel %vm426, %v2998, 0.0
        %3000 = vadd.xlane.f32.xlu0 %v2999
        %v3001 = vpop.xlane.xlu0 %3000
        %v3002 = vmul.f32 %v3001, %v430
        %v3003 = vadd.f32 %v3002, 1e-12
        %v3004 = vrsqrt.pop %v3003
        %v3005 = vmul.f32 %v2997, %v3004
        %v3006 = vlaneseq
        %v3007 = vshrl.u32 %v3006, 7
        %v3008 = vsub.s32 1, %v3007
        %v3009 = vrot.slane %v1828, %v3008
        %v3010 = vmul.f32 %v3005, %v3009
        %v3011 = vlaneseq
        %v3012 = vshrl.u32 %v3011, 7
        %v3013 = vsub.s32 2, %v3012
        %v3014 = vrot.slane %v1828, %v3013
        %v3015 = vadd.f32 %v3010, %v3014
        %v3016 = vpack.c.bf16 %v3015, %v3015
        %s3017 = scalar_lea.vmem %s5, 16
        %v3018 = vld [vmem:[%s3017] sm:$0xf]
        %v3019 = vld [vmem:[%s3017 + $0x4] sm:$0xf]
        %v3020 = vld [vmem:[%s3017 + $0x8] sm:$0xf]
        %v3021 = vld [vmem:[%s3017 + $0xc] sm:$0xf]
        %s3022 = scalar_lea.vmem %s8, 1
        %v3023 = vld [vmem:[%s3022] sm:$0x1]
        %v3025 = vlaneseq
        %v3026 = vshrl.u32 %v3025, 7
        %v3027 = vsub.s32 0, %v3026
        %v3028 = vrot.slane %v3023, %v3027
        %v3034 = vunpack.c.l.b16 %v3018
        %v3035 = vunpack.c.l.b16 %v3019
        %v3036 = vunpack.c.l.b16 %v3020
        %v3037 = vunpack.c.l.b16 %v3021
        %v3038 = vpack.c.b16 %v3035, %v3034
        %v3039 = vpack.c.b16 %v3037, %v3036
        %v3043 = vsel %vm426, %v3016, 0
        %3045 = vmatprep.subr.bf16.mxu0 0
        %3046 = vmatpush1.bf16.msra.mxu0 0
        %3047 = vmatprep.subr.bf16.mxu0 0
        %3048 = vmatpush1.bf16.msra.mxu0 0
        %3049 = vmatprep.subr.bf16.mxu0 0
        %3050 = vmatpush1.bf16.msra.mxu0 0
        %3051 = vmatprep.subr.bf16.mxu0 0
        %3052 = vmatpush1.bf16.msra.mxu0 0
        %3053 = vmatprep.subr.bf16.mxu0 0
        %3054 = vmatpush1.bf16.msra.mxu0 0
        %3055 = vmatprep.subr.bf16.mxu0 0
        %3056 = vmatpush1.bf16.msra.mxu0 0
        %3057 = vmatprep.subr.bf16.mxu0 0
        %3058 = vmatpush1.bf16.msra.mxu0 %v3039
        %3059 = vmatprep.subr.bf16.mxu0 0
        %3060 = vmatpush1.bf16.msra.mxu0 %v3038
        %3061 = vmatprep.subr.bf16.mxu0 0
        %3062 = vmatpush2.bf16.msra.mxu0 0
        %3063 = vmatprep.subr.bf16.mxu0 0
        %3064 = vmatpush2.bf16.msra.mxu0 0
        %3065 = vmatprep.subr.bf16.mxu0 0
        %3066 = vmatpush2.bf16.msra.mxu0 0
        %3067 = vmatprep.subr.bf16.mxu0 0
        %3068 = vmatpush2.bf16.msra.mxu0 0
        %3069 = vmatprep.subr.bf16.mxu0 0
        %3070 = vmatpush2.bf16.msra.mxu0 0
        %3071 = vmatprep.subr.bf16.mxu0 0
        %3072 = vmatpush2.bf16.msra.mxu0 0
        %3073 = vmatprep.subr.bf16.mxu0 0
        %3074 = vmatpush2.bf16.msra.mxu0 0
        %3075 = vmatprep.subr.bf16.mxu0 0
        %3076 = vmatpush2.bf16.msra.mxu0 0
        %3077 = vmatprep.mubr.bf16.mxu0 0
        %3078 = vmatmul.mubr.bf16.gmra.mxu0 %v3043
        %v3079 = vpop.f32.mrf.mxu0
        %v3080 = vadd.f32 %v3028, %v3079
        %v3081 = vpop.f32.mrf.mxu0
        %v3082 = vpop.f32.mrf.mxu0
        %v3083 = vpop.f32.mrf.mxu0
        %3084 = vdwg.mxu0
        %v3085 = vmul.f32 %v3080, 0.5
        %v3086 = vmul.f32 %v3080, 0.044715
        %v3087 = vmul.f32 %v3086, %v3080
        %v3088 = vmul.f32 %v3087, %v3080
        %v3089 = vadd.f32 %v3080, %v3088
        %v3090 = vmul.f32 %v3089, 0.7978846
        %v3091 = vtanh.pop %v3090
        %v3092 = vadd.f32 %v3091, 1.0
        %v3093 = vmul.f32 %v3085, %v3092
        %v3094 = vpack.c.bf16 %v3093, %v3093
        %s3095 = scalar_lea.vmem %s6, 32
        %v3096 = vld [vmem:[%s3095] sm:$0xf]
        %v3097 = vld [vmem:[%s3095 + $0x4] sm:$0xf]
        %v3098 = vld [vmem:[%s3095 + $0x8] sm:$0xf]
        %v3099 = vld [vmem:[%s3095 + $0xc] sm:$0xf]
        %v3100 = vld [vmem:[%s3095 + $0x10] sm:$0xf]
        %v3101 = vld [vmem:[%s3095 + $0x14] sm:$0xf]
        %v3102 = vld [vmem:[%s3095 + $0x18] sm:$0xf]
        %v3103 = vld [vmem:[%s3095 + $0x1c] sm:$0xf]
        %v3104 = vlaneseq
        %v3105 = vshrl.u32 %v3104, 7
        %v3106 = vsub.s32 3, %v3105
        %v3107 = vrot.slane %v1828, %v3106
        %v3116 = vunpack.c.l.b16 %v3096
        %v3117 = vunpack.c.l.b16 %v3097
        %v3118 = vunpack.c.l.b16 %v3098
        %v3119 = vunpack.c.l.b16 %v3099
        %v3120 = vunpack.c.l.b16 %v3100
        %v3121 = vunpack.c.l.b16 %v3101
        %v3122 = vunpack.c.l.b16 %v3102
        %v3123 = vunpack.c.l.b16 %v3103
        %v3124 = vpack.c.b16 %v3117, %v3116
        %v3125 = vpack.c.b16 %v3119, %v3118
        %v3126 = vpack.c.b16 %v3121, %v3120
        %v3127 = vpack.c.b16 %v3123, %v3122
        %v3133 = vsel %vm1759, %v3094, 0
        %3135 = vmatprep.subr.bf16.mxu0 0
        %3136 = vmatpush1.bf16.msra.mxu0 0
        %3137 = vmatprep.subr.bf16.mxu0 0
        %3138 = vmatpush1.bf16.msra.mxu0 0
        %3139 = vmatprep.subr.bf16.mxu0 0
        %3140 = vmatpush1.bf16.msra.mxu0 0
        %3141 = vmatprep.subr.bf16.mxu0 0
        %3142 = vmatpush1.bf16.msra.mxu0 0
        %3143 = vmatprep.subr.bf16.mxu0 0
        %3144 = vmatpush1.bf16.msra.mxu0 %v3127
        %3145 = vmatprep.subr.bf16.mxu0 0
        %3146 = vmatpush1.bf16.msra.mxu0 %v3126
        %3147 = vmatprep.subr.bf16.mxu0 0
        %3148 = vmatpush1.bf16.msra.mxu0 %v3125
        %3149 = vmatprep.subr.bf16.mxu0 0
        %3150 = vmatpush1.bf16.msra.mxu0 %v3124
        %3151 = vmatprep.subr.bf16.mxu0 0
        %3152 = vmatpush2.bf16.msra.mxu0 0
        %3153 = vmatprep.subr.bf16.mxu0 0
        %3154 = vmatpush2.bf16.msra.mxu0 0
        %3155 = vmatprep.subr.bf16.mxu0 0
        %3156 = vmatpush2.bf16.msra.mxu0 0
        %3157 = vmatprep.subr.bf16.mxu0 0
        %3158 = vmatpush2.bf16.msra.mxu0 0
        %3159 = vmatprep.subr.bf16.mxu0 0
        %3160 = vmatpush2.bf16.msra.mxu0 0
        %3161 = vmatprep.subr.bf16.mxu0 0
        %3162 = vmatpush2.bf16.msra.mxu0 0
        %3163 = vmatprep.subr.bf16.mxu0 0
        %3164 = vmatpush2.bf16.msra.mxu0 0
        %3165 = vmatprep.subr.bf16.mxu0 0
        %3166 = vmatpush2.bf16.msra.mxu0 0
        %3167 = vmatprep.mubr.bf16.mxu0 0
        %3168 = vmatmul.mubr.bf16.gmra.mxu0 %v3133
        %v3169 = vpop.f32.mrf.mxu0
        %v3170 = vadd.f32 %v3107, %v3169
        %v3171 = vpop.f32.mrf.mxu0
        %v3172 = vpop.f32.mrf.mxu0
        %v3173 = vpop.f32.mrf.mxu0
        %3174 = vdwg.mxu0
        %v3175 = vadd.f32 %v3170, %v3015
        %v3176 = vsel %vm426, %v3175, 0.0
        %3177 = vadd.xlane.f32.xlu0 %v3176
        %v3178 = vpop.xlane.xlu0 %3177
        %v3179 = vmul.f32 %v3178, %v430
        %v3180 = vsub.f32 %v3175, %v3179
        %v3181 = vmul.f32 %v3180, %v3180
        %v3182 = vsel %vm426, %v3181, 0.0
        %3183 = vadd.xlane.f32.xlu0 %v3182
        %v3184 = vpop.xlane.xlu0 %3183
        %v3185 = vmul.f32 %v3184, %v430
        %v3186 = vadd.f32 %v3185, 1e-12
        %v3187 = vrsqrt.pop %v3186
        %v3188 = vmul.f32 %v3180, %v3187
        %v3189 = vlaneseq
        %v3190 = vshrl.u32 %v3189, 7
        %v3191 = vsub.s32 4, %v3190
        %v3192 = vrot.slane %v1828, %v3191
        %v3193 = vmul.f32 %v3188, %v3192
        %v3194 = vlaneseq
        %v3195 = vshrl.u32 %v3194, 7
        %v3196 = vsub.s32 5, %v3195
        %v3197 = vrot.slane %v1828, %v3196
        %v3198 = vadd.f32 %v3193, %v3197
        %v3199 = vpack.c.bf16 %v3198, %v3198
        %v3200 = vld [vmem:[%s10] sm:$0xf]
        %v3201 = vld [vmem:[%s10 + $0x4] sm:$0xf]
        %v3202 = vld [vmem:[%s10 + $0x8] sm:$0xf]
        %v3203 = vld [vmem:[%s10 + $0xc] sm:$0xf]
        %v3204 = vld [vmem:[%s11] sm:$0x1]
        %v3209 = vunpack.c.l.b16 %v3200
        %v3210 = vunpack.c.l.b16 %v3201
        %v3211 = vunpack.c.l.b16 %v3202
        %v3212 = vunpack.c.l.b16 %v3203
        %v3213 = vpack.c.b16 %v3210, %v3209
        %v3214 = vpack.c.b16 %v3212, %v3211
        %v3218 = vsel %vm426, %v3199, 0
        %3220 = vmatprep.subr.bf16.mxu0 0
        %3221 = vmatpush1.bf16.msra.mxu0 0
        %3222 = vmatprep.subr.bf16.mxu0 0
        %3223 = vmatpush1.bf16.msra.mxu0 0
        %3224 = vmatprep.subr.bf16.mxu0 0
        %3225 = vmatpush1.bf16.msra.mxu0 0
        %3226 = vmatprep.subr.bf16.mxu0 0
        %3227 = vmatpush1.bf16.msra.mxu0 0
        %3228 = vmatprep.subr.bf16.mxu0 0
        %3229 = vmatpush1.bf16.msra.mxu0 0
        %3230 = vmatprep.subr.bf16.mxu0 0
        %3231 = vmatpush1.bf16.msra.mxu0 0
        %3232 = vmatprep.subr.bf16.mxu0 0
        %3233 = vmatpush1.bf16.msra.mxu0 %v3214
        %3234 = vmatprep.subr.bf16.mxu0 0
        %3235 = vmatpush1.bf16.msra.mxu0 %v3213
        %3236 = vmatprep.subr.bf16.mxu0 0
        %3237 = vmatpush2.bf16.msra.mxu0 0
        %3238 = vmatprep.subr.bf16.mxu0 0
        %3239 = vmatpush2.bf16.msra.mxu0 0
        %3240 = vmatprep.subr.bf16.mxu0 0
        %3241 = vmatpush2.bf16.msra.mxu0 0
        %3242 = vmatprep.subr.bf16.mxu0 0
        %3243 = vmatpush2.bf16.msra.mxu0 0
        %3244 = vmatprep.subr.bf16.mxu0 0
        %3245 = vmatpush2.bf16.msra.mxu0 0
        %3246 = vmatprep.subr.bf16.mxu0 0
        %3247 = vmatpush2.bf16.msra.mxu0 0
        %3248 = vmatprep.subr.bf16.mxu0 0
        %3249 = vmatpush2.bf16.msra.mxu0 0
        %3250 = vmatprep.subr.bf16.mxu0 0
        %3251 = vmatpush2.bf16.msra.mxu0 0
        %3252 = vmatprep.mubr.bf16.mxu0 0
        %3253 = vmatmul.mubr.bf16.gmra.mxu0 %v3218
        %v3254 = vpop.f32.mrf.mxu0
        %v3255 = vadd.f32 %v3204, %v3254
        %v3256 = vpop.f32.mrf.mxu0
        %v3257 = vpop.f32.mrf.mxu0
        %v3258 = vpop.f32.mrf.mxu0
        %3259 = vdwg.mxu0
        %v3260 = vtanh.pop %v3255
        %vm3261 = vcmask 253952
        %3262 = vst.msk [vmem:[%s414] sm:$0x1] %vm3261, %v3260
        %s3263 = sand.u32 %s296, 1
        %s3264 = scalar_lea.sflag [#allocation3], %s3263
        %s3265 = sand.u32 %s296, 1
        %s3266 = scalar_lea.vmem [#allocation2], %s3265
        // Predicated region
        $region69: #{text_feature_extractor.1} parent=67 // pred_check
          %p3267 = pneg %p306
        $region70: #{text_feature_extractor.1} parent=67 // pred_check_branch
          %3269 = sbr.rel (%p3267) target = $region72
        $region71: #{text_feature_extractor.1} parent=67 // pred_region
          %s3271 = ssub.s32 16, 16
          %3272 = vsyncadd %s3264, %s3271
          %s3273 = smul.addr %s26, 16
          %s3274 = scalar_lea.hbm %s12, %s3273
          %s3276 = sshll.u32 %s3266, 4
          %s3277 = int_to_ptr.vmem [resolvable:$true] %s3276
          %3279 = dma.vmem_to_hbm [thread:$0]  %s3277, 16, %s3274, %s3264
        $region72: #{text_feature_extractor.1} parent=67 // pred_fallthru
          _
      $region68: #{text_feature_extractor.1} parent=5 // pred_fallthru
        _
      %p3280 = scmp.le.s32.totalorder 2, %s21
      // Predicated region
      $region73: #{text_feature_extractor.1} parent=5 // pred_check
        %p3281 = pneg %p3280
      $region74: #{text_feature_extractor.1} parent=5 // pred_check_branch
        %3283 = sbr.rel (%p3281) target = $region76
      $region75: #{text_feature_extractor.1} parent=5 // pred_region
        %s3284 = ssub.s32 %s21, 2
        // Predicated region
        $region77: #{text_feature_extractor.1} parent=75 // pred_check
          %p3285 = pneg %p312
        $region78: #{text_feature_extractor.1} parent=75 // pred_check_branch
          %3287 = sbr.rel (%p3285) target = $region80
        $region79: #{text_feature_extractor.1} parent=75 // pred_region
          %s3288 = sand.u32 %s297, 1
          %s3289 = scalar_lea.sflag [#allocation3], %s3288
          %s3290 = sand.u32 %s297, 1
          %s3291 = scalar_lea.vmem [#allocation2], %s3290
          %3292 = dma.done %s3289, 16
        $region80: #{text_feature_extractor.1} parent=75 // pred_fallthru
          _
      $region76: #{text_feature_extractor.1} parent=5 // pred_fallthru
        _
    $region6: #{text_feature_extractor.1} parent=1 // loop_footer
      %s25 = sadd.s32 1, %s21
    $region7: #{text_feature_extractor.1} parent=1 // loop_footer_branch
      %20 = sbr.rel target = $region3
    $region8: #{text_feature_extractor.1} parent=1 // loop_exit
      _
    %3293 = vsyncpa [#allocation3], 1
    %s3294 = scalar_lea.sflag [#allocation3], 1
    %3295 = vsyncpa %s3294, 1

</llo_original>
